<compile_context>
chip_gen: v7x
topology: tpu7x:2x2x1
jax: 0.10.0
libtpu: 0.0.40
codegen_flags: <defaults>
</compile_context>

<pallas_src>
import numpy as np
import jax
import jax.numpy as jnp
from jax import lax
from jax.experimental import pallas as pl
from jax.experimental.pallas import tpu as pltpu

LANE = 128
SUBLANE_BF16 = 16      # bf16 vregs pack 16 sublanes; pad B so casts hit native tiles
BIG_LOGIT = 100.0      # sigmoid(BIG_LOGIT) == 1.0 in f32 -> augmented lane self-preserves


def _round_up(n, m):
    return ((n + m - 1) // m) * m


# ------------------------------- Pallas kernel --------------------------------

def make_fused_gru_kernel(n_layers, T, H_pad, aug_lane):
    """Fused kernel: n_layers GRU (wavefront) + ReLU + fc1 + fc2 + fc3 (last t).

    Ref order (all fully VMEM-resident; sizes are tiny at test shapes):
      x_ref                                   (T, B, I_pad)    f32
      per layer: wih (in_pad, 3H_pad) bf16, whh (H_pad, 3H_pad) bf16 (with the
                 b_hh_n augmented row), bgx (1, 3H_pad) f32
      head: w1 (H_pad,F_pad) bf16, b1 (1,F_pad) f32,
            w2 (F_pad,F_pad) bf16, b2 (1,F_pad) f32,
            w3 (F_pad,O_pad) bf16, b3 (1,O_pad) f32
      o_ref                                   (B, O_pad)       f32
    """
    H3 = 3 * H_pad

    def kernel(*refs):
        x_ref = refs[0]
        layer_refs = refs[1:1 + 3 * n_layers]
        w1, b1, w2, b2, w3, b3 = refs[1 + 3 * n_layers:7 + 3 * n_layers]
        o_ref = refs[7 + 3 * n_layers]

        B = x_ref.shape[1]

        # Hoist loop-invariant weight / bias loads once.
        wih = [layer_refs[3 * l][...] for l in range(n_layers)]
        whh = [layer_refs[3 * l + 1][...] for l in range(n_layers)]
        bgx = [jnp.broadcast_to(layer_refs[3 * l + 2][...], (B, H3))
               for l in range(n_layers)]

        # ---- cuDNN-style hoist for layer 0: input projection for ALL timesteps
        # as one big MXU matmul; kept as traced values (T is small).
        # TODO(synk): for production T*B, stream x / gx over a T grid axis with
        # double-buffered BlockSpecs instead of keeping them VMEM-resident.
        inp2d = x_ref[...].reshape(T * B, x_ref.shape[2])
        gx0 = (jnp.dot(inp2d.astype(jnp.bfloat16), wih[0],
                       preferred_element_type=jnp.float32).reshape(T, B, H3)
               + bgx[0])

        # Hidden-state init: zeros except the augmented lane (== 1.0).  That lane
        # multiplies the b_hh_n row folded into whh, so the n-gate hidden bias
        # rides the MXU instead of a per-step VPU add; its z-gate bias is a huge
        # logit so z == 1 there and the lane stays exactly 1.0 across timesteps.
        lane = lax.broadcasted_iota(jnp.int32, (B, H_pad), 1)
        h_init = jnp.where(lane == aug_lane, 1.0, 0.0).astype(jnp.float32)

        def gru_cell(gxt, h_prev, whh_l):
            gh = jnp.dot(h_prev.astype(jnp.bfloat16), whh_l,
                         preferred_element_type=jnp.float32)       # (B, 3H_pad)
            r = jax.nn.sigmoid(gxt[:, 0:H_pad] + gh[:, 0:H_pad])
            z = jax.nn.sigmoid(gxt[:, H_pad:2 * H_pad] + gh[:, H_pad:2 * H_pad])
            n = jnp.tanh(gxt[:, 2 * H_pad:] + r * gh[:, 2 * H_pad:])
            return (1.0 - z) * n + z * h_prev

        h = [h_init] * n_layers

        # ---- Wavefront over (timestep, layer): step s runs layer l at t = s-l.
        # All reads use the previous step's hidden states, so the matmuls issued
        # in one step are mutually independent.
        # TODO(synk): for long T replace the unrolled Python loop with
        # lax.fori_loop(..., unroll=4-8) carrying the per-layer hidden states.
        for s in range(T + n_layers - 1):
            h_prev = list(h)                       # snapshot: reads use old values
            for l in range(n_layers):
                t = s - l
                if 0 <= t < T:
                    if l == 0:
                        gxt = gx0[t]
                    else:
                        # Incremental input projection for layer l: its input at
                        # timestep t is exactly h_prev[l-1] (previous wavefront step).
                        gxt = jnp.dot(h_prev[l - 1].astype(jnp.bfloat16), wih[l],
                                      preferred_element_type=jnp.float32) + bgx[l]
                    h[l] = gru_cell(gxt, h_prev[l], whh[l])

        # ---- head on the LAST timestep only (== fc3(fc2(fc1(relu(out))))[:, -1, :])
        y = jnp.maximum(h[n_layers - 1], 0.0)
        y = jnp.dot(y.astype(jnp.bfloat16), w1[...],
                    preferred_element_type=jnp.float32) + b1[...]
        y = jnp.dot(y.astype(jnp.bfloat16), w2[...],
                    preferred_element_type=jnp.float32) + b2[...]
        o_ref[...] = jnp.dot(y.astype(jnp.bfloat16), w3[...],
                             preferred_element_type=jnp.float32) + b3[...]

    return kernel


# ---------------------------------- Wrapper ------------------------------------

_VMEM = pl.BlockSpec(memory_space=pltpu.MemorySpace.VMEM)


def gru_forward(x, kparams, *, meta):
    """x: (B, T, input_dim) batch_first, same as the PyTorch module."""
    B, T, I = x.shape
    n_layers = meta["n_layers"]
    H_pad, I_pad, O_pad = meta["H_pad"], meta["I_pad"], meta["O_pad"]
    O = meta["output_dim"]
    aug_lane = meta["aug_lane"]
    B_pad = _round_up(max(B, SUBLANE_BF16), SUBLANE_BF16)

    # Pad batch/feature dims and go time-major.
    # TODO(synk): at production sizes feed time-major, pre-padded data from the
    # pipeline so this XLA pad/transpose (an extra HBM pass over x) disappears.
    xp = jnp.zeros((T, B_pad, I_pad), jnp.float32)
    xp = xp.at[:, :B, :I].set(jnp.transpose(x, (1, 0, 2)).astype(jnp.float32))

    flat_inputs = [xp]
    for lp in kparams["layers"]:
        flat_inputs += [lp["wih"], lp["whh"], lp["bgx"]]
    flat_inputs += [kparams["w1"], kparams["b1"], kparams["w2"], kparams["b2"],
                    kparams["w3"], kparams["b3"]]

    # Scoped-VMEM budget: actual footprint (inputs + hoisted gx + output) with
    # generous headroom, capped well below v7x's 64 MiB physical VMEM.
    in_bytes = sum(int(np.prod(a.shape)) * a.dtype.itemsize for a in flat_inputs)
    gx_bytes = T * B_pad * 3 * H_pad * 4
    out_bytes = B_pad * O_pad * 4
    vmem_limit = int(min(4 * (in_bytes + gx_bytes + out_bytes) + (4 << 20),
                         48 << 20))

    out = pl.pallas_call(
        make_fused_gru_kernel(n_layers, T, H_pad, aug_lane),
        out_shape=jax.ShapeDtypeStruct((B_pad, O_pad), jnp.float32),
        in_specs=[_VMEM] * len(flat_inputs),
        out_specs=_VMEM,
        compiler_params=pltpu.CompilerParams(vmem_limit_bytes=vmem_limit),
    )(*flat_inputs)
    # TODO(synk): for large batches add a 'parallel' grid axis over B_pad
    # (dimension_semantics=("parallel",)) to use v7x's second TensorCore.
    return out[:B, :O]


# ----------------------------- Param init / prep -------------------------------

def init_params(key, input_dim, hidden_dim, output_dim, n_layers):
    """Logical (unpadded, f32) params; weights pre-transposed to (in, out)."""
    params = {"gru": []}
    keys = iter(jax.random.split(key, 4 * n_layers + 6))
    k_gru = 1.0 / np.sqrt(hidden_dim)
    in_dim = input_dim
    for _ in range(n_layers):
        wih = jax.random.uniform(next(keys), (3 * hidden_dim, in_dim),
                                 jnp.float32, -k_gru, k_gru)
        whh = jax.random.uniform(next(keys), (3 * hidden_dim, hidden_dim),
                                 jnp.float32, -k_gru, k_gru)
        bih = jax.random.uniform(next(keys), (1, 3 * hidden_dim),
                                 jnp.float32, -k_gru, k_gru)
        bhh = jax.random.uniform(next(keys), (1, 3 * hidden_dim),
                                 jnp.float32, -k_gru, k_gru)
        params["gru"].append({"wih_t": wih.T, "whh_t": whh.T,
                              "bih": bih, "bhh": bhh})
        in_dim = hidden_dim

    def linear(k, fan_in, fan_out):
        bound = 1.0 / np.sqrt(fan_in)
        k1, k2 = jax.random.split(k)
        w = jax.random.uniform(k1, (fan_in, fan_out), jnp.float32, -bound, bound)
        b = jax.random.uniform(k2, (1, fan_out), jnp.float32, -bound, bound)
        return w, b

    params["w1"], params["b1"] = linear(next(keys), hidden_dim, 32)
    params["w2"], params["b2"] = linear(next(keys), 32, 32)
    params["w3"], params["b3"] = linear(next(keys), 32, output_dim)
    return params


def _pad_gate_cols(w, H, H_pad):
    """(rows, 3H) -> (rows, 3H_pad): each gate block starts at an aligned col."""
    out = np.zeros((w.shape[0], 3 * H_pad), np.float32)
    for g in range(3):
        out[:, g * H_pad:g * H_pad + H] = w[:, g * H:(g + 1) * H]
    return out


def _pad2d(w, rows_pad, cols_pad):
    out = np.zeros((rows_pad, cols_pad), np.float32)
    out[:w.shape[0], :w.shape[1]] = w
    return out


def prepare_kernel_params(params, input_dim, hidden_dim, output_dim, n_layers):
    """Pad to lane/sublane-aligned shapes, fold biases, cast weights to bf16."""
    H = hidden_dim
    # Contraction alignment for the recurrence: v5e MXU is 128-deep, v6e/v7x are
    # 256-deep -> use 256 once H outgrows one 128 tile.  "+1" reserves a spare
    # padded lane used as the augmented bias lane (carries b_hh_n via the MXU).
    k_align = LANE if (H + 1) <= LANE else 2 * LANE
    H_pad = _round_up(H + 1, k_align)
    aug_lane = H                              # first padded lane
    I_pad = _round_up(input_dim, LANE)
    F_pad = _round_up(32, LANE)
    O_pad = _round_up(output_dim, LANE)

    kp = {"layers": []}
    in_pad = I_pad
    for layer in params["gru"]:
        wih = np.asarray(layer["wih_t"], np.float32)   # (in, 3H)
        whh = np.asarray(layer["whh_t"], np.float32)   # (H, 3H)
        bih = np.asarray(layer["bih"], np.float32)     # (1, 3H)
        bhh = np.asarray(layer["bhh"], np.float32)     # (1, 3H)

        wih_p = np.zeros((in_pad, 3 * H_pad), np.float32)
        wih_p[:wih.shape[0]] = _pad_gate_cols(wih, H, H_pad)

        whh_p = np.zeros((H_pad, 3 * H_pad), np.float32)
        whh_p[:H] = _pad_gate_cols(whh, H, H_pad)
        # Augmented row: h[:, aug_lane] == 1 carries b_hh_n through the n-gate.
        whh_p[aug_lane, 2 * H_pad:2 * H_pad + H] = bhh[0, 2 * H:]

        # bgx folds b_ih (all gates) + b_hh (r, z gates).  The z-gate entry at
        # the augmented lane is a huge logit -> z == 1 there, so the augmented
        # lane of h stays exactly 1.0 every timestep.
        bgx = bih.copy()
        bgx[:, :2 * H] += bhh[:, :2 * H]
        bgx_p = _pad_gate_cols(bgx, H, H_pad)
        bgx_p[0, H_pad + aug_lane] = BIG_LOGIT

        kp["layers"].append({
            "wih": jnp.asarray(wih_p, jnp.bfloat16),
            "whh": jnp.asarray(whh_p, jnp.bfloat16),
            "bgx": jnp.asarray(bgx_p, jnp.float32),
        })
        in_pad = H_pad

    kp["w1"] = jnp.asarray(_pad2d(np.asarray(params["w1"]), H_pad, F_pad), jnp.bfloat16)
    kp["b1"] = jnp.asarray(_pad2d(np.asarray(params["b1"]), 1, F_pad), jnp.float32)
    kp["w2"] = jnp.asarray(_pad2d(np.asarray(params["w2"]), F_pad, F_pad), jnp.bfloat16)
    kp["b2"] = jnp.asarray(_pad2d(np.asarray(params["b2"]), 1, F_pad), jnp.float32)
    kp["w3"] = jnp.asarray(_pad2d(np.asarray(params["w3"]), F_pad, O_pad), jnp.bfloat16)
    kp["b3"] = jnp.asarray(_pad2d(np.asarray(params["b3"]), 1, O_pad), jnp.float32)

    meta = {"n_layers": n_layers, "H_pad": H_pad, "I_pad": I_pad,
            "O_pad": O_pad, "output_dim": output_dim, "aug_lane": aug_lane}
    return kp, meta


# --------------------------------- Reference ------------------------------------

def reference_forward_np(x, params):
    """Pure-numpy reference reproducing torch.nn.GRU (batch_first) + head."""
    x = np.asarray(x, dtype=np.float64)
    B, T, _ = x.shape

    def sig(v):
        return 1.0 / (1.0 + np.exp(-v))

    seq = x
    for layer in params["gru"]:
        wih = np.asarray(layer["wih_t"], np.float64)
        whh = np.asarray(layer["whh_t"], np.float64)
        bih = np.asarray(layer["bih"], np.float64)
        bhh = np.asarray(layer["bhh"], np.float64)
        H = whh.shape[0]
        h = np.zeros((B, H), np.float64)
        outs = []
        for t in range(T):
            gx = seq[:, t, :] @ wih + bih
            gh = h @ whh + bhh
            r = sig(gx[:, :H] + gh[:, :H])
            z = sig(gx[:, H:2 * H] + gh[:, H:2 * H])
            n = np.tanh(gx[:, 2 * H:] + r * gh[:, 2 * H:])
            h = (1.0 - z) * n + z * h
            outs.append(h)
        seq = np.stack(outs, axis=1)

    y = np.maximum(seq, 0.0)
    y = y @ np.asarray(params["w1"], np.float64) + np.asarray(params["b1"], np.float64)
    y = y @ np.asarray(params["w2"], np.float64) + np.asarray(params["b2"], np.float64)
    y = y @ np.asarray(params["w3"], np.float64) + np.asarray(params["b3"], np.float64)
    return y[:, -1, :]


# ------------------------------------ Main ---------------------------------------

if __name__ == "__main__":
    batch, seq_len = 2, 8
    input_dim, hidden_dim, output_dim, n_layers = 16, 32, 4, 2

    key = jax.random.PRNGKey(0)
    k_x, k_p = jax.random.split(key)
    x = jax.random.normal(k_x, (batch, seq_len, input_dim), jnp.float32)
    params = init_params(k_p, input_dim, hidden_dim, output_dim, n_layers)
    kparams, meta = prepare_kernel_params(params, input_dim, hidden_dim,
                                          output_dim, n_layers)

    fwd = jax.jit(lambda xx, kp: gru_forward(xx, kp, meta=meta))
    out = jax.block_until_ready(fwd(x, kparams))

    ref = reference_forward_np(np.asarray(x), params)
    assert out.shape == (batch, output_dim)
    np.testing.assert_allclose(np.asarray(out), ref, rtol=2e-2, atol=2e-2)

    print("KERNEL_OK")
</pallas_src>

<mosaic_0001>
module attributes {stable_mosaic.version = 11 : i64} {
  func.func @kernel(%arg0: memref<8x16x128xf32, #tpu.memory_space<vmem>>, %arg1: memref<128x384xbf16, #tpu.memory_space<vmem>>, %arg2: memref<128x384xbf16, #tpu.memory_space<vmem>>, %arg3: memref<1x384xf32, #tpu.memory_space<vmem>>, %arg4: memref<128x384xbf16, #tpu.memory_space<vmem>>, %arg5: memref<128x384xbf16, #tpu.memory_space<vmem>>, %arg6: memref<1x384xf32, #tpu.memory_space<vmem>>, %arg7: memref<128x128xbf16, #tpu.memory_space<vmem>>, %arg8: memref<1x128xf32, #tpu.memory_space<vmem>>, %arg9: memref<128x128xbf16, #tpu.memory_space<vmem>>, %arg10: memref<1x128xf32, #tpu.memory_space<vmem>>, %arg11: memref<128x128xbf16, #tpu.memory_space<vmem>>, %arg12: memref<1x128xf32, #tpu.memory_space<vmem>>, %arg13: memref<16x128xf32, #tpu.memory_space<vmem>>) attributes {dimension_semantics = [], scalar_prefetch = 0 : i64, scratch_operands = 0 : i64, tpu.core_type = #tpu.core_type<tc>} {
    %c0 = arith.constant 0 : index
    %c0_0 = arith.constant 0 : index
    %0 = vector.load %arg1[%c0, %c0_0] : memref<128x384xbf16, #tpu.memory_space<vmem>>, vector<128x384xbf16>
    %c0_1 = arith.constant 0 : index
    %c0_2 = arith.constant 0 : index
    %1 = vector.load %arg4[%c0_1, %c0_2] : memref<128x384xbf16, #tpu.memory_space<vmem>>, vector<128x384xbf16>
    %c0_3 = arith.constant 0 : index
    %c0_4 = arith.constant 0 : index
    %2 = vector.load %arg2[%c0_3, %c0_4] : memref<128x384xbf16, #tpu.memory_space<vmem>>, vector<128x384xbf16>
    %c0_5 = arith.constant 0 : index
    %c0_6 = arith.constant 0 : index
    %3 = vector.load %arg5[%c0_5, %c0_6] : memref<128x384xbf16, #tpu.memory_space<vmem>>, vector<128x384xbf16>
    %c0_7 = arith.constant 0 : index
    %c0_8 = arith.constant 0 : index
    %4 = vector.load %arg3[%c0_7, %c0_8] : memref<1x384xf32, #tpu.memory_space<vmem>>, vector<1x384xf32>
    %5 = vector.shape_cast %4 : vector<1x384xf32> to vector<1x384xf32>
    %6 = vector.broadcast %5 : vector<1x384xf32> to vector<16x384xf32>
    %c0_9 = arith.constant 0 : index
    %c0_10 = arith.constant 0 : index
    %7 = vector.load %arg6[%c0_9, %c0_10] : memref<1x384xf32, #tpu.memory_space<vmem>>, vector<1x384xf32>
    %8 = vector.shape_cast %7 : vector<1x384xf32> to vector<1x384xf32>
    %9 = vector.broadcast %8 : vector<1x384xf32> to vector<16x384xf32>
    %c0_11 = arith.constant 0 : index
    %c0_12 = arith.constant 0 : index
    %c0_13 = arith.constant 0 : index
    %10 = vector.load %arg0[%c0_11, %c0_12, %c0_13] : memref<8x16x128xf32, #tpu.memory_space<vmem>>, vector<8x16x128xf32>
    %11 = vector.shape_cast %10 : vector<8x16x128xf32> to vector<128x128xf32>
    %12 = arith.truncf %11 : vector<128x128xf32> to vector<128x128xbf16>
    %cst = arith.constant dense<0.000000e+00> : vector<128x384xf32>
    %13 = tpu.matmul %12, %0, %cst {dimension_numbers = #tpu.dot_dimension_numbers<[1], [0], [0], [1], [0, 0, 1, 1], [], []>} : vector<128x128xbf16>, vector<128x384xbf16>, vector<128x384xf32> -> vector<128x384xf32>
    %14 = vector.shape_cast %13 : vector<128x384xf32> to vector<8x16x384xf32>
    %15 = vector.shape_cast %6 : vector<16x384xf32> to vector<1x16x384xf32>
    %16 = vector.broadcast %15 : vector<1x16x384xf32> to vector<8x16x384xf32>
    %17 = arith.addf %14, %16 : vector<8x16x384xf32>
    %18 = tpu.iota {dimensions = array<i32: 1>} : vector<16x128xi32>
    %c32_i32 = arith.constant 32 : i32
    %19 = vector.broadcast %c32_i32 : i32 to vector<16x128xi32>
    %20 = arith.cmpi eq, %18, %19 : vector<16x128xi32>
    %cst_14 = arith.constant 1.000000e+00 : f32
    %cst_15 = arith.constant 0.000000e+00 : f32
    %21 = vector.broadcast %cst_14 : f32 to vector<16x128xf32>
    %22 = vector.broadcast %cst_15 : f32 to vector<16x128xf32>
    %23 = arith.select %20, %21, %22 : vector<16x128xi1>, vector<16x128xf32>
    %24 = vector.extract_strided_slice %17 {offsets = [0, 0, 0], sizes = [1, 16, 384], strides = [1, 1, 1]} : vector<8x16x384xf32> to vector<1x16x384xf32>
    %25 = vector.shape_cast %24 : vector<1x16x384xf32> to vector<16x384xf32>
    %26 = arith.truncf %23 : vector<16x128xf32> to vector<16x128xbf16>
    %cst_16 = arith.constant dense<0.000000e+00> : vector<16x384xf32>
    %27 = tpu.matmul %26, %2, %cst_16 {dimension_numbers = #tpu.dot_dimension_numbers<[1], [0], [0], [1], [0, 0, 1, 1], [], []>} : vector<16x128xbf16>, vector<128x384xbf16>, vector<16x384xf32> -> vector<16x384xf32>
    %28 = vector.extract_strided_slice %25 {offsets = [0, 0], sizes = [16, 128], strides = [1, 1]} : vector<16x384xf32> to vector<16x128xf32>
    %29 = vector.extract_strided_slice %27 {offsets = [0, 0], sizes = [16, 128], strides = [1, 1]} : vector<16x384xf32> to vector<16x128xf32>
    %30 = arith.addf %28, %29 : vector<16x128xf32>
    %31 = arith.negf %30 : vector<16x128xf32>
    %32 = math.exp %31 : vector<16x128xf32>
    %cst_17 = arith.constant 1.000000e+00 : f32
    %33 = vector.broadcast %cst_17 : f32 to vector<16x128xf32>
    %34 = arith.addf %33, %32 : vector<16x128xf32>
    %35 = arith.divf %33, %34 : vector<16x128xf32>
    %36 = vector.extract_strided_slice %25 {offsets = [0, 128], sizes = [16, 128], strides = [1, 1]} : vector<16x384xf32> to vector<16x128xf32>
    %37 = vector.extract_strided_slice %27 {offsets = [0, 128], sizes = [16, 128], strides = [1, 1]} : vector<16x384xf32> to vector<16x128xf32>
    %38 = arith.addf %36, %37 : vector<16x128xf32>
    %39 = arith.negf %38 : vector<16x128xf32>
    %40 = math.exp %39 : vector<16x128xf32>
    %cst_18 = arith.constant 1.000000e+00 : f32
    %41 = vector.broadcast %cst_18 : f32 to vector<16x128xf32>
    %42 = arith.addf %41, %40 : vector<16x128xf32>
    %43 = arith.divf %41, %42 : vector<16x128xf32>
    %44 = vector.extract_strided_slice %25 {offsets = [0, 256], sizes = [16, 128], strides = [1, 1]} : vector<16x384xf32> to vector<16x128xf32>
    %45 = vector.extract_strided_slice %27 {offsets = [0, 256], sizes = [16, 128], strides = [1, 1]} : vector<16x384xf32> to vector<16x128xf32>
    %46 = arith.mulf %35, %45 : vector<16x128xf32>
    %47 = arith.addf %44, %46 : vector<16x128xf32>
    %48 = math.tanh %47 : vector<16x128xf32>
    %cst_19 = arith.constant 1.000000e+00 : f32
    %49 = vector.broadcast %cst_19 : f32 to vector<16x128xf32>
    %50 = arith.subf %49, %43 : vector<16x128xf32>
    %51 = arith.mulf %50, %48 : vector<16x128xf32>
    %52 = arith.mulf %43, %23 : vector<16x128xf32>
    %53 = arith.addf %51, %52 : vector<16x128xf32>
    %54 = vector.extract_strided_slice %17 {offsets = [1, 0, 0], sizes = [1, 16, 384], strides = [1, 1, 1]} : vector<8x16x384xf32> to vector<1x16x384xf32>
    %55 = vector.shape_cast %54 : vector<1x16x384xf32> to vector<16x384xf32>
    %56 = arith.truncf %53 : vector<16x128xf32> to vector<16x128xbf16>
    %cst_20 = arith.constant dense<0.000000e+00> : vector<16x384xf32>
    %57 = tpu.matmul %56, %2, %cst_20 {dimension_numbers = #tpu.dot_dimension_numbers<[1], [0], [0], [1], [0, 0, 1, 1], [], []>} : vector<16x128xbf16>, vector<128x384xbf16>, vector<16x384xf32> -> vector<16x384xf32>
    %58 = vector.extract_strided_slice %55 {offsets = [0, 0], sizes = [16, 128], strides = [1, 1]} : vector<16x384xf32> to vector<16x128xf32>
    %59 = vector.extract_strided_slice %57 {offsets = [0, 0], sizes = [16, 128], strides = [1, 1]} : vector<16x384xf32> to vector<16x128xf32>
    %60 = arith.addf %58, %59 : vector<16x128xf32>
    %61 = arith.negf %60 : vector<16x128xf32>
    %62 = math.exp %61 : vector<16x128xf32>
    %cst_21 = arith.constant 1.000000e+00 : f32
    %63 = vector.broadcast %cst_21 : f32 to vector<16x128xf32>
    %64 = arith.addf %63, %62 : vector<16x128xf32>
    %65 = arith.divf %63, %64 : vector<16x128xf32>
    %66 = vector.extract_strided_slice %55 {offsets = [0, 128], sizes = [16, 128], strides = [1, 1]} : vector<16x384xf32> to vector<16x128xf32>
    %67 = vector.extract_strided_slice %57 {offsets = [0, 128], sizes = [16, 128], strides = [1, 1]} : vector<16x384xf32> to vector<16x128xf32>
    %68 = arith.addf %66, %67 : vector<16x128xf32>
    %69 = arith.negf %68 : vector<16x128xf32>
    %70 = math.exp %69 : vector<16x128xf32>
    %cst_22 = arith.constant 1.000000e+00 : f32
    %71 = vector.broadcast %cst_22 : f32 to vector<16x128xf32>
    %72 = arith.addf %71, %70 : vector<16x128xf32>
    %73 = arith.divf %71, %72 : vector<16x128xf32>
    %74 = vector.extract_strided_slice %55 {offsets = [0, 256], sizes = [16, 128], strides = [1, 1]} : vector<16x384xf32> to vector<16x128xf32>
    %75 = vector.extract_strided_slice %57 {offsets = [0, 256], sizes = [16, 128], strides = [1, 1]} : vector<16x384xf32> to vector<16x128xf32>
    %76 = arith.mulf %65, %75 : vector<16x128xf32>
    %77 = arith.addf %74, %76 : vector<16x128xf32>
    %78 = math.tanh %77 : vector<16x128xf32>
    %cst_23 = arith.constant 1.000000e+00 : f32
    %79 = vector.broadcast %cst_23 : f32 to vector<16x128xf32>
    %80 = arith.subf %79, %73 : vector<16x128xf32>
    %81 = arith.mulf %80, %78 : vector<16x128xf32>
    %82 = arith.mulf %73, %53 : vector<16x128xf32>
    %83 = arith.addf %81, %82 : vector<16x128xf32>
    %84 = arith.truncf %53 : vector<16x128xf32> to vector<16x128xbf16>
    %cst_24 = arith.constant dense<0.000000e+00> : vector<16x384xf32>
    %85 = tpu.matmul %84, %1, %cst_24 {dimension_numbers = #tpu.dot_dimension_numbers<[1], [0], [0], [1], [0, 0, 1, 1], [], []>} : vector<16x128xbf16>, vector<128x384xbf16>, vector<16x384xf32> -> vector<16x384xf32>
    %86 = arith.addf %85, %9 : vector<16x384xf32>
    %87 = arith.truncf %23 : vector<16x128xf32> to vector<16x128xbf16>
    %cst_25 = arith.constant dense<0.000000e+00> : vector<16x384xf32>
    %88 = tpu.matmul %87, %3, %cst_25 {dimension_numbers = #tpu.dot_dimension_numbers<[1], [0], [0], [1], [0, 0, 1, 1], [], []>} : vector<16x128xbf16>, vector<128x384xbf16>, vector<16x384xf32> -> vector<16x384xf32>
    %89 = vector.extract_strided_slice %86 {offsets = [0, 0], sizes = [16, 128], strides = [1, 1]} : vector<16x384xf32> to vector<16x128xf32>
    %90 = vector.extract_strided_slice %88 {offsets = [0, 0], sizes = [16, 128], strides = [1, 1]} : vector<16x384xf32> to vector<16x128xf32>
    %91 = arith.addf %89, %90 : vector<16x128xf32>
    %92 = arith.negf %91 : vector<16x128xf32>
    %93 = math.exp %92 : vector<16x128xf32>
    %cst_26 = arith.constant 1.000000e+00 : f32
    %94 = vector.broadcast %cst_26 : f32 to vector<16x128xf32>
    %95 = arith.addf %94, %93 : vector<16x128xf32>
    %96 = arith.divf %94, %95 : vector<16x128xf32>
    %97 = vector.extract_strided_slice %86 {offsets = [0, 128], sizes = [16, 128], strides = [1, 1]} : vector<16x384xf32> to vector<16x128xf32>
    %98 = vector.extract_strided_slice %88 {offsets = [0, 128], sizes = [16, 128], strides = [1, 1]} : vector<16x384xf32> to vector<16x128xf32>
    %99 = arith.addf %97, %98 : vector<16x128xf32>
    %100 = arith.negf %99 : vector<16x128xf32>
    %101 = math.exp %100 : vector<16x128xf32>
    %cst_27 = arith.constant 1.000000e+00 : f32
    %102 = vector.broadcast %cst_27 : f32 to vector<16x128xf32>
    %103 = arith.addf %102, %101 : vector<16x128xf32>
    %104 = arith.divf %102, %103 : vector<16x128xf32>
    %105 = vector.extract_strided_slice %86 {offsets = [0, 256], sizes = [16, 128], strides = [1, 1]} : vector<16x384xf32> to vector<16x128xf32>
    %106 = vector.extract_strided_slice %88 {offsets = [0, 256], sizes = [16, 128], strides = [1, 1]} : vector<16x384xf32> to vector<16x128xf32>
    %107 = arith.mulf %96, %106 : vector<16x128xf32>
    %108 = arith.addf %105, %107 : vector<16x128xf32>
    %109 = math.tanh %108 : vector<16x128xf32>
    %cst_28 = arith.constant 1.000000e+00 : f32
    %110 = vector.broadcast %cst_28 : f32 to vector<16x128xf32>
    %111 = arith.subf %110, %104 : vector<16x128xf32>
    %112 = arith.mulf %111, %109 : vector<16x128xf32>
    %113 = arith.mulf %104, %23 : vector<16x128xf32>
    %114 = arith.addf %112, %113 : vector<16x128xf32>
    %115 = vector.extract_strided_slice %17 {offsets = [2, 0, 0], sizes = [1, 16, 384], strides = [1, 1, 1]} : vector<8x16x384xf32> to vector<1x16x384xf32>
    %116 = vector.shape_cast %115 : vector<1x16x384xf32> to vector<16x384xf32>
    %117 = arith.truncf %83 : vector<16x128xf32> to vector<16x128xbf16>
    %cst_29 = arith.constant dense<0.000000e+00> : vector<16x384xf32>
    %118 = tpu.matmul %117, %2, %cst_29 {dimension_numbers = #tpu.dot_dimension_numbers<[1], [0], [0], [1], [0, 0, 1, 1], [], []>} : vector<16x128xbf16>, vector<128x384xbf16>, vector<16x384xf32> -> vector<16x384xf32>
    %119 = vector.extract_strided_slice %116 {offsets = [0, 0], sizes = [16, 128], strides = [1, 1]} : vector<16x384xf32> to vector<16x128xf32>
    %120 = vector.extract_strided_slice %118 {offsets = [0, 0], sizes = [16, 128], strides = [1, 1]} : vector<16x384xf32> to vector<16x128xf32>
    %121 = arith.addf %119, %120 : vector<16x128xf32>
    %122 = arith.negf %121 : vector<16x128xf32>
    %123 = math.exp %122 : vector<16x128xf32>
    %cst_30 = arith.constant 1.000000e+00 : f32
    %124 = vector.broadcast %cst_30 : f32 to vector<16x128xf32>
    %125 = arith.addf %124, %123 : vector<16x128xf32>
    %126 = arith.divf %124, %125 : vector<16x128xf32>
    %127 = vector.extract_strided_slice %116 {offsets = [0, 128], sizes = [16, 128], strides = [1, 1]} : vector<16x384xf32> to vector<16x128xf32>
    %128 = vector.extract_strided_slice %118 {offsets = [0, 128], sizes = [16, 128], strides = [1, 1]} : vector<16x384xf32> to vector<16x128xf32>
    %129 = arith.addf %127, %128 : vector<16x128xf32>
    %130 = arith.negf %129 : vector<16x128xf32>
    %131 = math.exp %130 : vector<16x128xf32>
    %cst_31 = arith.constant 1.000000e+00 : f32
    %132 = vector.broadcast %cst_31 : f32 to vector<16x128xf32>
    %133 = arith.addf %132, %131 : vector<16x128xf32>
    %134 = arith.divf %132, %133 : vector<16x128xf32>
    %135 = vector.extract_strided_slice %116 {offsets = [0, 256], sizes = [16, 128], strides = [1, 1]} : vector<16x384xf32> to vector<16x128xf32>
    %136 = vector.extract_strided_slice %118 {offsets = [0, 256], sizes = [16, 128], strides = [1, 1]} : vector<16x384xf32> to vector<16x128xf32>
    %137 = arith.mulf %126, %136 : vector<16x128xf32>
    %138 = arith.addf %135, %137 : vector<16x128xf32>
    %139 = math.tanh %138 : vector<16x128xf32>
    %cst_32 = arith.constant 1.000000e+00 : f32
    %140 = vector.broadcast %cst_32 : f32 to vector<16x128xf32>
    %141 = arith.subf %140, %134 : vector<16x128xf32>
    %142 = arith.mulf %141, %139 : vector<16x128xf32>
    %143 = arith.mulf %134, %83 : vector<16x128xf32>
    %144 = arith.addf %142, %143 : vector<16x128xf32>
    %145 = arith.truncf %83 : vector<16x128xf32> to vector<16x128xbf16>
    %cst_33 = arith.constant dense<0.000000e+00> : vector<16x384xf32>
    %146 = tpu.matmul %145, %1, %cst_33 {dimension_numbers = #tpu.dot_dimension_numbers<[1], [0], [0], [1], [0, 0, 1, 1], [], []>} : vector<16x128xbf16>, vector<128x384xbf16>, vector<16x384xf32> -> vector<16x384xf32>
    %147 = arith.addf %146, %9 : vector<16x384xf32>
    %148 = arith.truncf %114 : vector<16x128xf32> to vector<16x128xbf16>
    %cst_34 = arith.constant dense<0.000000e+00> : vector<16x384xf32>
    %149 = tpu.matmul %148, %3, %cst_34 {dimension_numbers = #tpu.dot_dimension_numbers<[1], [0], [0], [1], [0, 0, 1, 1], [], []>} : vector<16x128xbf16>, vector<128x384xbf16>, vector<16x384xf32> -> vector<16x384xf32>
    %150 = vector.extract_strided_slice %147 {offsets = [0, 0], sizes = [16, 128], strides = [1, 1]} : vector<16x384xf32> to vector<16x128xf32>
    %151 = vector.extract_strided_slice %149 {offsets = [0, 0], sizes = [16, 128], strides = [1, 1]} : vector<16x384xf32> to vector<16x128xf32>
    %152 = arith.addf %150, %151 : vector<16x128xf32>
    %153 = arith.negf %152 : vector<16x128xf32>
    %154 = math.exp %153 : vector<16x128xf32>
    %cst_35 = arith.constant 1.000000e+00 : f32
    %155 = vector.broadcast %cst_35 : f32 to vector<16x128xf32>
    %156 = arith.addf %155, %154 : vector<16x128xf32>
    %157 = arith.divf %155, %156 : vector<16x128xf32>
    %158 = vector.extract_strided_slice %147 {offsets = [0, 128], sizes = [16, 128], strides = [1, 1]} : vector<16x384xf32> to vector<16x128xf32>
    %159 = vector.extract_strided_slice %149 {offsets = [0, 128], sizes = [16, 128], strides = [1, 1]} : vector<16x384xf32> to vector<16x128xf32>
    %160 = arith.addf %158, %159 : vector<16x128xf32>
    %161 = arith.negf %160 : vector<16x128xf32>
    %162 = math.exp %161 : vector<16x128xf32>
    %cst_36 = arith.constant 1.000000e+00 : f32
    %163 = vector.broadcast %cst_36 : f32 to vector<16x128xf32>
    %164 = arith.addf %163, %162 : vector<16x128xf32>
    %165 = arith.divf %163, %164 : vector<16x128xf32>
    %166 = vector.extract_strided_slice %147 {offsets = [0, 256], sizes = [16, 128], strides = [1, 1]} : vector<16x384xf32> to vector<16x128xf32>
    %167 = vector.extract_strided_slice %149 {offsets = [0, 256], sizes = [16, 128], strides = [1, 1]} : vector<16x384xf32> to vector<16x128xf32>
    %168 = arith.mulf %157, %167 : vector<16x128xf32>
    %169 = arith.addf %166, %168 : vector<16x128xf32>
    %170 = math.tanh %169 : vector<16x128xf32>
    %cst_37 = arith.constant 1.000000e+00 : f32
    %171 = vector.broadcast %cst_37 : f32 to vector<16x128xf32>
    %172 = arith.subf %171, %165 : vector<16x128xf32>
    %173 = arith.mulf %172, %170 : vector<16x128xf32>
    %174 = arith.mulf %165, %114 : vector<16x128xf32>
    %175 = arith.addf %173, %174 : vector<16x128xf32>
    %176 = vector.extract_strided_slice %17 {offsets = [3, 0, 0], sizes = [1, 16, 384], strides = [1, 1, 1]} : vector<8x16x384xf32> to vector<1x16x384xf32>
    %177 = vector.shape_cast %176 : vector<1x16x384xf32> to vector<16x384xf32>
    %178 = arith.truncf %144 : vector<16x128xf32> to vector<16x128xbf16>
    %cst_38 = arith.constant dense<0.000000e+00> : vector<16x384xf32>
    %179 = tpu.matmul %178, %2, %cst_38 {dimension_numbers = #tpu.dot_dimension_numbers<[1], [0], [0], [1], [0, 0, 1, 1], [], []>} : vector<16x128xbf16>, vector<128x384xbf16>, vector<16x384xf32> -> vector<16x384xf32>
    %180 = vector.extract_strided_slice %177 {offsets = [0, 0], sizes = [16, 128], strides = [1, 1]} : vector<16x384xf32> to vector<16x128xf32>
    %181 = vector.extract_strided_slice %179 {offsets = [0, 0], sizes = [16, 128], strides = [1, 1]} : vector<16x384xf32> to vector<16x128xf32>
    %182 = arith.addf %180, %181 : vector<16x128xf32>
    %183 = arith.negf %182 : vector<16x128xf32>
    %184 = math.exp %183 : vector<16x128xf32>
    %cst_39 = arith.constant 1.000000e+00 : f32
    %185 = vector.broadcast %cst_39 : f32 to vector<16x128xf32>
    %186 = arith.addf %185, %184 : vector<16x128xf32>
    %187 = arith.divf %185, %186 : vector<16x128xf32>
    %188 = vector.extract_strided_slice %177 {offsets = [0, 128], sizes = [16, 128], strides = [1, 1]} : vector<16x384xf32> to vector<16x128xf32>
    %189 = vector.extract_strided_slice %179 {offsets = [0, 128], sizes = [16, 128], strides = [1, 1]} : vector<16x384xf32> to vector<16x128xf32>
    %190 = arith.addf %188, %189 : vector<16x128xf32>
    %191 = arith.negf %190 : vector<16x128xf32>
    %192 = math.exp %191 : vector<16x128xf32>
    %cst_40 = arith.constant 1.000000e+00 : f32
    %193 = vector.broadcast %cst_40 : f32 to vector<16x128xf32>
    %194 = arith.addf %193, %192 : vector<16x128xf32>
    %195 = arith.divf %193, %194 : vector<16x128xf32>
    %196 = vector.extract_strided_slice %177 {offsets = [0, 256], sizes = [16, 128], strides = [1, 1]} : vector<16x384xf32> to vector<16x128xf32>
    %197 = vector.extract_strided_slice %179 {offsets = [0, 256], sizes = [16, 128], strides = [1, 1]} : vector<16x384xf32> to vector<16x128xf32>
    %198 = arith.mulf %187, %197 : vector<16x128xf32>
    %199 = arith.addf %196, %198 : vector<16x128xf32>
    %200 = math.tanh %199 : vector<16x128xf32>
    %cst_41 = arith.constant 1.000000e+00 : f32
    %201 = vector.broadcast %cst_41 : f32 to vector<16x128xf32>
    %202 = arith.subf %201, %195 : vector<16x128xf32>
    %203 = arith.mulf %202, %200 : vector<16x128xf32>
    %204 = arith.mulf %195, %144 : vector<16x128xf32>
    %205 = arith.addf %203, %204 : vector<16x128xf32>
    %206 = arith.truncf %144 : vector<16x128xf32> to vector<16x128xbf16>
    %cst_42 = arith.constant dense<0.000000e+00> : vector<16x384xf32>
    %207 = tpu.matmul %206, %1, %cst_42 {dimension_numbers = #tpu.dot_dimension_numbers<[1], [0], [0], [1], [0, 0, 1, 1], [], []>} : vector<16x128xbf16>, vector<128x384xbf16>, vector<16x384xf32> -> vector<16x384xf32>
    %208 = arith.addf %207, %9 : vector<16x384xf32>
    %209 = arith.truncf %175 : vector<16x128xf32> to vector<16x128xbf16>
    %cst_43 = arith.constant dense<0.000000e+00> : vector<16x384xf32>
    %210 = tpu.matmul %209, %3, %cst_43 {dimension_numbers = #tpu.dot_dimension_numbers<[1], [0], [0], [1], [0, 0, 1, 1], [], []>} : vector<16x128xbf16>, vector<128x384xbf16>, vector<16x384xf32> -> vector<16x384xf32>
    %211 = vector.extract_strided_slice %208 {offsets = [0, 0], sizes = [16, 128], strides = [1, 1]} : vector<16x384xf32> to vector<16x128xf32>
    %212 = vector.extract_strided_slice %210 {offsets = [0, 0], sizes = [16, 128], strides = [1, 1]} : vector<16x384xf32> to vector<16x128xf32>
    %213 = arith.addf %211, %212 : vector<16x128xf32>
    %214 = arith.negf %213 : vector<16x128xf32>
    %215 = math.exp %214 : vector<16x128xf32>
    %cst_44 = arith.constant 1.000000e+00 : f32
    %216 = vector.broadcast %cst_44 : f32 to vector<16x128xf32>
    %217 = arith.addf %216, %215 : vector<16x128xf32>
    %218 = arith.divf %216, %217 : vector<16x128xf32>
    %219 = vector.extract_strided_slice %208 {offsets = [0, 128], sizes = [16, 128], strides = [1, 1]} : vector<16x384xf32> to vector<16x128xf32>
    %220 = vector.extract_strided_slice %210 {offsets = [0, 128], sizes = [16, 128], strides = [1, 1]} : vector<16x384xf32> to vector<16x128xf32>
    %221 = arith.addf %219, %220 : vector<16x128xf32>
    %222 = arith.negf %221 : vector<16x128xf32>
    %223 = math.exp %222 : vector<16x128xf32>
    %cst_45 = arith.constant 1.000000e+00 : f32
    %224 = vector.broadcast %cst_45 : f32 to vector<16x128xf32>
    %225 = arith.addf %224, %223 : vector<16x128xf32>
    %226 = arith.divf %224, %225 : vector<16x128xf32>
    %227 = vector.extract_strided_slice %208 {offsets = [0, 256], sizes = [16, 128], strides = [1, 1]} : vector<16x384xf32> to vector<16x128xf32>
    %228 = vector.extract_strided_slice %210 {offsets = [0, 256], sizes = [16, 128], strides = [1, 1]} : vector<16x384xf32> to vector<16x128xf32>
    %229 = arith.mulf %218, %228 : vector<16x128xf32>
    %230 = arith.addf %227, %229 : vector<16x128xf32>
    %231 = math.tanh %230 : vector<16x128xf32>
    %cst_46 = arith.constant 1.000000e+00 : f32
    %232 = vector.broadcast %cst_46 : f32 to vector<16x128xf32>
    %233 = arith.subf %232, %226 : vector<16x128xf32>
    %234 = arith.mulf %233, %231 : vector<16x128xf32>
    %235 = arith.mulf %226, %175 : vector<16x128xf32>
    %236 = arith.addf %234, %235 : vector<16x128xf32>
    %237 = vector.extract_strided_slice %17 {offsets = [4, 0, 0], sizes = [1, 16, 384], strides = [1, 1, 1]} : vector<8x16x384xf32> to vector<1x16x384xf32>
    %238 = vector.shape_cast %237 : vector<1x16x384xf32> to vector<16x384xf32>
    %239 = arith.truncf %205 : vector<16x128xf32> to vector<16x128xbf16>
    %cst_47 = arith.constant dense<0.000000e+00> : vector<16x384xf32>
    %240 = tpu.matmul %239, %2, %cst_47 {dimension_numbers = #tpu.dot_dimension_numbers<[1], [0], [0], [1], [0, 0, 1, 1], [], []>} : vector<16x128xbf16>, vector<128x384xbf16>, vector<16x384xf32> -> vector<16x384xf32>
    %241 = vector.extract_strided_slice %238 {offsets = [0, 0], sizes = [16, 128], strides = [1, 1]} : vector<16x384xf32> to vector<16x128xf32>
    %242 = vector.extract_strided_slice %240 {offsets = [0, 0], sizes = [16, 128], strides = [1, 1]} : vector<16x384xf32> to vector<16x128xf32>
    %243 = arith.addf %241, %242 : vector<16x128xf32>
    %244 = arith.negf %243 : vector<16x128xf32>
    %245 = math.exp %244 : vector<16x128xf32>
    %cst_48 = arith.constant 1.000000e+00 : f32
    %246 = vector.broadcast %cst_48 : f32 to vector<16x128xf32>
    %247 = arith.addf %246, %245 : vector<16x128xf32>
    %248 = arith.divf %246, %247 : vector<16x128xf32>
    %249 = vector.extract_strided_slice %238 {offsets = [0, 128], sizes = [16, 128], strides = [1, 1]} : vector<16x384xf32> to vector<16x128xf32>
    %250 = vector.extract_strided_slice %240 {offsets = [0, 128], sizes = [16, 128], strides = [1, 1]} : vector<16x384xf32> to vector<16x128xf32>
    %251 = arith.addf %249, %250 : vector<16x128xf32>
    %252 = arith.negf %251 : vector<16x128xf32>
    %253 = math.exp %252 : vector<16x128xf32>
    %cst_49 = arith.constant 1.000000e+00 : f32
    %254 = vector.broadcast %cst_49 : f32 to vector<16x128xf32>
    %255 = arith.addf %254, %253 : vector<16x128xf32>
    %256 = arith.divf %254, %255 : vector<16x128xf32>
    %257 = vector.extract_strided_slice %238 {offsets = [0, 256], sizes = [16, 128], strides = [1, 1]} : vector<16x384xf32> to vector<16x128xf32>
    %258 = vector.extract_strided_slice %240 {offsets = [0, 256], sizes = [16, 128], strides = [1, 1]} : vector<16x384xf32> to vector<16x128xf32>
    %259 = arith.mulf %248, %258 : vector<16x128xf32>
    %260 = arith.addf %257, %259 : vector<16x128xf32>
    %261 = math.tanh %260 : vector<16x128xf32>
    %cst_50 = arith.constant 1.000000e+00 : f32
    %262 = vector.broadcast %cst_50 : f32 to vector<16x128xf32>
    %263 = arith.subf %262, %256 : vector<16x128xf32>
    %264 = arith.mulf %263, %261 : vector<16x128xf32>
    %265 = arith.mulf %256, %205 : vector<16x128xf32>
    %266 = arith.addf %264, %265 : vector<16x128xf32>
    %267 = arith.truncf %205 : vector<16x128xf32> to vector<16x128xbf16>
    %cst_51 = arith.constant dense<0.000000e+00> : vector<16x384xf32>
    %268 = tpu.matmul %267, %1, %cst_51 {dimension_numbers = #tpu.dot_dimension_numbers<[1], [0], [0], [1], [0, 0, 1, 1], [], []>} : vector<16x128xbf16>, vector<128x384xbf16>, vector<16x384xf32> -> vector<16x384xf32>
    %269 = arith.addf %268, %9 : vector<16x384xf32>
    %270 = arith.truncf %236 : vector<16x128xf32> to vector<16x128xbf16>
    %cst_52 = arith.constant dense<0.000000e+00> : vector<16x384xf32>
    %271 = tpu.matmul %270, %3, %cst_52 {dimension_numbers = #tpu.dot_dimension_numbers<[1], [0], [0], [1], [0, 0, 1, 1], [], []>} : vector<16x128xbf16>, vector<128x384xbf16>, vector<16x384xf32> -> vector<16x384xf32>
    %272 = vector.extract_strided_slice %269 {offsets = [0, 0], sizes = [16, 128], strides = [1, 1]} : vector<16x384xf32> to vector<16x128xf32>
    %273 = vector.extract_strided_slice %271 {offsets = [0, 0], sizes = [16, 128], strides = [1, 1]} : vector<16x384xf32> to vector<16x128xf32>
    %274 = arith.addf %272, %273 : vector<16x128xf32>
    %275 = arith.negf %274 : vector<16x128xf32>
    %276 = math.exp %275 : vector<16x128xf32>
    %cst_53 = arith.constant 1.000000e+00 : f32
    %277 = vector.broadcast %cst_53 : f32 to vector<16x128xf32>
    %278 = arith.addf %277, %276 : vector<16x128xf32>
    %279 = arith.divf %277, %278 : vector<16x128xf32>
    %280 = vector.extract_strided_slice %269 {offsets = [0, 128], sizes = [16, 128], strides = [1, 1]} : vector<16x384xf32> to vector<16x128xf32>
    %281 = vector.extract_strided_slice %271 {offsets = [0, 128], sizes = [16, 128], strides = [1, 1]} : vector<16x384xf32> to vector<16x128xf32>
    %282 = arith.addf %280, %281 : vector<16x128xf32>
    %283 = arith.negf %282 : vector<16x128xf32>
    %284 = math.exp %283 : vector<16x128xf32>
    %cst_54 = arith.constant 1.000000e+00 : f32
    %285 = vector.broadcast %cst_54 : f32 to vector<16x128xf32>
    %286 = arith.addf %285, %284 : vector<16x128xf32>
    %287 = arith.divf %285, %286 : vector<16x128xf32>
    %288 = vector.extract_strided_slice %269 {offsets = [0, 256], sizes = [16, 128], strides = [1, 1]} : vector<16x384xf32> to vector<16x128xf32>
    %289 = vector.extract_strided_slice %271 {offsets = [0, 256], sizes = [16, 128], strides = [1, 1]} : vector<16x384xf32> to vector<16x128xf32>
    %290 = arith.mulf %279, %289 : vector<16x128xf32>
    %291 = arith.addf %288, %290 : vector<16x128xf32>
    %292 = math.tanh %291 : vector<16x128xf32>
    %cst_55 = arith.constant 1.000000e+00 : f32
    %293 = vector.broadcast %cst_55 : f32 to vector<16x128xf32>
    %294 = arith.subf %293, %287 : vector<16x128xf32>
    %295 = arith.mulf %294, %292 : vector<16x128xf32>
    %296 = arith.mulf %287, %236 : vector<16x128xf32>
    %297 = arith.addf %295, %296 : vector<16x128xf32>
    %298 = vector.extract_strided_slice %17 {offsets = [5, 0, 0], sizes = [1, 16, 384], strides = [1, 1, 1]} : vector<8x16x384xf32> to vector<1x16x384xf32>
    %299 = vector.shape_cast %298 : vector<1x16x384xf32> to vector<16x384xf32>
    %300 = arith.truncf %266 : vector<16x128xf32> to vector<16x128xbf16>
    %cst_56 = arith.constant dense<0.000000e+00> : vector<16x384xf32>
    %301 = tpu.matmul %300, %2, %cst_56 {dimension_numbers = #tpu.dot_dimension_numbers<[1], [0], [0], [1], [0, 0, 1, 1], [], []>} : vector<16x128xbf16>, vector<128x384xbf16>, vector<16x384xf32> -> vector<16x384xf32>
    %302 = vector.extract_strided_slice %299 {offsets = [0, 0], sizes = [16, 128], strides = [1, 1]} : vector<16x384xf32> to vector<16x128xf32>
    %303 = vector.extract_strided_slice %301 {offsets = [0, 0], sizes = [16, 128], strides = [1, 1]} : vector<16x384xf32> to vector<16x128xf32>
    %304 = arith.addf %302, %303 : vector<16x128xf32>
    %305 = arith.negf %304 : vector<16x128xf32>
    %306 = math.exp %305 : vector<16x128xf32>
    %cst_57 = arith.constant 1.000000e+00 : f32
    %307 = vector.broadcast %cst_57 : f32 to vector<16x128xf32>
    %308 = arith.addf %307, %306 : vector<16x128xf32>
    %309 = arith.divf %307, %308 : vector<16x128xf32>
    %310 = vector.extract_strided_slice %299 {offsets = [0, 128], sizes = [16, 128], strides = [1, 1]} : vector<16x384xf32> to vector<16x128xf32>
    %311 = vector.extract_strided_slice %301 {offsets = [0, 128], sizes = [16, 128], strides = [1, 1]} : vector<16x384xf32> to vector<16x128xf32>
    %312 = arith.addf %310, %311 : vector<16x128xf32>
    %313 = arith.negf %312 : vector<16x128xf32>
    %314 = math.exp %313 : vector<16x128xf32>
    %cst_58 = arith.constant 1.000000e+00 : f32
    %315 = vector.broadcast %cst_58 : f32 to vector<16x128xf32>
    %316 = arith.addf %315, %314 : vector<16x128xf32>
    %317 = arith.divf %315, %316 : vector<16x128xf32>
    %318 = vector.extract_strided_slice %299 {offsets = [0, 256], sizes = [16, 128], strides = [1, 1]} : vector<16x384xf32> to vector<16x128xf32>
    %319 = vector.extract_strided_slice %301 {offsets = [0, 256], sizes = [16, 128], strides = [1, 1]} : vector<16x384xf32> to vector<16x128xf32>
    %320 = arith.mulf %309, %319 : vector<16x128xf32>
    %321 = arith.addf %318, %320 : vector<16x128xf32>
    %322 = math.tanh %321 : vector<16x128xf32>
    %cst_59 = arith.constant 1.000000e+00 : f32
    %323 = vector.broadcast %cst_59 : f32 to vector<16x128xf32>
    %324 = arith.subf %323, %317 : vector<16x128xf32>
    %325 = arith.mulf %324, %322 : vector<16x128xf32>
    %326 = arith.mulf %317, %266 : vector<16x128xf32>
    %327 = arith.addf %325, %326 : vector<16x128xf32>
    %328 = arith.truncf %266 : vector<16x128xf32> to vector<16x128xbf16>
    %cst_60 = arith.constant dense<0.000000e+00> : vector<16x384xf32>
    %329 = tpu.matmul %328, %1, %cst_60 {dimension_numbers = #tpu.dot_dimension_numbers<[1], [0], [0], [1], [0, 0, 1, 1], [], []>} : vector<16x128xbf16>, vector<128x384xbf16>, vector<16x384xf32> -> vector<16x384xf32>
    %330 = arith.addf %329, %9 : vector<16x384xf32>
    %331 = arith.truncf %297 : vector<16x128xf32> to vector<16x128xbf16>
    %cst_61 = arith.constant dense<0.000000e+00> : vector<16x384xf32>
    %332 = tpu.matmul %331, %3, %cst_61 {dimension_numbers = #tpu.dot_dimension_numbers<[1], [0], [0], [1], [0, 0, 1, 1], [], []>} : vector<16x128xbf16>, vector<128x384xbf16>, vector<16x384xf32> -> vector<16x384xf32>
    %333 = vector.extract_strided_slice %330 {offsets = [0, 0], sizes = [16, 128], strides = [1, 1]} : vector<16x384xf32> to vector<16x128xf32>
    %334 = vector.extract_strided_slice %332 {offsets = [0, 0], sizes = [16, 128], strides = [1, 1]} : vector<16x384xf32> to vector<16x128xf32>
    %335 = arith.addf %333, %334 : vector<16x128xf32>
    %336 = arith.negf %335 : vector<16x128xf32>
    %337 = math.exp %336 : vector<16x128xf32>
    %cst_62 = arith.constant 1.000000e+00 : f32
    %338 = vector.broadcast %cst_62 : f32 to vector<16x128xf32>
    %339 = arith.addf %338, %337 : vector<16x128xf32>
    %340 = arith.divf %338, %339 : vector<16x128xf32>
    %341 = vector.extract_strided_slice %330 {offsets = [0, 128], sizes = [16, 128], strides = [1, 1]} : vector<16x384xf32> to vector<16x128xf32>
    %342 = vector.extract_strided_slice %332 {offsets = [0, 128], sizes = [16, 128], strides = [1, 1]} : vector<16x384xf32> to vector<16x128xf32>
    %343 = arith.addf %341, %342 : vector<16x128xf32>
    %344 = arith.negf %343 : vector<16x128xf32>
    %345 = math.exp %344 : vector<16x128xf32>
    %cst_63 = arith.constant 1.000000e+00 : f32
    %346 = vector.broadcast %cst_63 : f32 to vector<16x128xf32>
    %347 = arith.addf %346, %345 : vector<16x128xf32>
    %348 = arith.divf %346, %347 : vector<16x128xf32>
    %349 = vector.extract_strided_slice %330 {offsets = [0, 256], sizes = [16, 128], strides = [1, 1]} : vector<16x384xf32> to vector<16x128xf32>
    %350 = vector.extract_strided_slice %332 {offsets = [0, 256], sizes = [16, 128], strides = [1, 1]} : vector<16x384xf32> to vector<16x128xf32>
    %351 = arith.mulf %340, %350 : vector<16x128xf32>
    %352 = arith.addf %349, %351 : vector<16x128xf32>
    %353 = math.tanh %352 : vector<16x128xf32>
    %cst_64 = arith.constant 1.000000e+00 : f32
    %354 = vector.broadcast %cst_64 : f32 to vector<16x128xf32>
    %355 = arith.subf %354, %348 : vector<16x128xf32>
    %356 = arith.mulf %355, %353 : vector<16x128xf32>
    %357 = arith.mulf %348, %297 : vector<16x128xf32>
    %358 = arith.addf %356, %357 : vector<16x128xf32>
    %359 = vector.extract_strided_slice %17 {offsets = [6, 0, 0], sizes = [1, 16, 384], strides = [1, 1, 1]} : vector<8x16x384xf32> to vector<1x16x384xf32>
    %360 = vector.shape_cast %359 : vector<1x16x384xf32> to vector<16x384xf32>
    %361 = arith.truncf %327 : vector<16x128xf32> to vector<16x128xbf16>
    %cst_65 = arith.constant dense<0.000000e+00> : vector<16x384xf32>
    %362 = tpu.matmul %361, %2, %cst_65 {dimension_numbers = #tpu.dot_dimension_numbers<[1], [0], [0], [1], [0, 0, 1, 1], [], []>} : vector<16x128xbf16>, vector<128x384xbf16>, vector<16x384xf32> -> vector<16x384xf32>
    %363 = vector.extract_strided_slice %360 {offsets = [0, 0], sizes = [16, 128], strides = [1, 1]} : vector<16x384xf32> to vector<16x128xf32>
    %364 = vector.extract_strided_slice %362 {offsets = [0, 0], sizes = [16, 128], strides = [1, 1]} : vector<16x384xf32> to vector<16x128xf32>
    %365 = arith.addf %363, %364 : vector<16x128xf32>
    %366 = arith.negf %365 : vector<16x128xf32>
    %367 = math.exp %366 : vector<16x128xf32>
    %cst_66 = arith.constant 1.000000e+00 : f32
    %368 = vector.broadcast %cst_66 : f32 to vector<16x128xf32>
    %369 = arith.addf %368, %367 : vector<16x128xf32>
    %370 = arith.divf %368, %369 : vector<16x128xf32>
    %371 = vector.extract_strided_slice %360 {offsets = [0, 128], sizes = [16, 128], strides = [1, 1]} : vector<16x384xf32> to vector<16x128xf32>
    %372 = vector.extract_strided_slice %362 {offsets = [0, 128], sizes = [16, 128], strides = [1, 1]} : vector<16x384xf32> to vector<16x128xf32>
    %373 = arith.addf %371, %372 : vector<16x128xf32>
    %374 = arith.negf %373 : vector<16x128xf32>
    %375 = math.exp %374 : vector<16x128xf32>
    %cst_67 = arith.constant 1.000000e+00 : f32
    %376 = vector.broadcast %cst_67 : f32 to vector<16x128xf32>
    %377 = arith.addf %376, %375 : vector<16x128xf32>
    %378 = arith.divf %376, %377 : vector<16x128xf32>
    %379 = vector.extract_strided_slice %360 {offsets = [0, 256], sizes = [16, 128], strides = [1, 1]} : vector<16x384xf32> to vector<16x128xf32>
    %380 = vector.extract_strided_slice %362 {offsets = [0, 256], sizes = [16, 128], strides = [1, 1]} : vector<16x384xf32> to vector<16x128xf32>
    %381 = arith.mulf %370, %380 : vector<16x128xf32>
    %382 = arith.addf %379, %381 : vector<16x128xf32>
    %383 = math.tanh %382 : vector<16x128xf32>
    %cst_68 = arith.constant 1.000000e+00 : f32
    %384 = vector.broadcast %cst_68 : f32 to vector<16x128xf32>
    %385 = arith.subf %384, %378 : vector<16x128xf32>
    %386 = arith.mulf %385, %383 : vector<16x128xf32>
    %387 = arith.mulf %378, %327 : vector<16x128xf32>
    %388 = arith.addf %386, %387 : vector<16x128xf32>
    %389 = arith.truncf %327 : vector<16x128xf32> to vector<16x128xbf16>
    %cst_69 = arith.constant dense<0.000000e+00> : vector<16x384xf32>
    %390 = tpu.matmul %389, %1, %cst_69 {dimension_numbers = #tpu.dot_dimension_numbers<[1], [0], [0], [1], [0, 0, 1, 1], [], []>} : vector<16x128xbf16>, vector<128x384xbf16>, vector<16x384xf32> -> vector<16x384xf32>
    %391 = arith.addf %390, %9 : vector<16x384xf32>
    %392 = arith.truncf %358 : vector<16x128xf32> to vector<16x128xbf16>
    %cst_70 = arith.constant dense<0.000000e+00> : vector<16x384xf32>
    %393 = tpu.matmul %392, %3, %cst_70 {dimension_numbers = #tpu.dot_dimension_numbers<[1], [0], [0], [1], [0, 0, 1, 1], [], []>} : vector<16x128xbf16>, vector<128x384xbf16>, vector<16x384xf32> -> vector<16x384xf32>
    %394 = vector.extract_strided_slice %391 {offsets = [0, 0], sizes = [16, 128], strides = [1, 1]} : vector<16x384xf32> to vector<16x128xf32>
    %395 = vector.extract_strided_slice %393 {offsets = [0, 0], sizes = [16, 128], strides = [1, 1]} : vector<16x384xf32> to vector<16x128xf32>
    %396 = arith.addf %394, %395 : vector<16x128xf32>
    %397 = arith.negf %396 : vector<16x128xf32>
    %398 = math.exp %397 : vector<16x128xf32>
    %cst_71 = arith.constant 1.000000e+00 : f32
    %399 = vector.broadcast %cst_71 : f32 to vector<16x128xf32>
    %400 = arith.addf %399, %398 : vector<16x128xf32>
    %401 = arith.divf %399, %400 : vector<16x128xf32>
    %402 = vector.extract_strided_slice %391 {offsets = [0, 128], sizes = [16, 128], strides = [1, 1]} : vector<16x384xf32> to vector<16x128xf32>
    %403 = vector.extract_strided_slice %393 {offsets = [0, 128], sizes = [16, 128], strides = [1, 1]} : vector<16x384xf32> to vector<16x128xf32>
    %404 = arith.addf %402, %403 : vector<16x128xf32>
    %405 = arith.negf %404 : vector<16x128xf32>
    %406 = math.exp %405 : vector<16x128xf32>
    %cst_72 = arith.constant 1.000000e+00 : f32
    %407 = vector.broadcast %cst_72 : f32 to vector<16x128xf32>
    %408 = arith.addf %407, %406 : vector<16x128xf32>
    %409 = arith.divf %407, %408 : vector<16x128xf32>
    %410 = vector.extract_strided_slice %391 {offsets = [0, 256], sizes = [16, 128], strides = [1, 1]} : vector<16x384xf32> to vector<16x128xf32>
    %411 = vector.extract_strided_slice %393 {offsets = [0, 256], sizes = [16, 128], strides = [1, 1]} : vector<16x384xf32> to vector<16x128xf32>
    %412 = arith.mulf %401, %411 : vector<16x128xf32>
    %413 = arith.addf %410, %412 : vector<16x128xf32>
    %414 = math.tanh %413 : vector<16x128xf32>
    %cst_73 = arith.constant 1.000000e+00 : f32
    %415 = vector.broadcast %cst_73 : f32 to vector<16x128xf32>
    %416 = arith.subf %415, %409 : vector<16x128xf32>
    %417 = arith.mulf %416, %414 : vector<16x128xf32>
    %418 = arith.mulf %409, %358 : vector<16x128xf32>
    %419 = arith.addf %417, %418 : vector<16x128xf32>
    %420 = vector.extract_strided_slice %17 {offsets = [7, 0, 0], sizes = [1, 16, 384], strides = [1, 1, 1]} : vector<8x16x384xf32> to vector<1x16x384xf32>
    %421 = vector.shape_cast %420 : vector<1x16x384xf32> to vector<16x384xf32>
    %422 = arith.truncf %388 : vector<16x128xf32> to vector<16x128xbf16>
    %cst_74 = arith.constant dense<0.000000e+00> : vector<16x384xf32>
    %423 = tpu.matmul %422, %2, %cst_74 {dimension_numbers = #tpu.dot_dimension_numbers<[1], [0], [0], [1], [0, 0, 1, 1], [], []>} : vector<16x128xbf16>, vector<128x384xbf16>, vector<16x384xf32> -> vector<16x384xf32>
    %424 = vector.extract_strided_slice %421 {offsets = [0, 0], sizes = [16, 128], strides = [1, 1]} : vector<16x384xf32> to vector<16x128xf32>
    %425 = vector.extract_strided_slice %423 {offsets = [0, 0], sizes = [16, 128], strides = [1, 1]} : vector<16x384xf32> to vector<16x128xf32>
    %426 = arith.addf %424, %425 : vector<16x128xf32>
    %427 = arith.negf %426 : vector<16x128xf32>
    %428 = math.exp %427 : vector<16x128xf32>
    %cst_75 = arith.constant 1.000000e+00 : f32
    %429 = vector.broadcast %cst_75 : f32 to vector<16x128xf32>
    %430 = arith.addf %429, %428 : vector<16x128xf32>
    %431 = arith.divf %429, %430 : vector<16x128xf32>
    %432 = vector.extract_strided_slice %421 {offsets = [0, 128], sizes = [16, 128], strides = [1, 1]} : vector<16x384xf32> to vector<16x128xf32>
    %433 = vector.extract_strided_slice %423 {offsets = [0, 128], sizes = [16, 128], strides = [1, 1]} : vector<16x384xf32> to vector<16x128xf32>
    %434 = arith.addf %432, %433 : vector<16x128xf32>
    %435 = arith.negf %434 : vector<16x128xf32>
    %436 = math.exp %435 : vector<16x128xf32>
    %cst_76 = arith.constant 1.000000e+00 : f32
    %437 = vector.broadcast %cst_76 : f32 to vector<16x128xf32>
    %438 = arith.addf %437, %436 : vector<16x128xf32>
    %439 = arith.divf %437, %438 : vector<16x128xf32>
    %440 = vector.extract_strided_slice %421 {offsets = [0, 256], sizes = [16, 128], strides = [1, 1]} : vector<16x384xf32> to vector<16x128xf32>
    %441 = vector.extract_strided_slice %423 {offsets = [0, 256], sizes = [16, 128], strides = [1, 1]} : vector<16x384xf32> to vector<16x128xf32>
    %442 = arith.mulf %431, %441 : vector<16x128xf32>
    %443 = arith.addf %440, %442 : vector<16x128xf32>
    %444 = math.tanh %443 : vector<16x128xf32>
    %cst_77 = arith.constant 1.000000e+00 : f32
    %445 = vector.broadcast %cst_77 : f32 to vector<16x128xf32>
    %446 = arith.subf %445, %439 : vector<16x128xf32>
    %447 = arith.mulf %446, %444 : vector<16x128xf32>
    %448 = arith.mulf %439, %388 : vector<16x128xf32>
    %449 = arith.addf %447, %448 : vector<16x128xf32>
    %450 = arith.truncf %388 : vector<16x128xf32> to vector<16x128xbf16>
    %cst_78 = arith.constant dense<0.000000e+00> : vector<16x384xf32>
    %451 = tpu.matmul %450, %1, %cst_78 {dimension_numbers = #tpu.dot_dimension_numbers<[1], [0], [0], [1], [0, 0, 1, 1], [], []>} : vector<16x128xbf16>, vector<128x384xbf16>, vector<16x384xf32> -> vector<16x384xf32>
    %452 = arith.addf %451, %9 : vector<16x384xf32>
    %453 = arith.truncf %419 : vector<16x128xf32> to vector<16x128xbf16>
    %cst_79 = arith.constant dense<0.000000e+00> : vector<16x384xf32>
    %454 = tpu.matmul %453, %3, %cst_79 {dimension_numbers = #tpu.dot_dimension_numbers<[1], [0], [0], [1], [0, 0, 1, 1], [], []>} : vector<16x128xbf16>, vector<128x384xbf16>, vector<16x384xf32> -> vector<16x384xf32>
    %455 = vector.extract_strided_slice %452 {offsets = [0, 0], sizes = [16, 128], strides = [1, 1]} : vector<16x384xf32> to vector<16x128xf32>
    %456 = vector.extract_strided_slice %454 {offsets = [0, 0], sizes = [16, 128], strides = [1, 1]} : vector<16x384xf32> to vector<16x128xf32>
    %457 = arith.addf %455, %456 : vector<16x128xf32>
    %458 = arith.negf %457 : vector<16x128xf32>
    %459 = math.exp %458 : vector<16x128xf32>
    %cst_80 = arith.constant 1.000000e+00 : f32
    %460 = vector.broadcast %cst_80 : f32 to vector<16x128xf32>
    %461 = arith.addf %460, %459 : vector<16x128xf32>
    %462 = arith.divf %460, %461 : vector<16x128xf32>
    %463 = vector.extract_strided_slice %452 {offsets = [0, 128], sizes = [16, 128], strides = [1, 1]} : vector<16x384xf32> to vector<16x128xf32>
    %464 = vector.extract_strided_slice %454 {offsets = [0, 128], sizes = [16, 128], strides = [1, 1]} : vector<16x384xf32> to vector<16x128xf32>
    %465 = arith.addf %463, %464 : vector<16x128xf32>
    %466 = arith.negf %465 : vector<16x128xf32>
    %467 = math.exp %466 : vector<16x128xf32>
    %cst_81 = arith.constant 1.000000e+00 : f32
    %468 = vector.broadcast %cst_81 : f32 to vector<16x128xf32>
    %469 = arith.addf %468, %467 : vector<16x128xf32>
    %470 = arith.divf %468, %469 : vector<16x128xf32>
    %471 = vector.extract_strided_slice %452 {offsets = [0, 256], sizes = [16, 128], strides = [1, 1]} : vector<16x384xf32> to vector<16x128xf32>
    %472 = vector.extract_strided_slice %454 {offsets = [0, 256], sizes = [16, 128], strides = [1, 1]} : vector<16x384xf32> to vector<16x128xf32>
    %473 = arith.mulf %462, %472 : vector<16x128xf32>
    %474 = arith.addf %471, %473 : vector<16x128xf32>
    %475 = math.tanh %474 : vector<16x128xf32>
    %cst_82 = arith.constant 1.000000e+00 : f32
    %476 = vector.broadcast %cst_82 : f32 to vector<16x128xf32>
    %477 = arith.subf %476, %470 : vector<16x128xf32>
    %478 = arith.mulf %477, %475 : vector<16x128xf32>
    %479 = arith.mulf %470, %419 : vector<16x128xf32>
    %480 = arith.addf %478, %479 : vector<16x128xf32>
    %481 = arith.truncf %449 : vector<16x128xf32> to vector<16x128xbf16>
    %cst_83 = arith.constant dense<0.000000e+00> : vector<16x384xf32>
    %482 = tpu.matmul %481, %1, %cst_83 {dimension_numbers = #tpu.dot_dimension_numbers<[1], [0], [0], [1], [0, 0, 1, 1], [], []>} : vector<16x128xbf16>, vector<128x384xbf16>, vector<16x384xf32> -> vector<16x384xf32>
    %483 = arith.addf %482, %9 : vector<16x384xf32>
    %484 = arith.truncf %480 : vector<16x128xf32> to vector<16x128xbf16>
    %cst_84 = arith.constant dense<0.000000e+00> : vector<16x384xf32>
    %485 = tpu.matmul %484, %3, %cst_84 {dimension_numbers = #tpu.dot_dimension_numbers<[1], [0], [0], [1], [0, 0, 1, 1], [], []>} : vector<16x128xbf16>, vector<128x384xbf16>, vector<16x384xf32> -> vector<16x384xf32>
    %486 = vector.extract_strided_slice %483 {offsets = [0, 0], sizes = [16, 128], strides = [1, 1]} : vector<16x384xf32> to vector<16x128xf32>
    %487 = vector.extract_strided_slice %485 {offsets = [0, 0], sizes = [16, 128], strides = [1, 1]} : vector<16x384xf32> to vector<16x128xf32>
    %488 = arith.addf %486, %487 : vector<16x128xf32>
    %489 = arith.negf %488 : vector<16x128xf32>
    %490 = math.exp %489 : vector<16x128xf32>
    %cst_85 = arith.constant 1.000000e+00 : f32
    %491 = vector.broadcast %cst_85 : f32 to vector<16x128xf32>
    %492 = arith.addf %491, %490 : vector<16x128xf32>
    %493 = arith.divf %491, %492 : vector<16x128xf32>
    %494 = vector.extract_strided_slice %483 {offsets = [0, 128], sizes = [16, 128], strides = [1, 1]} : vector<16x384xf32> to vector<16x128xf32>
    %495 = vector.extract_strided_slice %485 {offsets = [0, 128], sizes = [16, 128], strides = [1, 1]} : vector<16x384xf32> to vector<16x128xf32>
    %496 = arith.addf %494, %495 : vector<16x128xf32>
    %497 = arith.negf %496 : vector<16x128xf32>
    %498 = math.exp %497 : vector<16x128xf32>
    %cst_86 = arith.constant 1.000000e+00 : f32
    %499 = vector.broadcast %cst_86 : f32 to vector<16x128xf32>
    %500 = arith.addf %499, %498 : vector<16x128xf32>
    %501 = arith.divf %499, %500 : vector<16x128xf32>
    %502 = vector.extract_strided_slice %483 {offsets = [0, 256], sizes = [16, 128], strides = [1, 1]} : vector<16x384xf32> to vector<16x128xf32>
    %503 = vector.extract_strided_slice %485 {offsets = [0, 256], sizes = [16, 128], strides = [1, 1]} : vector<16x384xf32> to vector<16x128xf32>
    %504 = arith.mulf %493, %503 : vector<16x128xf32>
    %505 = arith.addf %502, %504 : vector<16x128xf32>
    %506 = math.tanh %505 : vector<16x128xf32>
    %cst_87 = arith.constant 1.000000e+00 : f32
    %507 = vector.broadcast %cst_87 : f32 to vector<16x128xf32>
    %508 = arith.subf %507, %501 : vector<16x128xf32>
    %509 = arith.mulf %508, %506 : vector<16x128xf32>
    %510 = arith.mulf %501, %480 : vector<16x128xf32>
    %511 = arith.addf %509, %510 : vector<16x128xf32>
    %cst_88 = arith.constant 0.000000e+00 : f32
    %512 = vector.broadcast %cst_88 : f32 to vector<16x128xf32>
    %513 = arith.maximumf %511, %512 : vector<16x128xf32>
    %514 = arith.truncf %513 : vector<16x128xf32> to vector<16x128xbf16>
    %c0_89 = arith.constant 0 : index
    %c0_90 = arith.constant 0 : index
    %515 = vector.load %arg7[%c0_89, %c0_90] : memref<128x128xbf16, #tpu.memory_space<vmem>>, vector<128x128xbf16>
    %cst_91 = arith.constant dense<0.000000e+00> : vector<16x128xf32>
    %516 = tpu.matmul %514, %515, %cst_91 {dimension_numbers = #tpu.dot_dimension_numbers<[1], [0], [0], [1], [0, 0, 1, 1], [], []>} : vector<16x128xbf16>, vector<128x128xbf16>, vector<16x128xf32> -> vector<16x128xf32>
    %c0_92 = arith.constant 0 : index
    %c0_93 = arith.constant 0 : index
    %517 = vector.load %arg8[%c0_92, %c0_93] : memref<1x128xf32, #tpu.memory_space<vmem>>, vector<1x128xf32>
    %518 = vector.broadcast %517 : vector<1x128xf32> to vector<16x128xf32>
    %519 = arith.addf %516, %518 : vector<16x128xf32>
    %520 = arith.truncf %519 : vector<16x128xf32> to vector<16x128xbf16>
    %c0_94 = arith.constant 0 : index
    %c0_95 = arith.constant 0 : index
    %521 = vector.load %arg9[%c0_94, %c0_95] : memref<128x128xbf16, #tpu.memory_space<vmem>>, vector<128x128xbf16>
    %cst_96 = arith.constant dense<0.000000e+00> : vector<16x128xf32>
    %522 = tpu.matmul %520, %521, %cst_96 {dimension_numbers = #tpu.dot_dimension_numbers<[1], [0], [0], [1], [0, 0, 1, 1], [], []>} : vector<16x128xbf16>, vector<128x128xbf16>, vector<16x128xf32> -> vector<16x128xf32>
    %c0_97 = arith.constant 0 : index
    %c0_98 = arith.constant 0 : index
    %523 = vector.load %arg10[%c0_97, %c0_98] : memref<1x128xf32, #tpu.memory_space<vmem>>, vector<1x128xf32>
    %524 = vector.broadcast %523 : vector<1x128xf32> to vector<16x128xf32>
    %525 = arith.addf %522, %524 : vector<16x128xf32>
    %526 = arith.truncf %525 : vector<16x128xf32> to vector<16x128xbf16>
    %c0_99 = arith.constant 0 : index
    %c0_100 = arith.constant 0 : index
    %527 = vector.load %arg11[%c0_99, %c0_100] : memref<128x128xbf16, #tpu.memory_space<vmem>>, vector<128x128xbf16>
    %cst_101 = arith.constant dense<0.000000e+00> : vector<16x128xf32>
    %528 = tpu.matmul %526, %527, %cst_101 {dimension_numbers = #tpu.dot_dimension_numbers<[1], [0], [0], [1], [0, 0, 1, 1], [], []>} : vector<16x128xbf16>, vector<128x128xbf16>, vector<16x128xf32> -> vector<16x128xf32>
    %c0_102 = arith.constant 0 : index
    %c0_103 = arith.constant 0 : index
    %529 = vector.load %arg12[%c0_102, %c0_103] : memref<1x128xf32, #tpu.memory_space<vmem>>, vector<1x128xf32>
    %530 = vector.broadcast %529 : vector<1x128xf32> to vector<16x128xf32>
    %531 = arith.addf %528, %530 : vector<16x128xf32>
    %c0_104 = arith.constant 0 : index
    %c0_105 = arith.constant 0 : index
    %532 = vector.load %arg13[%c0_104, %c0_105] : memref<16x128xf32, #tpu.memory_space<vmem>>, vector<16x128xf32>
    tpu.vector_store %arg13[%c0_104, %c0_105], %531 {strides = array<i32>} : memref<16x128xf32, #tpu.memory_space<vmem>>, vector<16x128xf32>,
    return
  }
}

</mosaic_0001>

<llo_original>
// kernel: _lambda_.1
$region0: #{_lambda_.1}
  #allocation0 [shape = 'u32[]', space=smem, size = 0x4, offset = 0x4, fixed_abs, tag = 'smem constant byte address 0x4 - core index']
  #allocation1 [shape = 'u32[144,128]{1,0:T(1,128)}', space=vmem, size = 0x12000, scoped, tag = 'internal scratch']
  %s0 = inlined_call_operand.vmem [shape: f32[8,16,128], index: 0, kind: input, shape index: {}]
  %s1 = inlined_call_operand.vmem [shape: bf16[128,384], index: 1, kind: input, shape index: {}]
  %s2 = inlined_call_operand.hbm [shape: bf16[128,384], index: 2, kind: input, shape index: {}]
  %s3 = inlined_call_operand.vmem [shape: f32[1,384], index: 3, kind: input, shape index: {}]
  %s4 = inlined_call_operand.hbm [shape: bf16[128,384], index: 4, kind: input, shape index: {}]
  %s5 = inlined_call_operand.hbm [shape: bf16[128,384], index: 5, kind: input, shape index: {}]
  %s6 = inlined_call_operand.vmem [shape: f32[1,384], index: 6, kind: input, shape index: {}]
  %s7 = inlined_call_operand.hbm [shape: bf16[128,128], index: 7, kind: input, shape index: {}]
  %s8 = inlined_call_operand.vmem [shape: f32[1,128], index: 8, kind: input, shape index: {}]
  %s9 = inlined_call_operand.hbm [shape: bf16[128,128], index: 9, kind: input, shape index: {}]
  %s10 = inlined_call_operand.hbm [shape: f32[1,128], index: 10, kind: input, shape index: {}]
  %s11 = inlined_call_operand.hbm [shape: bf16[128,128], index: 11, kind: input, shape index: {}]
  %s12 = inlined_call_operand.hbm [shape: f32[1,128], index: 12, kind: input, shape index: {}]
  %s13 = inlined_call_operand.vmem [shape: f32[16,128], index: 13, kind: output, shape index: {}]
  %s14 = sld [smem:[#allocation0]]
  $region94: #{_lambda_.1} parent=0
    _
  %s16 = ssub.s32 1, %s14
  %s17 = scalar_select 0, %s16, %s14
  $region1: #{_lambda_.1} parent=0
    #allocation2 [shape = 'u8[98304]{0}', space=vmem, size = 0x18000, scoped, tag = 'input window, operand 2, single buffered']
    #allocation3 [shape = 's32[1]{0}', space=sflag, size = 0x4, scoped, tag = 'scoped memory for _lambda_.1']
    #allocation4 [shape = 'u8[98304]{0}', space=vmem, size = 0x18000, scoped, tag = 'input window, operand 4, single buffered']
    #allocation5 [shape = 's32[1]{0}', space=sflag, size = 0x4, scoped, tag = 'scoped memory for _lambda_.1']
    #allocation6 [shape = 'u8[98304]{0}', space=vmem, size = 0x18000, scoped, tag = 'input window, operand 5, single buffered']
    #allocation7 [shape = 'u8[32768]{0}', space=vmem, size = 0x8000, scoped, tag = 'input window, operand 7, single buffered']
    #allocation8 [shape = 's32[1]{0}', space=sflag, size = 0x4, scoped, tag = 'scoped memory for _lambda_.1']
    #allocation9 [shape = 'u8[32768]{0}', space=vmem, size = 0x8000, scoped, tag = 'input window, operand 9, single buffered']
    #allocation10 [shape = 'u8[512]{0}', space=vmem, size = 0x400, scoped, tag = 'input window, operand 10, single buffered']
    #allocation11 [shape = 's32[1]{0}', space=sflag, size = 0x4, scoped, tag = 'scoped memory for _lambda_.1']
    #allocation12 [shape = 'u8[32768]{0}', space=vmem, size = 0x8000, scoped, tag = 'input window, operand 11, single buffered']
    #allocation13 [shape = 'u8[512]{0}', space=vmem, size = 0x400, scoped, tag = 'input window, operand 12, single buffered']
    #allocation14 [shape = 's32[1]{0}', space=sflag, size = 0x4, scoped, tag = 'scoped memory for _lambda_.1']
    %18 = vsyncpa [#allocation3], 0
    %19 = vsyncpa [#allocation5], 0
    %20 = vsyncpa [#allocation8], 0
    %21 = vsyncpa [#allocation11], 0
    %22 = vsyncpa [#allocation14], 0
    // Predicated region
    $region2: #{_lambda_.1} parent=1 // pred_check
      _
    $region3: #{_lambda_.1} parent=1 // pred_check_branch
      %24 = sbr.rel (0) target = $region5
    $region4: #{_lambda_.1} parent=1 // pred_region
      _
    $region5: #{_lambda_.1} parent=1 // pred_fallthru
      _
    // Predicated region
    $region6: #{_lambda_.1} parent=1 // pred_check
      _
    $region7: #{_lambda_.1} parent=1 // pred_check_branch
      %26 = sbr.rel (0) target = $region9
    $region8: #{_lambda_.1} parent=1 // pred_region
      _
    $region9: #{_lambda_.1} parent=1 // pred_fallthru
      _
    // Predicated region
    $region10: #{_lambda_.1} parent=1 // pred_check
      _
    $region11: #{_lambda_.1} parent=1 // pred_check_branch
      %28 = sbr.rel (0) target = $region13
    $region12: #{_lambda_.1} parent=1 // pred_region
      %s30 = ssub.s32 3072, 3072
      %31 = vsyncadd [#allocation3], %s30
      %s32 = sshll.u32 [#allocation2], 4
      %s33 = int_to_ptr.vmem [resolvable:$true] %s32
      %38 = dma.hbm_to_vmem [thread:$0]  %s2, 3072, %s33, [#allocation3], 192, 192, 12
    $region13: #{_lambda_.1} parent=1 // pred_fallthru
      _
    // Predicated region
    $region14: #{_lambda_.1} parent=1 // pred_check
      _
    $region15: #{_lambda_.1} parent=1 // pred_check_branch
      %40 = sbr.rel (0) target = $region17
    $region16: #{_lambda_.1} parent=1 // pred_region
      _
    $region17: #{_lambda_.1} parent=1 // pred_fallthru
      _
    // Predicated region
    $region18: #{_lambda_.1} parent=1 // pred_check
      _
    $region19: #{_lambda_.1} parent=1 // pred_check_branch
      %42 = sbr.rel (0) target = $region21
    $region20: #{_lambda_.1} parent=1 // pred_region
      %s44 = ssub.s32 3072, 3072
      %45 = vsyncadd [#allocation5], %s44
      %s46 = sshll.u32 [#allocation4], 4
      %s47 = int_to_ptr.vmem [resolvable:$true] %s46
      %52 = dma.hbm_to_vmem [thread:$0]  %s4, 3072, %s47, [#allocation5], 192, 192, 12
    $region21: #{_lambda_.1} parent=1 // pred_fallthru
      _
    // Predicated region
    $region22: #{_lambda_.1} parent=1 // pred_check
      _
    $region23: #{_lambda_.1} parent=1 // pred_check_branch
      %54 = sbr.rel (0) target = $region25
    $region24: #{_lambda_.1} parent=1 // pred_region
      %s56 = ssub.s32 3072, 3072
      %57 = vsyncadd [#allocation5], %s56
      %s58 = sshll.u32 [#allocation6], 4
      %s59 = int_to_ptr.vmem [resolvable:$true] %s58
      %64 = dma.hbm_to_vmem [thread:$0]  %s5, 3072, %s59, [#allocation5], 192, 192, 12
    $region25: #{_lambda_.1} parent=1 // pred_fallthru
      _
    // Predicated region
    $region26: #{_lambda_.1} parent=1 // pred_check
      _
    $region27: #{_lambda_.1} parent=1 // pred_check_branch
      %66 = sbr.rel (0) target = $region29
    $region28: #{_lambda_.1} parent=1 // pred_region
      _
    $region29: #{_lambda_.1} parent=1 // pred_fallthru
      _
    // Predicated region
    $region30: #{_lambda_.1} parent=1 // pred_check
      _
    $region31: #{_lambda_.1} parent=1 // pred_check_branch
      %68 = sbr.rel (0) target = $region33
    $region32: #{_lambda_.1} parent=1 // pred_region
      %s70 = ssub.s32 1024, 1024
      %71 = vsyncadd [#allocation8], %s70
      %s72 = sshll.u32 [#allocation7], 4
      %s73 = int_to_ptr.vmem [resolvable:$true] %s72
      %78 = dma.hbm_to_vmem [thread:$0]  %s7, 1024, %s73, [#allocation8], 64, 64, 4
    $region33: #{_lambda_.1} parent=1 // pred_fallthru
      _
    // Predicated region
    $region34: #{_lambda_.1} parent=1 // pred_check
      _
    $region35: #{_lambda_.1} parent=1 // pred_check_branch
      %80 = sbr.rel (0) target = $region37
    $region36: #{_lambda_.1} parent=1 // pred_region
      _
    $region37: #{_lambda_.1} parent=1 // pred_fallthru
      _
    // Predicated region
    $region38: #{_lambda_.1} parent=1 // pred_check
      _
    $region39: #{_lambda_.1} parent=1 // pred_check_branch
      %82 = sbr.rel (0) target = $region41
    $region40: #{_lambda_.1} parent=1 // pred_region
      %s84 = ssub.s32 1024, 1024
      %85 = vsyncadd [#allocation8], %s84
      %s86 = sshll.u32 [#allocation9], 4
      %s87 = int_to_ptr.vmem [resolvable:$true] %s86
      %92 = dma.hbm_to_vmem [thread:$0]  %s9, 1024, %s87, [#allocation8], 64, 64, 4
    $region41: #{_lambda_.1} parent=1 // pred_fallthru
      _
    // Predicated region
    $region42: #{_lambda_.1} parent=1 // pred_check
      _
    $region43: #{_lambda_.1} parent=1 // pred_check_branch
      %94 = sbr.rel (0) target = $region45
    $region44: #{_lambda_.1} parent=1 // pred_region
      %s96 = ssub.s32 16, 16
      %97 = vsyncadd [#allocation11], %s96
      %s99 = sshll.u32 [#allocation10], 4
      %s100 = int_to_ptr.vmem [resolvable:$true] %s99
      %102 = dma.hbm_to_vmem [thread:$0]  %s10, 16, %s100, [#allocation11]
    $region45: #{_lambda_.1} parent=1 // pred_fallthru
      _
    // Predicated region
    $region46: #{_lambda_.1} parent=1 // pred_check
      _
    $region47: #{_lambda_.1} parent=1 // pred_check_branch
      %104 = sbr.rel (0) target = $region49
    $region48: #{_lambda_.1} parent=1 // pred_region
      %s106 = ssub.s32 1024, 1024
      %107 = vsyncadd [#allocation11], %s106
      %s108 = sshll.u32 [#allocation12], 4
      %s109 = int_to_ptr.vmem [resolvable:$true] %s108
      %114 = dma.hbm_to_vmem [thread:$0]  %s11, 1024, %s109, [#allocation11], 64, 64, 4
    $region49: #{_lambda_.1} parent=1 // pred_fallthru
      _
    // Predicated region
    $region50: #{_lambda_.1} parent=1 // pred_check
      _
    $region51: #{_lambda_.1} parent=1 // pred_check_branch
      %116 = sbr.rel (0) target = $region53
    $region52: #{_lambda_.1} parent=1 // pred_region
      %s118 = ssub.s32 16, 16
      %119 = vsyncadd [#allocation14], %s118
      %s121 = sshll.u32 [#allocation13], 4
      %s122 = int_to_ptr.vmem [resolvable:$true] %s121
      %124 = dma.hbm_to_vmem [thread:$0]  %s12, 16, %s122, [#allocation14]
    $region53: #{_lambda_.1} parent=1 // pred_fallthru
      _
    // Predicated region
    $region54: #{_lambda_.1} parent=1 // pred_check
      _
    $region55: #{_lambda_.1} parent=1 // pred_check_branch
      %126 = sbr.rel (0) target = $region57
    $region56: #{_lambda_.1} parent=1 // pred_region
      %127 = dma.done [#allocation3], 3072
    $region57: #{_lambda_.1} parent=1 // pred_fallthru
      _
    // Predicated region
    $region58: #{_lambda_.1} parent=1 // pred_check
      _
    $region59: #{_lambda_.1} parent=1 // pred_check_branch
      %129 = sbr.rel (0) target = $region61
    $region60: #{_lambda_.1} parent=1 // pred_region
      %130 = dma.done [#allocation5], 3072
    $region61: #{_lambda_.1} parent=1 // pred_fallthru
      _
    // Predicated region
    $region62: #{_lambda_.1} parent=1 // pred_check
      _
    $region63: #{_lambda_.1} parent=1 // pred_check_branch
      %132 = sbr.rel (0) target = $region65
    $region64: #{_lambda_.1} parent=1 // pred_region
      %133 = dma.done [#allocation5], 3072
    $region65: #{_lambda_.1} parent=1 // pred_fallthru
      _
    // Predicated region
    $region66: #{_lambda_.1} parent=1 // pred_check
      _
    $region67: #{_lambda_.1} parent=1 // pred_check_branch
      %135 = sbr.rel (0) target = $region69
    $region68: #{_lambda_.1} parent=1 // pred_region
      %136 = dma.done [#allocation8], 1024
    $region69: #{_lambda_.1} parent=1 // pred_fallthru
      _
    // Predicated region
    $region70: #{_lambda_.1} parent=1 // pred_check
      _
    $region71: #{_lambda_.1} parent=1 // pred_check_branch
      %138 = sbr.rel (0) target = $region73
    $region72: #{_lambda_.1} parent=1 // pred_region
      %139 = dma.done [#allocation8], 1024
    $region73: #{_lambda_.1} parent=1 // pred_fallthru
      _
    // Predicated region
    $region74: #{_lambda_.1} parent=1 // pred_check
      _
    $region75: #{_lambda_.1} parent=1 // pred_check_branch
      %141 = sbr.rel (0) target = $region77
    $region76: #{_lambda_.1} parent=1 // pred_region
      %142 = dma.done [#allocation11], 16
    $region77: #{_lambda_.1} parent=1 // pred_fallthru
      _
    // Predicated region
    $region78: #{_lambda_.1} parent=1 // pred_check
      _
    $region79: #{_lambda_.1} parent=1 // pred_check_branch
      %144 = sbr.rel (0) target = $region81
    $region80: #{_lambda_.1} parent=1 // pred_region
      %145 = dma.done [#allocation11], 1024
    $region81: #{_lambda_.1} parent=1 // pred_fallthru
      _
    // Predicated region
    $region82: #{_lambda_.1} parent=1 // pred_check
      _
    $region83: #{_lambda_.1} parent=1 // pred_check_branch
      %147 = sbr.rel (0) target = $region85
    $region84: #{_lambda_.1} parent=1 // pred_region
      %148 = dma.done [#allocation14], 16
    $region85: #{_lambda_.1} parent=1 // pred_fallthru
      _
    %v150 = vld [vmem:[%s1] sm:$0xff]
    %v151 = vld [vmem:[%s1 + $0x8] sm:$0xf]
    %v152 = vld [vmem:[%s1 + $0xc] sm:$0xff]
    %v153 = vld [vmem:[%s1 + $0x14] sm:$0xf]
    %v154 = vld [vmem:[%s1 + $0x18] sm:$0xff]
    %v155 = vld [vmem:[%s1 + $0x20] sm:$0xf]
    %v156 = vld [vmem:[%s1 + $0x24] sm:$0xff]
    %v157 = vld [vmem:[%s1 + $0x2c] sm:$0xf]
    %v158 = vld [vmem:[%s1 + $0x30] sm:$0xff]
    %v159 = vld [vmem:[%s1 + $0x38] sm:$0xf]
    %v160 = vld [vmem:[%s1 + $0x3c] sm:$0xff]
    %v161 = vld [vmem:[%s1 + $0x44] sm:$0xf]
    %v162 = vld [vmem:[%s1 + $0x48] sm:$0xff]
    %v163 = vld [vmem:[%s1 + $0x50] sm:$0xf]
    %v164 = vld [vmem:[%s1 + $0x54] sm:$0xff]
    %v165 = vld [vmem:[%s1 + $0x5c] sm:$0xf]
    %v166 = vld [vmem:[%s1 + $0x60] sm:$0xff]
    %v167 = vld [vmem:[%s1 + $0x68] sm:$0xf]
    %v168 = vld [vmem:[%s1 + $0x6c] sm:$0xff]
    %v169 = vld [vmem:[%s1 + $0x74] sm:$0xf]
    %v170 = vld [vmem:[%s1 + $0x78] sm:$0xff]
    %v171 = vld [vmem:[%s1 + $0x80] sm:$0xf]
    %v172 = vld [vmem:[%s1 + $0x84] sm:$0xff]
    %v173 = vld [vmem:[%s1 + $0x8c] sm:$0xf]
    %v174 = vld [vmem:[%s1 + $0x90] sm:$0xff]
    %v175 = vld [vmem:[%s1 + $0x98] sm:$0xf]
    %v176 = vld [vmem:[%s1 + $0x9c] sm:$0xff]
    %v177 = vld [vmem:[%s1 + $0xa4] sm:$0xf]
    %v178 = vld [vmem:[%s1 + $0xa8] sm:$0xff]
    %v179 = vld [vmem:[%s1 + $0xb0] sm:$0xf]
    %v180 = vld [vmem:[%s1 + $0xb4] sm:$0xff]
    %v181 = vld [vmem:[%s1 + $0xbc] sm:$0xf]
    %v182 = vld [vmem:[#allocation4] sm:$0xff]
    %v183 = vld [vmem:[#allocation4 + $0x8] sm:$0xf]
    %v184 = vld [vmem:[#allocation4 + $0xc] sm:$0xff]
    %v185 = vld [vmem:[#allocation4 + $0x14] sm:$0xf]
    %v186 = vld [vmem:[#allocation4 + $0x18] sm:$0xff]
    %v187 = vld [vmem:[#allocation4 + $0x20] sm:$0xf]
    %v188 = vld [vmem:[#allocation4 + $0x24] sm:$0xff]
    %v189 = vld [vmem:[#allocation4 + $0x2c] sm:$0xf]
    %v190 = vld [vmem:[#allocation4 + $0x30] sm:$0xff]
    %v191 = vld [vmem:[#allocation4 + $0x38] sm:$0xf]
    %v192 = vld [vmem:[#allocation4 + $0x3c] sm:$0xff]
    %v193 = vld [vmem:[#allocation4 + $0x44] sm:$0xf]
    %v194 = vld [vmem:[#allocation4 + $0x48] sm:$0xff]
    %v195 = vld [vmem:[#allocation4 + $0x50] sm:$0xf]
    %v196 = vld [vmem:[#allocation4 + $0x54] sm:$0xff]
    %v197 = vld [vmem:[#allocation4 + $0x5c] sm:$0xf]
    %v198 = vld [vmem:[#allocation4 + $0x60] sm:$0xff]
    %v199 = vld [vmem:[#allocation4 + $0x68] sm:$0xf]
    %v200 = vld [vmem:[#allocation4 + $0x6c] sm:$0xff]
    %v201 = vld [vmem:[#allocation4 + $0x74] sm:$0xf]
    %v202 = vld [vmem:[#allocation4 + $0x78] sm:$0xff]
    %v203 = vld [vmem:[#allocation4 + $0x80] sm:$0xf]
    %v204 = vld [vmem:[#allocation4 + $0x84] sm:$0xff]
    %v205 = vld [vmem:[#allocation4 + $0x8c] sm:$0xf]
    %v206 = vld [vmem:[#allocation4 + $0x90] sm:$0xff]
    %v207 = vld [vmem:[#allocation4 + $0x98] sm:$0xf]
    %v208 = vld [vmem:[#allocation4 + $0x9c] sm:$0xff]
    %v209 = vld [vmem:[#allocation4 + $0xa4] sm:$0xf]
    %v210 = vld [vmem:[#allocation4 + $0xa8] sm:$0xff]
    %v211 = vld [vmem:[#allocation4 + $0xb0] sm:$0xf]
    %v212 = vld [vmem:[#allocation4 + $0xb4] sm:$0xff]
    %v213 = vld [vmem:[#allocation4 + $0xbc] sm:$0xf]
    %v214 = vld [vmem:[#allocation2] sm:$0xff]
    %v215 = vld [vmem:[#allocation2 + $0x8] sm:$0xf]
    %v216 = vld [vmem:[#allocation2 + $0xc] sm:$0xff]
    %v217 = vld [vmem:[#allocation2 + $0x14] sm:$0xf]
    %v218 = vld [vmem:[#allocation2 + $0x18] sm:$0xff]
    %v219 = vld [vmem:[#allocation2 + $0x20] sm:$0xf]
    %v220 = vld [vmem:[#allocation2 + $0x24] sm:$0xff]
    %v221 = vld [vmem:[#allocation2 + $0x2c] sm:$0xf]
    %v222 = vld [vmem:[#allocation2 + $0x30] sm:$0xff]
    %v223 = vld [vmem:[#allocation2 + $0x38] sm:$0xf]
    %v224 = vld [vmem:[#allocation2 + $0x3c] sm:$0xff]
    %v225 = vld [vmem:[#allocation2 + $0x44] sm:$0xf]
    %v226 = vld [vmem:[#allocation2 + $0x48] sm:$0xff]
    %v227 = vld [vmem:[#allocation2 + $0x50] sm:$0xf]
    %v228 = vld [vmem:[#allocation2 + $0x54] sm:$0xff]
    %v229 = vld [vmem:[#allocation2 + $0x5c] sm:$0xf]
    %v230 = vld [vmem:[#allocation2 + $0x60] sm:$0xff]
    %v231 = vld [vmem:[#allocation2 + $0x68] sm:$0xf]
    %v232 = vld [vmem:[#allocation2 + $0x6c] sm:$0xff]
    %v233 = vld [vmem:[#allocation2 + $0x74] sm:$0xf]
    %v234 = vld [vmem:[#allocation2 + $0x78] sm:$0xff]
    %v235 = vld [vmem:[#allocation2 + $0x80] sm:$0xf]
    %v236 = vld [vmem:[#allocation2 + $0x84] sm:$0xff]
    %v237 = vld [vmem:[#allocation2 + $0x8c] sm:$0xf]
    %v238 = vld [vmem:[#allocation2 + $0x90] sm:$0xff]
    %v239 = vld [vmem:[#allocation2 + $0x98] sm:$0xf]
    %v240 = vld [vmem:[#allocation2 + $0x9c] sm:$0xff]
    %v241 = vld [vmem:[#allocation2 + $0xa4] sm:$0xf]
    %v242 = vld [vmem:[#allocation2 + $0xa8] sm:$0xff]
    %v243 = vld [vmem:[#allocation2 + $0xb0] sm:$0xf]
    %v244 = vld [vmem:[#allocation2 + $0xb4] sm:$0xff]
    %v245 = vld [vmem:[#allocation2 + $0xbc] sm:$0xf]
    %v246 = vld [vmem:[#allocation6] sm:$0xff]
    %v247 = vld [vmem:[#allocation6 + $0x8] sm:$0xf]
    %v248 = vld [vmem:[#allocation6 + $0xc] sm:$0xff]
    %v249 = vld [vmem:[#allocation6 + $0x14] sm:$0xf]
    %v250 = vld [vmem:[#allocation6 + $0x18] sm:$0xff]
    %v251 = vld [vmem:[#allocation6 + $0x20] sm:$0xf]
    %v252 = vld [vmem:[#allocation6 + $0x24] sm:$0xff]
    %v253 = vld [vmem:[#allocation6 + $0x2c] sm:$0xf]
    %v254 = vld [vmem:[#allocation6 + $0x30] sm:$0xff]
    %v255 = vld [vmem:[#allocation6 + $0x38] sm:$0xf]
    %v256 = vld [vmem:[#allocation6 + $0x3c] sm:$0xff]
    %v257 = vld [vmem:[#allocation6 + $0x44] sm:$0xf]
    %v258 = vld [vmem:[#allocation6 + $0x48] sm:$0xff]
    %v259 = vld [vmem:[#allocation6 + $0x50] sm:$0xf]
    %v260 = vld [vmem:[#allocation6 + $0x54] sm:$0xff]
    %v261 = vld [vmem:[#allocation6 + $0x5c] sm:$0xf]
    %v262 = vld [vmem:[#allocation6 + $0x60] sm:$0xff]
    %v263 = vld [vmem:[#allocation6 + $0x68] sm:$0xf]
    %v264 = vld [vmem:[#allocation6 + $0x6c] sm:$0xff]
    %v265 = vld [vmem:[#allocation6 + $0x74] sm:$0xf]
    %v266 = vld [vmem:[#allocation6 + $0x78] sm:$0xff]
    %v267 = vld [vmem:[#allocation6 + $0x80] sm:$0xf]
    %v268 = vld [vmem:[#allocation6 + $0x84] sm:$0xff]
    %v269 = vld [vmem:[#allocation6 + $0x8c] sm:$0xf]
    %v270 = vld [vmem:[#allocation6 + $0x90] sm:$0xff]
    %v271 = vld [vmem:[#allocation6 + $0x98] sm:$0xf]
    %v272 = vld [vmem:[#allocation6 + $0x9c] sm:$0xff]
    %v273 = vld [vmem:[#allocation6 + $0xa4] sm:$0xf]
    %v274 = vld [vmem:[#allocation6 + $0xa8] sm:$0xff]
    %v275 = vld [vmem:[#allocation6 + $0xb0] sm:$0xf]
    %v276 = vld [vmem:[#allocation6 + $0xb4] sm:$0xff]
    %v277 = vld [vmem:[#allocation6 + $0xbc] sm:$0xf]
    %v278 = vld [vmem:[%s3] sm:$0x7]
    %v279 = vld [vmem:[%s6] sm:$0x7]
    %v281 = vlaneseq
    %v282 = vshrl.u32 %v281, 7
    %v283 = vsub.s32 0, %v282
    %v284 = vrot.slane %v279, %v283
    %v285 = vlaneseq
    %v286 = vshrl.u32 %v285, 7
    %v287 = vsub.s32 1, %v286
    %v288 = vrot.slane %v279, %v287
    %v289 = vlaneseq
    %v290 = vshrl.u32 %v289, 7
    %v291 = vsub.s32 2, %v290
    %v292 = vrot.slane %v279, %v291
    %v296 = vld [vmem:[%s0] sm:$0xff]
    %v297 = vld [vmem:[%s0 + $0x8] sm:$0xff]
    %v298 = vld [vmem:[%s0 + $0x10] sm:$0xff]
    %v299 = vld [vmem:[%s0 + $0x18] sm:$0xff]
    %v300 = vld [vmem:[%s0 + $0x20] sm:$0xff]
    %v301 = vld [vmem:[%s0 + $0x28] sm:$0xff]
    %v302 = vld [vmem:[%s0 + $0x30] sm:$0xff]
    %v303 = vld [vmem:[%s0 + $0x38] sm:$0xff]
    %v304 = vld [vmem:[%s0 + $0x40] sm:$0xff]
    %v305 = vld [vmem:[%s0 + $0x48] sm:$0xff]
    %v306 = vld [vmem:[%s0 + $0x50] sm:$0xff]
    %v307 = vld [vmem:[%s0 + $0x58] sm:$0xff]
    %v308 = vld [vmem:[%s0 + $0x60] sm:$0xff]
    %v309 = vld [vmem:[%s0 + $0x68] sm:$0xff]
    %v310 = vld [vmem:[%s0 + $0x70] sm:$0xff]
    %v311 = vld [vmem:[%s0 + $0x78] sm:$0xff]
    %v312 = vpack.c.bf16 %v297, %v296
    %v313 = vpack.c.bf16 %v299, %v298
    %v314 = vpack.c.bf16 %v301, %v300
    %v315 = vpack.c.bf16 %v303, %v302
    %v316 = vpack.c.bf16 %v305, %v304
    %v317 = vpack.c.bf16 %v307, %v306
    %v318 = vpack.c.bf16 %v309, %v308
    %v319 = vpack.c.bf16 %v311, %v310
    %v352 = vunpack.c.l.b16 %v150
    %v353 = vunpack.c.h.b16 %v150
    %v354 = vunpack.c.l.b16 %v151
    %v355 = vunpack.c.l.b16 %v152
    %v356 = vunpack.c.h.b16 %v152
    %v357 = vunpack.c.l.b16 %v153
    %v358 = vunpack.c.l.b16 %v154
    %v359 = vunpack.c.h.b16 %v154
    %v360 = vunpack.c.l.b16 %v155
    %v361 = vunpack.c.l.b16 %v156
    %v362 = vunpack.c.h.b16 %v156
    %v363 = vunpack.c.l.b16 %v157
    %v364 = vunpack.c.l.b16 %v158
    %v365 = vunpack.c.h.b16 %v158
    %v366 = vunpack.c.l.b16 %v159
    %v367 = vunpack.c.l.b16 %v160
    %v368 = vunpack.c.h.b16 %v160
    %v369 = vunpack.c.l.b16 %v161
    %v370 = vunpack.c.l.b16 %v162
    %v371 = vunpack.c.h.b16 %v162
    %v372 = vunpack.c.l.b16 %v163
    %v373 = vunpack.c.l.b16 %v164
    %v374 = vunpack.c.h.b16 %v164
    %v375 = vunpack.c.l.b16 %v165
    %v376 = vunpack.c.l.b16 %v166
    %v377 = vunpack.c.h.b16 %v166
    %v378 = vunpack.c.l.b16 %v167
    %v379 = vunpack.c.l.b16 %v168
    %v380 = vunpack.c.h.b16 %v168
    %v381 = vunpack.c.l.b16 %v169
    %v382 = vunpack.c.l.b16 %v170
    %v383 = vunpack.c.h.b16 %v170
    %v384 = vunpack.c.l.b16 %v171
    %v385 = vunpack.c.l.b16 %v172
    %v386 = vunpack.c.h.b16 %v172
    %v387 = vunpack.c.l.b16 %v173
    %v388 = vunpack.c.l.b16 %v174
    %v389 = vunpack.c.h.b16 %v174
    %v390 = vunpack.c.l.b16 %v175
    %v391 = vunpack.c.l.b16 %v176
    %v392 = vunpack.c.h.b16 %v176
    %v393 = vunpack.c.l.b16 %v177
    %v394 = vunpack.c.l.b16 %v178
    %v395 = vunpack.c.h.b16 %v178
    %v396 = vunpack.c.l.b16 %v179
    %v397 = vunpack.c.l.b16 %v180
    %v398 = vunpack.c.h.b16 %v180
    %v399 = vunpack.c.l.b16 %v181
    %v400 = vpack.c.b16 %v355, %v352
    %v401 = vpack.c.b16 %v356, %v353
    %v402 = vpack.c.b16 %v357, %v354
    %v403 = vpack.c.b16 %v361, %v358
    %v404 = vpack.c.b16 %v362, %v359
    %v405 = vpack.c.b16 %v363, %v360
    %v406 = vpack.c.b16 %v367, %v364
    %v407 = vpack.c.b16 %v368, %v365
    %v408 = vpack.c.b16 %v369, %v366
    %v409 = vpack.c.b16 %v373, %v370
    %v410 = vpack.c.b16 %v374, %v371
    %v411 = vpack.c.b16 %v375, %v372
    %v412 = vpack.c.b16 %v379, %v376
    %v413 = vpack.c.b16 %v380, %v377
    %v414 = vpack.c.b16 %v381, %v378
    %v415 = vpack.c.b16 %v385, %v382
    %v416 = vpack.c.b16 %v386, %v383
    %v417 = vpack.c.b16 %v387, %v384
    %v418 = vpack.c.b16 %v391, %v388
    %v419 = vpack.c.b16 %v392, %v389
    %v420 = vpack.c.b16 %v393, %v390
    %v421 = vpack.c.b16 %v397, %v394
    %v422 = vpack.c.b16 %v398, %v395
    %v423 = vpack.c.b16 %v399, %v396
    %448 = vmatprep.subr.bf16.mxu0 %v401
    %449 = vmatpush1.bf16.msra.mxu0 %v400
    %450 = vmatprep.subr.bf16.mxu0 %v404
    %451 = vmatpush1.bf16.msra.mxu0 %v403
    %452 = vmatprep.subr.bf16.mxu0 %v407
    %453 = vmatpush1.bf16.msra.mxu0 %v406
    %454 = vmatprep.subr.bf16.mxu0 %v410
    %455 = vmatpush1.bf16.msra.mxu0 %v409
    %456 = vmatprep.subr.bf16.mxu0 %v413
    %457 = vmatpush1.bf16.msra.mxu0 %v412
    %458 = vmatprep.subr.bf16.mxu0 %v416
    %459 = vmatpush1.bf16.msra.mxu0 %v415
    %460 = vmatprep.subr.bf16.mxu0 %v419
    %461 = vmatpush1.bf16.msra.mxu0 %v418
    %462 = vmatprep.subr.bf16.mxu0 %v422
    %463 = vmatpush1.bf16.msra.mxu0 %v421
    %464 = vmatprep.subr.bf16.mxu0 0
    %465 = vmatpush1.bf16.msra.mxu0 0
    %466 = vmatprep.subr.bf16.mxu0 0
    %467 = vmatpush1.bf16.msra.mxu0 0
    %468 = vmatprep.subr.bf16.mxu0 0
    %469 = vmatpush1.bf16.msra.mxu0 0
    %470 = vmatprep.subr.bf16.mxu0 0
    %471 = vmatpush1.bf16.msra.mxu0 0
    %472 = vmatprep.subr.bf16.mxu0 0
    %473 = vmatpush1.bf16.msra.mxu0 0
    %474 = vmatprep.subr.bf16.mxu0 0
    %475 = vmatpush1.bf16.msra.mxu0 0
    %476 = vmatprep.subr.bf16.mxu0 0
    %477 = vmatpush1.bf16.msra.mxu0 0
    %478 = vmatprep.subr.bf16.mxu0 0
    %479 = vmatpush1.bf16.msra.mxu0 0
    %480 = vmatprep.mubr.bf16.mxu0 0
    %481 = vmatmul.mubr.bf16.gmra.mrb[0].mxu0 %v312
    %v482 = vpop.f32.mrb[0].mxu0
    %v483 = vadd.f32 0.0, %v482
    %v484 = vpop.f32.mrb[0].mxu0
    %v485 = vadd.f32 0.0, %v484
    %v486 = vpop.f32.mrb[0].mxu0
    %v487 = vadd.f32 0.0, %v486
    %v488 = vpop.f32.mrb[0].mxu0
    %v489 = vadd.f32 0.0, %v488
    %490 = vmatprep.mubr.bf16.mxu0 0
    %491 = vmatmul.mubr.bf16.gmra.mrb[0].mxu0 %v313
    %v492 = vpop.f32.mrb[0].mxu0
    %v493 = vadd.f32 0.0, %v492
    %v494 = vpop.f32.mrb[0].mxu0
    %v495 = vadd.f32 0.0, %v494
    %v496 = vpop.f32.mrb[0].mxu0
    %v497 = vadd.f32 0.0, %v496
    %v498 = vpop.f32.mrb[0].mxu0
    %v499 = vadd.f32 0.0, %v498
    %500 = vmatprep.mubr.bf16.mxu0 0
    %501 = vmatmul.mubr.bf16.gmra.mrb[0].mxu0 %v314
    %v502 = vpop.f32.mrb[0].mxu0
    %v503 = vadd.f32 0.0, %v502
    %v504 = vpop.f32.mrb[0].mxu0
    %v505 = vadd.f32 0.0, %v504
    %v506 = vpop.f32.mrb[0].mxu0
    %v507 = vadd.f32 0.0, %v506
    %v508 = vpop.f32.mrb[0].mxu0
    %v509 = vadd.f32 0.0, %v508
    %510 = vmatprep.mubr.bf16.mxu0 0
    %511 = vmatmul.mubr.bf16.gmra.mrb[0].mxu0 %v315
    %v512 = vpop.f32.mrb[0].mxu0
    %v513 = vadd.f32 0.0, %v512
    %v514 = vpop.f32.mrb[0].mxu0
    %v515 = vadd.f32 0.0, %v514
    %v516 = vpop.f32.mrb[0].mxu0
    %v517 = vadd.f32 0.0, %v516
    %v518 = vpop.f32.mrb[0].mxu0
    %v519 = vadd.f32 0.0, %v518
    %520 = vmatprep.mubr.bf16.mxu0 0
    %521 = vmatmul.mubr.bf16.gmra.mrb[0].mxu0 %v316
    %v522 = vpop.f32.mrb[0].mxu0
    %v523 = vadd.f32 0.0, %v522
    %v524 = vpop.f32.mrb[0].mxu0
    %v525 = vadd.f32 0.0, %v524
    %v526 = vpop.f32.mrb[0].mxu0
    %v527 = vadd.f32 0.0, %v526
    %v528 = vpop.f32.mrb[0].mxu0
    %v529 = vadd.f32 0.0, %v528
    %530 = vmatprep.mubr.bf16.mxu0 0
    %531 = vmatmul.mubr.bf16.gmra.mrb[0].mxu0 %v317
    %v532 = vpop.f32.mrb[0].mxu0
    %v533 = vadd.f32 0.0, %v532
    %v534 = vpop.f32.mrb[0].mxu0
    %v535 = vadd.f32 0.0, %v534
    %v536 = vpop.f32.mrb[0].mxu0
    %v537 = vadd.f32 0.0, %v536
    %v538 = vpop.f32.mrb[0].mxu0
    %v539 = vadd.f32 0.0, %v538
    %540 = vmatprep.mubr.bf16.mxu0 0
    %541 = vmatmul.mubr.bf16.gmra.mrb[0].mxu0 %v318
    %v542 = vpop.f32.mrb[0].mxu0
    %v543 = vadd.f32 0.0, %v542
    %v544 = vpop.f32.mrb[0].mxu0
    %v545 = vadd.f32 0.0, %v544
    %v546 = vpop.f32.mrb[0].mxu0
    %v547 = vadd.f32 0.0, %v546
    %v548 = vpop.f32.mrb[0].mxu0
    %v549 = vadd.f32 0.0, %v548
    %550 = vmatprep.mubr.bf16.mxu0 0
    %551 = vmatmul.mubr.bf16.gmra.mrb[0].mxu0 %v319
    %v552 = vpop.f32.mrb[0].mxu0
    %v553 = vadd.f32 0.0, %v552
    %v554 = vpop.f32.mrb[0].mxu0
    %v555 = vadd.f32 0.0, %v554
    %v556 = vpop.f32.mrb[0].mxu0
    %v557 = vadd.f32 0.0, %v556
    %v558 = vpop.f32.mrb[0].mxu0
    %v559 = vadd.f32 0.0, %v558
    %560 = vdwg.mxu0
    %561 = vmatprep.subr.bf16.mxu0 0
    %562 = vmatpush1.bf16.msra.mxu0 %v402
    %563 = vmatprep.subr.bf16.mxu0 0
    %564 = vmatpush1.bf16.msra.mxu0 %v405
    %565 = vmatprep.subr.bf16.mxu0 0
    %566 = vmatpush1.bf16.msra.mxu0 %v408
    %567 = vmatprep.subr.bf16.mxu0 0
    %568 = vmatpush1.bf16.msra.mxu0 %v411
    %569 = vmatprep.subr.bf16.mxu0 0
    %570 = vmatpush1.bf16.msra.mxu0 %v414
    %571 = vmatprep.subr.bf16.mxu0 0
    %572 = vmatpush1.bf16.msra.mxu0 %v417
    %573 = vmatprep.subr.bf16.mxu0 0
    %574 = vmatpush1.bf16.msra.mxu0 %v420
    %575 = vmatprep.subr.bf16.mxu0 0
    %576 = vmatpush1.bf16.msra.mxu0 %v423
    %577 = vmatprep.subr.bf16.mxu0 0
    %578 = vmatpush1.bf16.msra.mxu0 0
    %579 = vmatprep.subr.bf16.mxu0 0
    %580 = vmatpush1.bf16.msra.mxu0 0
    %581 = vmatprep.subr.bf16.mxu0 0
    %582 = vmatpush1.bf16.msra.mxu0 0
    %583 = vmatprep.subr.bf16.mxu0 0
    %584 = vmatpush1.bf16.msra.mxu0 0
    %585 = vmatprep.subr.bf16.mxu0 0
    %586 = vmatpush1.bf16.msra.mxu0 0
    %587 = vmatprep.subr.bf16.mxu0 0
    %588 = vmatpush1.bf16.msra.mxu0 0
    %589 = vmatprep.subr.bf16.mxu0 0
    %590 = vmatpush1.bf16.msra.mxu0 0
    %591 = vmatprep.subr.bf16.mxu0 0
    %592 = vmatpush1.bf16.msra.mxu0 0
    %593 = vmatprep.mubr.bf16.mxu0 0
    %594 = vmatmul.mubr.bf16.gmra.mrb[0].mxu0 %v312
    %v595 = vpop.f32.mrb[0].mxu0
    %v596 = vadd.f32 0.0, %v595
    %v597 = vpop.f32.mrb[0].mxu0
    %v598 = vpop.f32.mrb[0].mxu0
    %v599 = vadd.f32 0.0, %v598
    %v600 = vpop.f32.mrb[0].mxu0
    %601 = vmatprep.mubr.bf16.mxu0 0
    %602 = vmatmul.mubr.bf16.gmra.mrb[0].mxu0 %v313
    %v603 = vpop.f32.mrb[0].mxu0
    %v604 = vadd.f32 0.0, %v603
    %v605 = vpop.f32.mrb[0].mxu0
    %v606 = vpop.f32.mrb[0].mxu0
    %v607 = vadd.f32 0.0, %v606
    %v608 = vpop.f32.mrb[0].mxu0
    %609 = vmatprep.mubr.bf16.mxu0 0
    %610 = vmatmul.mubr.bf16.gmra.mrb[0].mxu0 %v314
    %v611 = vpop.f32.mrb[0].mxu0
    %v612 = vadd.f32 0.0, %v611
    %v613 = vpop.f32.mrb[0].mxu0
    %v614 = vpop.f32.mrb[0].mxu0
    %v615 = vadd.f32 0.0, %v614
    %v616 = vpop.f32.mrb[0].mxu0
    %617 = vmatprep.mubr.bf16.mxu0 0
    %618 = vmatmul.mubr.bf16.gmra.mrb[0].mxu0 %v315
    %v619 = vpop.f32.mrb[0].mxu0
    %v620 = vadd.f32 0.0, %v619
    %v621 = vpop.f32.mrb[0].mxu0
    %v622 = vpop.f32.mrb[0].mxu0
    %v623 = vadd.f32 0.0, %v622
    %v624 = vpop.f32.mrb[0].mxu0
    %625 = vmatprep.mubr.bf16.mxu0 0
    %626 = vmatmul.mubr.bf16.gmra.mrb[0].mxu0 %v316
    %v627 = vpop.f32.mrb[0].mxu0
    %v628 = vadd.f32 0.0, %v627
    %v629 = vpop.f32.mrb[0].mxu0
    %v630 = vpop.f32.mrb[0].mxu0
    %v631 = vadd.f32 0.0, %v630
    %v632 = vpop.f32.mrb[0].mxu0
    %633 = vmatprep.mubr.bf16.mxu0 0
    %634 = vmatmul.mubr.bf16.gmra.mrb[0].mxu0 %v317
    %v635 = vpop.f32.mrb[0].mxu0
    %v636 = vadd.f32 0.0, %v635
    %v637 = vpop.f32.mrb[0].mxu0
    %v638 = vpop.f32.mrb[0].mxu0
    %v639 = vadd.f32 0.0, %v638
    %v640 = vpop.f32.mrb[0].mxu0
    %641 = vmatprep.mubr.bf16.mxu0 0
    %642 = vmatmul.mubr.bf16.gmra.mrb[0].mxu0 %v318
    %v643 = vpop.f32.mrb[0].mxu0
    %v644 = vadd.f32 0.0, %v643
    %v645 = vpop.f32.mrb[0].mxu0
    %v646 = vpop.f32.mrb[0].mxu0
    %v647 = vadd.f32 0.0, %v646
    %v648 = vpop.f32.mrb[0].mxu0
    %649 = vmatprep.mubr.bf16.mxu0 0
    %650 = vmatmul.mubr.bf16.gmra.mrb[0].mxu0 %v319
    %v651 = vpop.f32.mrb[0].mxu0
    %v652 = vadd.f32 0.0, %v651
    %v653 = vpop.f32.mrb[0].mxu0
    %v654 = vpop.f32.mrb[0].mxu0
    %v655 = vadd.f32 0.0, %v654
    %v656 = vpop.f32.mrb[0].mxu0
    %657 = vdwg.mxu0
    %v659 = vlaneseq
    %v660 = vshrl.u32 %v659, 7
    %v661 = vsub.s32 0, %v660
    %v662 = vrot.slane %v278, %v661
    %v663 = vlaneseq
    %v664 = vshrl.u32 %v663, 7
    %v665 = vsub.s32 1, %v664
    %v666 = vrot.slane %v278, %v665
    %v667 = vlaneseq
    %v668 = vshrl.u32 %v667, 7
    %v669 = vsub.s32 2, %v668
    %v670 = vrot.slane %v278, %v669
    %v674 = vadd.f32 %v483, %v662
    %v675 = vadd.f32 %v485, %v666
    %v676 = vadd.f32 %v596, %v670
    %v677 = vadd.f32 %v487, %v662
    %v678 = vadd.f32 %v489, %v666
    %v679 = vadd.f32 %v599, %v670
    %v680 = vadd.f32 %v493, %v662
    %v681 = vadd.f32 %v495, %v666
    %v682 = vadd.f32 %v604, %v670
    %v683 = vadd.f32 %v497, %v662
    %v684 = vadd.f32 %v499, %v666
    %v685 = vadd.f32 %v607, %v670
    %v686 = vadd.f32 %v503, %v662
    %v687 = vadd.f32 %v505, %v666
    %v688 = vadd.f32 %v612, %v670
    %v689 = vadd.f32 %v507, %v662
    %v690 = vadd.f32 %v509, %v666
    %v691 = vadd.f32 %v615, %v670
    %v692 = vadd.f32 %v513, %v662
    %v693 = vadd.f32 %v515, %v666
    %v694 = vadd.f32 %v620, %v670
    %v695 = vadd.f32 %v517, %v662
    %v696 = vadd.f32 %v519, %v666
    %v697 = vadd.f32 %v623, %v670
    %v698 = vadd.f32 %v523, %v662
    %v699 = vadd.f32 %v525, %v666
    %v700 = vadd.f32 %v628, %v670
    %v701 = vadd.f32 %v527, %v662
    %v702 = vadd.f32 %v529, %v666
    %v703 = vadd.f32 %v631, %v670
    %v704 = vadd.f32 %v533, %v662
    %v705 = vadd.f32 %v535, %v666
    %v706 = vadd.f32 %v636, %v670
    %v707 = vadd.f32 %v537, %v662
    %v708 = vadd.f32 %v539, %v666
    %v709 = vadd.f32 %v639, %v670
    %v710 = vadd.f32 %v543, %v662
    %v711 = vadd.f32 %v545, %v666
    %v712 = vadd.f32 %v644, %v670
    %v713 = vadd.f32 %v547, %v662
    %v714 = vadd.f32 %v549, %v666
    %v715 = vadd.f32 %v647, %v670
    %v716 = vadd.f32 %v553, %v662
    %v717 = vadd.f32 %v555, %v666
    %v718 = vadd.f32 %v652, %v670
    %v719 = vadd.f32 %v557, %v662
    %v720 = vadd.f32 %v559, %v666
    %v721 = vadd.f32 %v655, %v670
    %v722 = vlaneseq
    %v723 = vand.u32 %v722, 127
    %vm724 = vcmp.eq.s32.totalorder %v723, 32
    %v725 = vsel %vm724, 1.0, 0.0
    %v726 = vpack.c.bf16 %v725, %v725
    %v759 = vunpack.c.l.b16 %v214
    %v760 = vunpack.c.h.b16 %v214
    %v761 = vunpack.c.l.b16 %v215
    %v762 = vunpack.c.l.b16 %v216
    %v763 = vunpack.c.h.b16 %v216
    %v764 = vunpack.c.l.b16 %v217
    %v765 = vunpack.c.l.b16 %v218
    %v766 = vunpack.c.h.b16 %v218
    %v767 = vunpack.c.l.b16 %v219
    %v768 = vunpack.c.l.b16 %v220
    %v769 = vunpack.c.h.b16 %v220
    %v770 = vunpack.c.l.b16 %v221
    %v771 = vunpack.c.l.b16 %v222
    %v772 = vunpack.c.h.b16 %v222
    %v773 = vunpack.c.l.b16 %v223
    %v774 = vunpack.c.l.b16 %v224
    %v775 = vunpack.c.h.b16 %v224
    %v776 = vunpack.c.l.b16 %v225
    %v777 = vunpack.c.l.b16 %v226
    %v778 = vunpack.c.h.b16 %v226
    %v779 = vunpack.c.l.b16 %v227
    %v780 = vunpack.c.l.b16 %v228
    %v781 = vunpack.c.h.b16 %v228
    %v782 = vunpack.c.l.b16 %v229
    %v783 = vunpack.c.l.b16 %v230
    %v784 = vunpack.c.h.b16 %v230
    %v785 = vunpack.c.l.b16 %v231
    %v786 = vunpack.c.l.b16 %v232
    %v787 = vunpack.c.h.b16 %v232
    %v788 = vunpack.c.l.b16 %v233
    %v789 = vunpack.c.l.b16 %v234
    %v790 = vunpack.c.h.b16 %v234
    %v791 = vunpack.c.l.b16 %v235
    %v792 = vunpack.c.l.b16 %v236
    %v793 = vunpack.c.h.b16 %v236
    %v794 = vunpack.c.l.b16 %v237
    %v795 = vunpack.c.l.b16 %v238
    %v796 = vunpack.c.h.b16 %v238
    %v797 = vunpack.c.l.b16 %v239
    %v798 = vunpack.c.l.b16 %v240
    %v799 = vunpack.c.h.b16 %v240
    %v800 = vunpack.c.l.b16 %v241
    %v801 = vunpack.c.l.b16 %v242
    %v802 = vunpack.c.h.b16 %v242
    %v803 = vunpack.c.l.b16 %v243
    %v804 = vunpack.c.l.b16 %v244
    %v805 = vunpack.c.h.b16 %v244
    %v806 = vunpack.c.l.b16 %v245
    %v807 = vpack.c.b16 %v762, %v759
    %v808 = vpack.c.b16 %v763, %v760
    %v809 = vpack.c.b16 %v764, %v761
    %v810 = vpack.c.b16 %v768, %v765
    %v811 = vpack.c.b16 %v769, %v766
    %v812 = vpack.c.b16 %v770, %v767
    %v813 = vpack.c.b16 %v774, %v771
    %v814 = vpack.c.b16 %v775, %v772
    %v815 = vpack.c.b16 %v776, %v773
    %v816 = vpack.c.b16 %v780, %v777
    %v817 = vpack.c.b16 %v781, %v778
    %v818 = vpack.c.b16 %v782, %v779
    %v819 = vpack.c.b16 %v786, %v783
    %v820 = vpack.c.b16 %v787, %v784
    %v821 = vpack.c.b16 %v788, %v785
    %v822 = vpack.c.b16 %v792, %v789
    %v823 = vpack.c.b16 %v793, %v790
    %v824 = vpack.c.b16 %v794, %v791
    %v825 = vpack.c.b16 %v798, %v795
    %v826 = vpack.c.b16 %v799, %v796
    %v827 = vpack.c.b16 %v800, %v797
    %v828 = vpack.c.b16 %v804, %v801
    %v829 = vpack.c.b16 %v805, %v802
    %v830 = vpack.c.b16 %v806, %v803
    %855 = vmatprep.subr.bf16.mxu0 %v808
    %856 = vmatpush1.bf16.msra.mxu0 %v807
    %857 = vmatprep.subr.bf16.mxu0 %v811
    %858 = vmatpush1.bf16.msra.mxu0 %v810
    %859 = vmatprep.subr.bf16.mxu0 %v814
    %860 = vmatpush1.bf16.msra.mxu0 %v813
    %861 = vmatprep.subr.bf16.mxu0 %v817
    %862 = vmatpush1.bf16.msra.mxu0 %v816
    %863 = vmatprep.subr.bf16.mxu0 %v820
    %864 = vmatpush1.bf16.msra.mxu0 %v819
    %865 = vmatprep.subr.bf16.mxu0 %v823
    %866 = vmatpush1.bf16.msra.mxu0 %v822
    %867 = vmatprep.subr.bf16.mxu0 %v826
    %868 = vmatpush1.bf16.msra.mxu0 %v825
    %869 = vmatprep.subr.bf16.mxu0 %v829
    %870 = vmatpush1.bf16.msra.mxu0 %v828
    %871 = vmatprep.subr.bf16.mxu0 0
    %872 = vmatpush1.bf16.msra.mxu0 0
    %873 = vmatprep.subr.bf16.mxu0 0
    %874 = vmatpush1.bf16.msra.mxu0 0
    %875 = vmatprep.subr.bf16.mxu0 0
    %876 = vmatpush1.bf16.msra.mxu0 0
    %877 = vmatprep.subr.bf16.mxu0 0
    %878 = vmatpush1.bf16.msra.mxu0 0
    %879 = vmatprep.subr.bf16.mxu0 0
    %880 = vmatpush1.bf16.msra.mxu0 0
    %881 = vmatprep.subr.bf16.mxu0 0
    %882 = vmatpush1.bf16.msra.mxu0 0
    %883 = vmatprep.subr.bf16.mxu0 0
    %884 = vmatpush1.bf16.msra.mxu0 0
    %885 = vmatprep.subr.bf16.mxu0 0
    %886 = vmatpush1.bf16.msra.mxu0 0
    %887 = vmatprep.mubr.bf16.mxu0 0
    %888 = vmatmul.mubr.bf16.gmra.mrb[0].mxu0 %v726
    %v889 = vpop.f32.mrb[0].mxu0
    %v890 = vadd.f32 0.0, %v889
    %v891 = vpop.f32.mrb[0].mxu0
    %v892 = vadd.f32 0.0, %v891
    %v893 = vpop.f32.mrb[0].mxu0
    %v894 = vadd.f32 0.0, %v893
    %v895 = vpop.f32.mrb[0].mxu0
    %v896 = vadd.f32 0.0, %v895
    %897 = vdwg.mxu0
    %898 = vmatprep.subr.bf16.mxu0 0
    %899 = vmatpush1.bf16.msra.mxu0 %v809
    %900 = vmatprep.subr.bf16.mxu0 0
    %901 = vmatpush1.bf16.msra.mxu0 %v812
    %902 = vmatprep.subr.bf16.mxu0 0
    %903 = vmatpush1.bf16.msra.mxu0 %v815
    %904 = vmatprep.subr.bf16.mxu0 0
    %905 = vmatpush1.bf16.msra.mxu0 %v818
    %906 = vmatprep.subr.bf16.mxu0 0
    %907 = vmatpush1.bf16.msra.mxu0 %v821
    %908 = vmatprep.subr.bf16.mxu0 0
    %909 = vmatpush1.bf16.msra.mxu0 %v824
    %910 = vmatprep.subr.bf16.mxu0 0
    %911 = vmatpush1.bf16.msra.mxu0 %v827
    %912 = vmatprep.subr.bf16.mxu0 0
    %913 = vmatpush1.bf16.msra.mxu0 %v830
    %914 = vmatprep.subr.bf16.mxu0 0
    %915 = vmatpush1.bf16.msra.mxu0 0
    %916 = vmatprep.subr.bf16.mxu0 0
    %917 = vmatpush1.bf16.msra.mxu0 0
    %918 = vmatprep.subr.bf16.mxu0 0
    %919 = vmatpush1.bf16.msra.mxu0 0
    %920 = vmatprep.subr.bf16.mxu0 0
    %921 = vmatpush1.bf16.msra.mxu0 0
    %922 = vmatprep.subr.bf16.mxu0 0
    %923 = vmatpush1.bf16.msra.mxu0 0
    %924 = vmatprep.subr.bf16.mxu0 0
    %925 = vmatpush1.bf16.msra.mxu0 0
    %926 = vmatprep.subr.bf16.mxu0 0
    %927 = vmatpush1.bf16.msra.mxu0 0
    %928 = vmatprep.subr.bf16.mxu0 0
    %929 = vmatpush1.bf16.msra.mxu0 0
    %930 = vmatprep.mubr.bf16.mxu0 0
    %931 = vmatmul.mubr.bf16.gmra.mrb[0].mxu0 %v726
    %v932 = vpop.f32.mrb[0].mxu0
    %v933 = vadd.f32 0.0, %v932
    %v934 = vpop.f32.mrb[0].mxu0
    %v935 = vpop.f32.mrb[0].mxu0
    %v936 = vadd.f32 0.0, %v935
    %v937 = vpop.f32.mrb[0].mxu0
    %938 = vdwg.mxu0
    %v939 = vadd.f32 %v674, %v890
    %v940 = vadd.f32 %v677, %v894
    %v941 = vxor.u32 %v939, 2147483648
    %v942 = vxor.u32 %v940, 2147483648
    %v943 = vmul.f32 %v941, 1.442695
    %v944 = vpow.pop %v943
    %v945 = vmul.f32 %v942, 1.442695
    %v946 = vpow.pop %v945
    %v947 = vadd.f32 %v944, 1.0
    %v948 = vadd.f32 %v946, 1.0
    %v949 = vrcp.pop %v947
    %v950 = vmul.f32 1.0, %v949
    %v951 = vrcp.pop %v948
    %v952 = vmul.f32 1.0, %v951
    %v953 = vadd.f32 %v675, %v892
    %v954 = vadd.f32 %v678, %v896
    %v955 = vxor.u32 %v953, 2147483648
    %v956 = vxor.u32 %v954, 2147483648
    %v957 = vmul.f32 %v955, 1.442695
    %v958 = vpow.pop %v957
    %v959 = vmul.f32 %v956, 1.442695
    %v960 = vpow.pop %v959
    %v961 = vadd.f32 %v958, 1.0
    %v962 = vadd.f32 %v960, 1.0
    %v963 = vrcp.pop %v961
    %v964 = vmul.f32 1.0, %v963
    %v965 = vrcp.pop %v962
    %v966 = vmul.f32 1.0, %v965
    %v967 = vmul.f32 %v950, %v933
    %v968 = vmul.f32 %v952, %v936
    %v969 = vadd.f32 %v676, %v967
    %v970 = vadd.f32 %v679, %v968
    %v971 = vtanh.pop %v969
    %v972 = vtanh.pop %v970
    %v973 = vsub.f32 1.0, %v964
    %v974 = vsub.f32 1.0, %v966
    %v975 = vmul.f32 %v973, %v971
    %v976 = vmul.f32 %v974, %v972
    %v977 = vmul.f32 %v964, %v725
    %v978 = vmul.f32 %v966, %v725
    %v979 = vadd.f32 %v975, %v977
    %v980 = vadd.f32 %v976, %v978
    %v981 = vpack.c.bf16 %v980, %v979
    %982 = vmatprep.subr.bf16.mxu0 %v808
    %983 = vmatpush1.bf16.msra.mxu0 %v807
    %984 = vmatprep.subr.bf16.mxu0 %v811
    %985 = vmatpush1.bf16.msra.mxu0 %v810
    %986 = vmatprep.subr.bf16.mxu0 %v814
    %987 = vmatpush1.bf16.msra.mxu0 %v813
    %988 = vmatprep.subr.bf16.mxu0 %v817
    %989 = vmatpush1.bf16.msra.mxu0 %v816
    %990 = vmatprep.subr.bf16.mxu0 %v820
    %991 = vmatpush1.bf16.msra.mxu0 %v819
    %992 = vmatprep.subr.bf16.mxu0 %v823
    %993 = vmatpush1.bf16.msra.mxu0 %v822
    %994 = vmatprep.subr.bf16.mxu0 %v826
    %995 = vmatpush1.bf16.msra.mxu0 %v825
    %996 = vmatprep.subr.bf16.mxu0 %v829
    %997 = vmatpush1.bf16.msra.mxu0 %v828
    %998 = vmatprep.subr.bf16.mxu0 0
    %999 = vmatpush1.bf16.msra.mxu0 0
    %1000 = vmatprep.subr.bf16.mxu0 0
    %1001 = vmatpush1.bf16.msra.mxu0 0
    %1002 = vmatprep.subr.bf16.mxu0 0
    %1003 = vmatpush1.bf16.msra.mxu0 0
    %1004 = vmatprep.subr.bf16.mxu0 0
    %1005 = vmatpush1.bf16.msra.mxu0 0
    %1006 = vmatprep.subr.bf16.mxu0 0
    %1007 = vmatpush1.bf16.msra.mxu0 0
    %1008 = vmatprep.subr.bf16.mxu0 0
    %1009 = vmatpush1.bf16.msra.mxu0 0
    %1010 = vmatprep.subr.bf16.mxu0 0
    %1011 = vmatpush1.bf16.msra.mxu0 0
    %1012 = vmatprep.subr.bf16.mxu0 0
    %1013 = vmatpush1.bf16.msra.mxu0 0
    %1014 = vmatprep.mubr.bf16.mxu0 0
    %1015 = vmatmul.mubr.bf16.gmra.mrb[0].mxu0 %v981
    %v1016 = vpop.f32.mrb[0].mxu0
    %v1017 = vadd.f32 0.0, %v1016
    %v1018 = vpop.f32.mrb[0].mxu0
    %v1019 = vadd.f32 0.0, %v1018
    %v1020 = vpop.f32.mrb[0].mxu0
    %v1021 = vadd.f32 0.0, %v1020
    %v1022 = vpop.f32.mrb[0].mxu0
    %v1023 = vadd.f32 0.0, %v1022
    %1024 = vdwg.mxu0
    %1025 = vmatprep.subr.bf16.mxu0 0
    %1026 = vmatpush1.bf16.msra.mxu0 %v809
    %1027 = vmatprep.subr.bf16.mxu0 0
    %1028 = vmatpush1.bf16.msra.mxu0 %v812
    %1029 = vmatprep.subr.bf16.mxu0 0
    %1030 = vmatpush1.bf16.msra.mxu0 %v815
    %1031 = vmatprep.subr.bf16.mxu0 0
    %1032 = vmatpush1.bf16.msra.mxu0 %v818
    %1033 = vmatprep.subr.bf16.mxu0 0
    %1034 = vmatpush1.bf16.msra.mxu0 %v821
    %1035 = vmatprep.subr.bf16.mxu0 0
    %1036 = vmatpush1.bf16.msra.mxu0 %v824
    %1037 = vmatprep.subr.bf16.mxu0 0
    %1038 = vmatpush1.bf16.msra.mxu0 %v827
    %1039 = vmatprep.subr.bf16.mxu0 0
    %1040 = vmatpush1.bf16.msra.mxu0 %v830
    %1041 = vmatprep.subr.bf16.mxu0 0
    %1042 = vmatpush1.bf16.msra.mxu0 0
    %1043 = vmatprep.subr.bf16.mxu0 0
    %1044 = vmatpush1.bf16.msra.mxu0 0
    %1045 = vmatprep.subr.bf16.mxu0 0
    %1046 = vmatpush1.bf16.msra.mxu0 0
    %1047 = vmatprep.subr.bf16.mxu0 0
    %1048 = vmatpush1.bf16.msra.mxu0 0
    %1049 = vmatprep.subr.bf16.mxu0 0
    %1050 = vmatpush1.bf16.msra.mxu0 0
    %1051 = vmatprep.subr.bf16.mxu0 0
    %1052 = vmatpush1.bf16.msra.mxu0 0
    %1053 = vmatprep.subr.bf16.mxu0 0
    %1054 = vmatpush1.bf16.msra.mxu0 0
    %1055 = vmatprep.subr.bf16.mxu0 0
    %1056 = vmatpush1.bf16.msra.mxu0 0
    %1057 = vmatprep.mubr.bf16.mxu0 0
    %1058 = vmatmul.mubr.bf16.gmra.mrb[0].mxu0 %v981
    %v1059 = vpop.f32.mrb[0].mxu0
    %v1060 = vadd.f32 0.0, %v1059
    %v1061 = vpop.f32.mrb[0].mxu0
    %v1062 = vpop.f32.mrb[0].mxu0
    %v1063 = vadd.f32 0.0, %v1062
    %v1064 = vpop.f32.mrb[0].mxu0
    %1065 = vdwg.mxu0
    %v1066 = vadd.f32 %v680, %v1017
    %v1067 = vadd.f32 %v683, %v1021
    %v1068 = vxor.u32 %v1066, 2147483648
    %v1069 = vxor.u32 %v1067, 2147483648
    %v1070 = vmul.f32 %v1068, 1.442695
    %v1071 = vpow.pop %v1070
    %v1072 = vmul.f32 %v1069, 1.442695
    %v1073 = vpow.pop %v1072
    %v1074 = vadd.f32 %v1071, 1.0
    %v1075 = vadd.f32 %v1073, 1.0
    %v1076 = vrcp.pop %v1074
    %v1077 = vmul.f32 1.0, %v1076
    %v1078 = vrcp.pop %v1075
    %v1079 = vmul.f32 1.0, %v1078
    %v1080 = vadd.f32 %v681, %v1019
    %v1081 = vadd.f32 %v684, %v1023
    %v1082 = vxor.u32 %v1080, 2147483648
    %v1083 = vxor.u32 %v1081, 2147483648
    %v1084 = vmul.f32 %v1082, 1.442695
    %v1085 = vpow.pop %v1084
    %v1086 = vmul.f32 %v1083, 1.442695
    %v1087 = vpow.pop %v1086
    %v1088 = vadd.f32 %v1085, 1.0
    %v1089 = vadd.f32 %v1087, 1.0
    %v1090 = vrcp.pop %v1088
    %v1091 = vmul.f32 1.0, %v1090
    %v1092 = vrcp.pop %v1089
    %v1093 = vmul.f32 1.0, %v1092
    %v1094 = vmul.f32 %v1077, %v1060
    %v1095 = vmul.f32 %v1079, %v1063
    %v1096 = vadd.f32 %v682, %v1094
    %v1097 = vadd.f32 %v685, %v1095
    %v1098 = vtanh.pop %v1096
    %v1099 = vtanh.pop %v1097
    %v1100 = vsub.f32 1.0, %v1091
    %v1101 = vsub.f32 1.0, %v1093
    %v1102 = vmul.f32 %v1100, %v1098
    %v1103 = vmul.f32 %v1101, %v1099
    %v1104 = vmul.f32 %v1091, %v979
    %v1105 = vmul.f32 %v1093, %v980
    %v1106 = vadd.f32 %v1102, %v1104
    %v1107 = vadd.f32 %v1103, %v1105
    %v1140 = vunpack.c.l.b16 %v182
    %v1141 = vunpack.c.h.b16 %v182
    %v1142 = vunpack.c.l.b16 %v183
    %v1143 = vunpack.c.l.b16 %v184
    %v1144 = vunpack.c.h.b16 %v184
    %v1145 = vunpack.c.l.b16 %v185
    %v1146 = vunpack.c.l.b16 %v186
    %v1147 = vunpack.c.h.b16 %v186
    %v1148 = vunpack.c.l.b16 %v187
    %v1149 = vunpack.c.l.b16 %v188
    %v1150 = vunpack.c.h.b16 %v188
    %v1151 = vunpack.c.l.b16 %v189
    %v1152 = vunpack.c.l.b16 %v190
    %v1153 = vunpack.c.h.b16 %v190
    %v1154 = vunpack.c.l.b16 %v191
    %v1155 = vunpack.c.l.b16 %v192
    %v1156 = vunpack.c.h.b16 %v192
    %v1157 = vunpack.c.l.b16 %v193
    %v1158 = vunpack.c.l.b16 %v194
    %v1159 = vunpack.c.h.b16 %v194
    %v1160 = vunpack.c.l.b16 %v195
    %v1161 = vunpack.c.l.b16 %v196
    %v1162 = vunpack.c.h.b16 %v196
    %v1163 = vunpack.c.l.b16 %v197
    %v1164 = vunpack.c.l.b16 %v198
    %v1165 = vunpack.c.h.b16 %v198
    %v1166 = vunpack.c.l.b16 %v199
    %v1167 = vunpack.c.l.b16 %v200
    %v1168 = vunpack.c.h.b16 %v200
    %v1169 = vunpack.c.l.b16 %v201
    %v1170 = vunpack.c.l.b16 %v202
    %v1171 = vunpack.c.h.b16 %v202
    %v1172 = vunpack.c.l.b16 %v203
    %v1173 = vunpack.c.l.b16 %v204
    %v1174 = vunpack.c.h.b16 %v204
    %v1175 = vunpack.c.l.b16 %v205
    %v1176 = vunpack.c.l.b16 %v206
    %v1177 = vunpack.c.h.b16 %v206
    %v1178 = vunpack.c.l.b16 %v207
    %v1179 = vunpack.c.l.b16 %v208
    %v1180 = vunpack.c.h.b16 %v208
    %v1181 = vunpack.c.l.b16 %v209
    %v1182 = vunpack.c.l.b16 %v210
    %v1183 = vunpack.c.h.b16 %v210
    %v1184 = vunpack.c.l.b16 %v211
    %v1185 = vunpack.c.l.b16 %v212
    %v1186 = vunpack.c.h.b16 %v212
    %v1187 = vunpack.c.l.b16 %v213
    %v1188 = vpack.c.b16 %v1143, %v1140
    %v1189 = vpack.c.b16 %v1144, %v1141
    %v1190 = vpack.c.b16 %v1145, %v1142
    %v1191 = vpack.c.b16 %v1149, %v1146
    %v1192 = vpack.c.b16 %v1150, %v1147
    %v1193 = vpack.c.b16 %v1151, %v1148
    %v1194 = vpack.c.b16 %v1155, %v1152
    %v1195 = vpack.c.b16 %v1156, %v1153
    %v1196 = vpack.c.b16 %v1157, %v1154
    %v1197 = vpack.c.b16 %v1161, %v1158
    %v1198 = vpack.c.b16 %v1162, %v1159
    %v1199 = vpack.c.b16 %v1163, %v1160
    %v1200 = vpack.c.b16 %v1167, %v1164
    %v1201 = vpack.c.b16 %v1168, %v1165
    %v1202 = vpack.c.b16 %v1169, %v1166
    %v1203 = vpack.c.b16 %v1173, %v1170
    %v1204 = vpack.c.b16 %v1174, %v1171
    %v1205 = vpack.c.b16 %v1175, %v1172
    %v1206 = vpack.c.b16 %v1179, %v1176
    %v1207 = vpack.c.b16 %v1180, %v1177
    %v1208 = vpack.c.b16 %v1181, %v1178
    %v1209 = vpack.c.b16 %v1185, %v1182
    %v1210 = vpack.c.b16 %v1186, %v1183
    %v1211 = vpack.c.b16 %v1187, %v1184
    %1236 = vmatprep.subr.bf16.mxu0 %v1189
    %1237 = vmatpush1.bf16.msra.mxu0 %v1188
    %1238 = vmatprep.subr.bf16.mxu0 %v1192
    %1239 = vmatpush1.bf16.msra.mxu0 %v1191
    %1240 = vmatprep.subr.bf16.mxu0 %v1195
    %1241 = vmatpush1.bf16.msra.mxu0 %v1194
    %1242 = vmatprep.subr.bf16.mxu0 %v1198
    %1243 = vmatpush1.bf16.msra.mxu0 %v1197
    %1244 = vmatprep.subr.bf16.mxu0 %v1201
    %1245 = vmatpush1.bf16.msra.mxu0 %v1200
    %1246 = vmatprep.subr.bf16.mxu0 %v1204
    %1247 = vmatpush1.bf16.msra.mxu0 %v1203
    %1248 = vmatprep.subr.bf16.mxu0 %v1207
    %1249 = vmatpush1.bf16.msra.mxu0 %v1206
    %1250 = vmatprep.subr.bf16.mxu0 %v1210
    %1251 = vmatpush1.bf16.msra.mxu0 %v1209
    %1252 = vmatprep.subr.bf16.mxu0 0
    %1253 = vmatpush1.bf16.msra.mxu0 0
    %1254 = vmatprep.subr.bf16.mxu0 0
    %1255 = vmatpush1.bf16.msra.mxu0 0
    %1256 = vmatprep.subr.bf16.mxu0 0
    %1257 = vmatpush1.bf16.msra.mxu0 0
    %1258 = vmatprep.subr.bf16.mxu0 0
    %1259 = vmatpush1.bf16.msra.mxu0 0
    %1260 = vmatprep.subr.bf16.mxu0 0
    %1261 = vmatpush1.bf16.msra.mxu0 0
    %1262 = vmatprep.subr.bf16.mxu0 0
    %1263 = vmatpush1.bf16.msra.mxu0 0
    %1264 = vmatprep.subr.bf16.mxu0 0
    %1265 = vmatpush1.bf16.msra.mxu0 0
    %1266 = vmatprep.subr.bf16.mxu0 0
    %1267 = vmatpush1.bf16.msra.mxu0 0
    %1268 = vmatprep.mubr.bf16.mxu0 0
    %1269 = vmatmul.mubr.bf16.gmra.mrb[0].mxu0 %v981
    %v1270 = vpop.f32.mrb[0].mxu0
    %v1271 = vadd.f32 %v284, %v1270
    %v1272 = vpop.f32.mrb[0].mxu0
    %v1273 = vadd.f32 %v288, %v1272
    %v1274 = vpop.f32.mrb[0].mxu0
    %v1275 = vadd.f32 %v284, %v1274
    %v1276 = vpop.f32.mrb[0].mxu0
    %v1277 = vadd.f32 %v288, %v1276
    %1278 = vdwg.mxu0
    %1279 = vmatprep.subr.bf16.mxu0 0
    %1280 = vmatpush1.bf16.msra.mxu0 %v1190
    %1281 = vmatprep.subr.bf16.mxu0 0
    %1282 = vmatpush1.bf16.msra.mxu0 %v1193
    %1283 = vmatprep.subr.bf16.mxu0 0
    %1284 = vmatpush1.bf16.msra.mxu0 %v1196
    %1285 = vmatprep.subr.bf16.mxu0 0
    %1286 = vmatpush1.bf16.msra.mxu0 %v1199
    %1287 = vmatprep.subr.bf16.mxu0 0
    %1288 = vmatpush1.bf16.msra.mxu0 %v1202
    %1289 = vmatprep.subr.bf16.mxu0 0
    %1290 = vmatpush1.bf16.msra.mxu0 %v1205
    %1291 = vmatprep.subr.bf16.mxu0 0
    %1292 = vmatpush1.bf16.msra.mxu0 %v1208
    %1293 = vmatprep.subr.bf16.mxu0 0
    %1294 = vmatpush1.bf16.msra.mxu0 %v1211
    %1295 = vmatprep.subr.bf16.mxu0 0
    %1296 = vmatpush1.bf16.msra.mxu0 0
    %1297 = vmatprep.subr.bf16.mxu0 0
    %1298 = vmatpush1.bf16.msra.mxu0 0
    %1299 = vmatprep.subr.bf16.mxu0 0
    %1300 = vmatpush1.bf16.msra.mxu0 0
    %1301 = vmatprep.subr.bf16.mxu0 0
    %1302 = vmatpush1.bf16.msra.mxu0 0
    %1303 = vmatprep.subr.bf16.mxu0 0
    %1304 = vmatpush1.bf16.msra.mxu0 0
    %1305 = vmatprep.subr.bf16.mxu0 0
    %1306 = vmatpush1.bf16.msra.mxu0 0
    %1307 = vmatprep.subr.bf16.mxu0 0
    %1308 = vmatpush1.bf16.msra.mxu0 0
    %1309 = vmatprep.subr.bf16.mxu0 0
    %1310 = vmatpush1.bf16.msra.mxu0 0
    %1311 = vmatprep.mubr.bf16.mxu0 0
    %1312 = vmatmul.mubr.bf16.gmra.mrb[0].mxu0 %v981
    %v1313 = vpop.f32.mrb[0].mxu0
    %v1314 = vadd.f32 %v292, %v1313
    %v1315 = vpop.f32.mrb[0].mxu0
    %v1316 = vpop.f32.mrb[0].mxu0
    %v1317 = vadd.f32 %v292, %v1316
    %v1318 = vpop.f32.mrb[0].mxu0
    %1319 = vdwg.mxu0
    %v1352 = vunpack.c.l.b16 %v246
    %v1353 = vunpack.c.h.b16 %v246
    %v1354 = vunpack.c.l.b16 %v247
    %v1355 = vunpack.c.l.b16 %v248
    %v1356 = vunpack.c.h.b16 %v248
    %v1357 = vunpack.c.l.b16 %v249
    %v1358 = vunpack.c.l.b16 %v250
    %v1359 = vunpack.c.h.b16 %v250
    %v1360 = vunpack.c.l.b16 %v251
    %v1361 = vunpack.c.l.b16 %v252
    %v1362 = vunpack.c.h.b16 %v252
    %v1363 = vunpack.c.l.b16 %v253
    %v1364 = vunpack.c.l.b16 %v254
    %v1365 = vunpack.c.h.b16 %v254
    %v1366 = vunpack.c.l.b16 %v255
    %v1367 = vunpack.c.l.b16 %v256
    %v1368 = vunpack.c.h.b16 %v256
    %v1369 = vunpack.c.l.b16 %v257
    %v1370 = vunpack.c.l.b16 %v258
    %v1371 = vunpack.c.h.b16 %v258
    %v1372 = vunpack.c.l.b16 %v259
    %v1373 = vunpack.c.l.b16 %v260
    %v1374 = vunpack.c.h.b16 %v260
    %v1375 = vunpack.c.l.b16 %v261
    %v1376 = vunpack.c.l.b16 %v262
    %v1377 = vunpack.c.h.b16 %v262
    %v1378 = vunpack.c.l.b16 %v263
    %v1379 = vunpack.c.l.b16 %v264
    %v1380 = vunpack.c.h.b16 %v264
    %v1381 = vunpack.c.l.b16 %v265
    %v1382 = vunpack.c.l.b16 %v266
    %v1383 = vunpack.c.h.b16 %v266
    %v1384 = vunpack.c.l.b16 %v267
    %v1385 = vunpack.c.l.b16 %v268
    %v1386 = vunpack.c.h.b16 %v268
    %v1387 = vunpack.c.l.b16 %v269
    %v1388 = vunpack.c.l.b16 %v270
    %v1389 = vunpack.c.h.b16 %v270
    %v1390 = vunpack.c.l.b16 %v271
    %v1391 = vunpack.c.l.b16 %v272
    %v1392 = vunpack.c.h.b16 %v272
    %v1393 = vunpack.c.l.b16 %v273
    %v1394 = vunpack.c.l.b16 %v274
    %v1395 = vunpack.c.h.b16 %v274
    %v1396 = vunpack.c.l.b16 %v275
    %v1397 = vunpack.c.l.b16 %v276
    %v1398 = vunpack.c.h.b16 %v276
    %v1399 = vunpack.c.l.b16 %v277
    %v1400 = vpack.c.b16 %v1355, %v1352
    %v1401 = vpack.c.b16 %v1356, %v1353
    %v1402 = vpack.c.b16 %v1357, %v1354
    %v1403 = vpack.c.b16 %v1361, %v1358
    %v1404 = vpack.c.b16 %v1362, %v1359
    %v1405 = vpack.c.b16 %v1363, %v1360
    %v1406 = vpack.c.b16 %v1367, %v1364
    %v1407 = vpack.c.b16 %v1368, %v1365
    %v1408 = vpack.c.b16 %v1369, %v1366
    %v1409 = vpack.c.b16 %v1373, %v1370
    %v1410 = vpack.c.b16 %v1374, %v1371
    %v1411 = vpack.c.b16 %v1375, %v1372
    %v1412 = vpack.c.b16 %v1379, %v1376
    %v1413 = vpack.c.b16 %v1380, %v1377
    %v1414 = vpack.c.b16 %v1381, %v1378
    %v1415 = vpack.c.b16 %v1385, %v1382
    %v1416 = vpack.c.b16 %v1386, %v1383
    %v1417 = vpack.c.b16 %v1387, %v1384
    %v1418 = vpack.c.b16 %v1391, %v1388
    %v1419 = vpack.c.b16 %v1392, %v1389
    %v1420 = vpack.c.b16 %v1393, %v1390
    %v1421 = vpack.c.b16 %v1397, %v1394
    %v1422 = vpack.c.b16 %v1398, %v1395
    %v1423 = vpack.c.b16 %v1399, %v1396
    %1448 = vmatprep.subr.bf16.mxu0 %v1401
    %1449 = vmatpush1.bf16.msra.mxu0 %v1400
    %1450 = vmatprep.subr.bf16.mxu0 %v1404
    %1451 = vmatpush1.bf16.msra.mxu0 %v1403
    %1452 = vmatprep.subr.bf16.mxu0 %v1407
    %1453 = vmatpush1.bf16.msra.mxu0 %v1406
    %1454 = vmatprep.subr.bf16.mxu0 %v1410
    %1455 = vmatpush1.bf16.msra.mxu0 %v1409
    %1456 = vmatprep.subr.bf16.mxu0 %v1413
    %1457 = vmatpush1.bf16.msra.mxu0 %v1412
    %1458 = vmatprep.subr.bf16.mxu0 %v1416
    %1459 = vmatpush1.bf16.msra.mxu0 %v1415
    %1460 = vmatprep.subr.bf16.mxu0 %v1419
    %1461 = vmatpush1.bf16.msra.mxu0 %v1418
    %1462 = vmatprep.subr.bf16.mxu0 %v1422
    %1463 = vmatpush1.bf16.msra.mxu0 %v1421
    %1464 = vmatprep.subr.bf16.mxu0 0
    %1465 = vmatpush1.bf16.msra.mxu0 0
    %1466 = vmatprep.subr.bf16.mxu0 0
    %1467 = vmatpush1.bf16.msra.mxu0 0
    %1468 = vmatprep.subr.bf16.mxu0 0
    %1469 = vmatpush1.bf16.msra.mxu0 0
    %1470 = vmatprep.subr.bf16.mxu0 0
    %1471 = vmatpush1.bf16.msra.mxu0 0
    %1472 = vmatprep.subr.bf16.mxu0 0
    %1473 = vmatpush1.bf16.msra.mxu0 0
    %1474 = vmatprep.subr.bf16.mxu0 0
    %1475 = vmatpush1.bf16.msra.mxu0 0
    %1476 = vmatprep.subr.bf16.mxu0 0
    %1477 = vmatpush1.bf16.msra.mxu0 0
    %1478 = vmatprep.subr.bf16.mxu0 0
    %1479 = vmatpush1.bf16.msra.mxu0 0
    %1480 = vmatprep.mubr.bf16.mxu0 0
    %1481 = vmatmul.mubr.bf16.gmra.mrb[0].mxu0 %v726
    %v1482 = vpop.f32.mrb[0].mxu0
    %v1483 = vadd.f32 0.0, %v1482
    %v1484 = vpop.f32.mrb[0].mxu0
    %v1485 = vadd.f32 0.0, %v1484
    %v1486 = vpop.f32.mrb[0].mxu0
    %v1487 = vadd.f32 0.0, %v1486
    %v1488 = vpop.f32.mrb[0].mxu0
    %v1489 = vadd.f32 0.0, %v1488
    %1490 = vdwg.mxu0
    %1491 = vmatprep.subr.bf16.mxu0 0
    %1492 = vmatpush1.bf16.msra.mxu0 %v1402
    %1493 = vmatprep.subr.bf16.mxu0 0
    %1494 = vmatpush1.bf16.msra.mxu0 %v1405
    %1495 = vmatprep.subr.bf16.mxu0 0
    %1496 = vmatpush1.bf16.msra.mxu0 %v1408
    %1497 = vmatprep.subr.bf16.mxu0 0
    %1498 = vmatpush1.bf16.msra.mxu0 %v1411
    %1499 = vmatprep.subr.bf16.mxu0 0
    %1500 = vmatpush1.bf16.msra.mxu0 %v1414
    %1501 = vmatprep.subr.bf16.mxu0 0
    %1502 = vmatpush1.bf16.msra.mxu0 %v1417
    %1503 = vmatprep.subr.bf16.mxu0 0
    %1504 = vmatpush1.bf16.msra.mxu0 %v1420
    %1505 = vmatprep.subr.bf16.mxu0 0
    %1506 = vmatpush1.bf16.msra.mxu0 %v1423
    %1507 = vmatprep.subr.bf16.mxu0 0
    %1508 = vmatpush1.bf16.msra.mxu0 0
    %1509 = vmatprep.subr.bf16.mxu0 0
    %1510 = vmatpush1.bf16.msra.mxu0 0
    %1511 = vmatprep.subr.bf16.mxu0 0
    %1512 = vmatpush1.bf16.msra.mxu0 0
    %1513 = vmatprep.subr.bf16.mxu0 0
    %1514 = vmatpush1.bf16.msra.mxu0 0
    %1515 = vmatprep.subr.bf16.mxu0 0
    %1516 = vmatpush1.bf16.msra.mxu0 0
    %1517 = vmatprep.subr.bf16.mxu0 0
    %1518 = vmatpush1.bf16.msra.mxu0 0
    %1519 = vmatprep.subr.bf16.mxu0 0
    %1520 = vmatpush1.bf16.msra.mxu0 0
    %1521 = vmatprep.subr.bf16.mxu0 0
    %1522 = vmatpush1.bf16.msra.mxu0 0
    %1523 = vmatprep.mubr.bf16.mxu0 0
    %1524 = vmatmul.mubr.bf16.gmra.mrb[0].mxu0 %v726
    %v1525 = vpop.f32.mrb[0].mxu0
    %v1526 = vadd.f32 0.0, %v1525
    %v1527 = vpop.f32.mrb[0].mxu0
    %v1528 = vpop.f32.mrb[0].mxu0
    %v1529 = vadd.f32 0.0, %v1528
    %v1530 = vpop.f32.mrb[0].mxu0
    %1531 = vdwg.mxu0
    %v1532 = vadd.f32 %v1271, %v1483
    %v1533 = vadd.f32 %v1275, %v1487
    %v1534 = vxor.u32 %v1532, 2147483648
    %v1535 = vxor.u32 %v1533, 2147483648
    %v1536 = vmul.f32 %v1534, 1.442695
    %v1537 = vpow.pop %v1536
    %v1538 = vmul.f32 %v1535, 1.442695
    %v1539 = vpow.pop %v1538
    %v1540 = vadd.f32 %v1537, 1.0
    %v1541 = vadd.f32 %v1539, 1.0
    %v1542 = vrcp.pop %v1540
    %v1543 = vmul.f32 1.0, %v1542
    %v1544 = vrcp.pop %v1541
    %v1545 = vmul.f32 1.0, %v1544
    %v1546 = vadd.f32 %v1273, %v1485
    %v1547 = vadd.f32 %v1277, %v1489
    %v1548 = vxor.u32 %v1546, 2147483648
    %v1549 = vxor.u32 %v1547, 2147483648
    %v1550 = vmul.f32 %v1548, 1.442695
    %v1551 = vpow.pop %v1550
    %v1552 = vmul.f32 %v1549, 1.442695
    %v1553 = vpow.pop %v1552
    %v1554 = vadd.f32 %v1551, 1.0
    %v1555 = vadd.f32 %v1553, 1.0
    %v1556 = vrcp.pop %v1554
    %v1557 = vmul.f32 1.0, %v1556
    %v1558 = vrcp.pop %v1555
    %v1559 = vmul.f32 1.0, %v1558
    %v1560 = vmul.f32 %v1543, %v1526
    %v1561 = vmul.f32 %v1545, %v1529
    %v1562 = vadd.f32 %v1314, %v1560
    %v1563 = vadd.f32 %v1317, %v1561
    %v1564 = vtanh.pop %v1562
    %v1565 = vtanh.pop %v1563
    %v1566 = vsub.f32 1.0, %v1557
    %v1567 = vsub.f32 1.0, %v1559
    %v1568 = vmul.f32 %v1566, %v1564
    %v1569 = vmul.f32 %v1567, %v1565
    %v1570 = vmul.f32 %v1557, %v725
    %v1571 = vmul.f32 %v1559, %v725
    %v1572 = vadd.f32 %v1568, %v1570
    %v1573 = vadd.f32 %v1569, %v1571
    %v1574 = vpack.c.bf16 %v1107, %v1106
    %1575 = vmatprep.subr.bf16.mxu0 %v808
    %1576 = vmatpush1.bf16.msra.mxu0 %v807
    %1577 = vmatprep.subr.bf16.mxu0 %v811
    %1578 = vmatpush1.bf16.msra.mxu0 %v810
    %1579 = vmatprep.subr.bf16.mxu0 %v814
    %1580 = vmatpush1.bf16.msra.mxu0 %v813
    %1581 = vmatprep.subr.bf16.mxu0 %v817
    %1582 = vmatpush1.bf16.msra.mxu0 %v816
    %1583 = vmatprep.subr.bf16.mxu0 %v820
    %1584 = vmatpush1.bf16.msra.mxu0 %v819
    %1585 = vmatprep.subr.bf16.mxu0 %v823
    %1586 = vmatpush1.bf16.msra.mxu0 %v822
    %1587 = vmatprep.subr.bf16.mxu0 %v826
    %1588 = vmatpush1.bf16.msra.mxu0 %v825
    %1589 = vmatprep.subr.bf16.mxu0 %v829
    %1590 = vmatpush1.bf16.msra.mxu0 %v828
    %1591 = vmatprep.subr.bf16.mxu0 0
    %1592 = vmatpush1.bf16.msra.mxu0 0
    %1593 = vmatprep.subr.bf16.mxu0 0
    %1594 = vmatpush1.bf16.msra.mxu0 0
    %1595 = vmatprep.subr.bf16.mxu0 0
    %1596 = vmatpush1.bf16.msra.mxu0 0
    %1597 = vmatprep.subr.bf16.mxu0 0
    %1598 = vmatpush1.bf16.msra.mxu0 0
    %1599 = vmatprep.subr.bf16.mxu0 0
    %1600 = vmatpush1.bf16.msra.mxu0 0
    %1601 = vmatprep.subr.bf16.mxu0 0
    %1602 = vmatpush1.bf16.msra.mxu0 0
    %1603 = vmatprep.subr.bf16.mxu0 0
    %1604 = vmatpush1.bf16.msra.mxu0 0
    %1605 = vmatprep.subr.bf16.mxu0 0
    %1606 = vmatpush1.bf16.msra.mxu0 0
    %1607 = vmatprep.mubr.bf16.mxu0 0
    %1608 = vmatmul.mubr.bf16.gmra.mrb[0].mxu0 %v1574
    %v1609 = vpop.f32.mrb[0].mxu0
    %v1610 = vadd.f32 0.0, %v1609
    %v1611 = vpop.f32.mrb[0].mxu0
    %v1612 = vadd.f32 0.0, %v1611
    %v1613 = vpop.f32.mrb[0].mxu0
    %v1614 = vadd.f32 0.0, %v1613
    %v1615 = vpop.f32.mrb[0].mxu0
    %v1616 = vadd.f32 0.0, %v1615
    %1617 = vdwg.mxu0
    %1618 = vmatprep.subr.bf16.mxu0 0
    %1619 = vmatpush1.bf16.msra.mxu0 %v809
    %1620 = vmatprep.subr.bf16.mxu0 0
    %1621 = vmatpush1.bf16.msra.mxu0 %v812
    %1622 = vmatprep.subr.bf16.mxu0 0
    %1623 = vmatpush1.bf16.msra.mxu0 %v815
    %1624 = vmatprep.subr.bf16.mxu0 0
    %1625 = vmatpush1.bf16.msra.mxu0 %v818
    %1626 = vmatprep.subr.bf16.mxu0 0
    %1627 = vmatpush1.bf16.msra.mxu0 %v821
    %1628 = vmatprep.subr.bf16.mxu0 0
    %1629 = vmatpush1.bf16.msra.mxu0 %v824
    %1630 = vmatprep.subr.bf16.mxu0 0
    %1631 = vmatpush1.bf16.msra.mxu0 %v827
    %1632 = vmatprep.subr.bf16.mxu0 0
    %1633 = vmatpush1.bf16.msra.mxu0 %v830
    %1634 = vmatprep.subr.bf16.mxu0 0
    %1635 = vmatpush1.bf16.msra.mxu0 0
    %1636 = vmatprep.subr.bf16.mxu0 0
    %1637 = vmatpush1.bf16.msra.mxu0 0
    %1638 = vmatprep.subr.bf16.mxu0 0
    %1639 = vmatpush1.bf16.msra.mxu0 0
    %1640 = vmatprep.subr.bf16.mxu0 0
    %1641 = vmatpush1.bf16.msra.mxu0 0
    %1642 = vmatprep.subr.bf16.mxu0 0
    %1643 = vmatpush1.bf16.msra.mxu0 0
    %1644 = vmatprep.subr.bf16.mxu0 0
    %1645 = vmatpush1.bf16.msra.mxu0 0
    %1646 = vmatprep.subr.bf16.mxu0 0
    %1647 = vmatpush1.bf16.msra.mxu0 0
    %1648 = vmatprep.subr.bf16.mxu0 0
    %1649 = vmatpush1.bf16.msra.mxu0 0
    %1650 = vmatprep.mubr.bf16.mxu0 0
    %1651 = vmatmul.mubr.bf16.gmra.mrb[0].mxu0 %v1574
    %v1652 = vpop.f32.mrb[0].mxu0
    %v1653 = vadd.f32 0.0, %v1652
    %v1654 = vpop.f32.mrb[0].mxu0
    %v1655 = vpop.f32.mrb[0].mxu0
    %v1656 = vadd.f32 0.0, %v1655
    %v1657 = vpop.f32.mrb[0].mxu0
    %1658 = vdwg.mxu0
    %v1659 = vadd.f32 %v686, %v1610
    %v1660 = vadd.f32 %v689, %v1614
    %v1661 = vxor.u32 %v1659, 2147483648
    %v1662 = vxor.u32 %v1660, 2147483648
    %v1663 = vmul.f32 %v1661, 1.442695
    %v1664 = vpow.pop %v1663
    %v1665 = vmul.f32 %v1662, 1.442695
    %v1666 = vpow.pop %v1665
    %v1667 = vadd.f32 %v1664, 1.0
    %v1668 = vadd.f32 %v1666, 1.0
    %v1669 = vrcp.pop %v1667
    %v1670 = vmul.f32 1.0, %v1669
    %v1671 = vrcp.pop %v1668
    %v1672 = vmul.f32 1.0, %v1671
    %v1673 = vadd.f32 %v687, %v1612
    %v1674 = vadd.f32 %v690, %v1616
    %v1675 = vxor.u32 %v1673, 2147483648
    %v1676 = vxor.u32 %v1674, 2147483648
    %v1677 = vmul.f32 %v1675, 1.442695
    %v1678 = vpow.pop %v1677
    %v1679 = vmul.f32 %v1676, 1.442695
    %v1680 = vpow.pop %v1679
    %v1681 = vadd.f32 %v1678, 1.0
    %v1682 = vadd.f32 %v1680, 1.0
    %v1683 = vrcp.pop %v1681
    %v1684 = vmul.f32 1.0, %v1683
    %v1685 = vrcp.pop %v1682
    %v1686 = vmul.f32 1.0, %v1685
    %v1687 = vmul.f32 %v1670, %v1653
    %v1688 = vmul.f32 %v1672, %v1656
    %v1689 = vadd.f32 %v688, %v1687
    %v1690 = vadd.f32 %v691, %v1688
    %v1691 = vtanh.pop %v1689
    %v1692 = vtanh.pop %v1690
    %v1693 = vsub.f32 1.0, %v1684
    %v1694 = vsub.f32 1.0, %v1686
    %v1695 = vmul.f32 %v1693, %v1691
    %v1696 = vmul.f32 %v1694, %v1692
    %v1697 = vmul.f32 %v1684, %v1106
    %v1698 = vmul.f32 %v1686, %v1107
    %v1699 = vadd.f32 %v1695, %v1697
    %v1700 = vadd.f32 %v1696, %v1698
    %1701 = vmatprep.subr.bf16.mxu0 %v1189
    %1702 = vmatpush1.bf16.msra.mxu0 %v1188
    %1703 = vmatprep.subr.bf16.mxu0 %v1192
    %1704 = vmatpush1.bf16.msra.mxu0 %v1191
    %1705 = vmatprep.subr.bf16.mxu0 %v1195
    %1706 = vmatpush1.bf16.msra.mxu0 %v1194
    %1707 = vmatprep.subr.bf16.mxu0 %v1198
    %1708 = vmatpush1.bf16.msra.mxu0 %v1197
    %1709 = vmatprep.subr.bf16.mxu0 %v1201
    %1710 = vmatpush1.bf16.msra.mxu0 %v1200
    %1711 = vmatprep.subr.bf16.mxu0 %v1204
    %1712 = vmatpush1.bf16.msra.mxu0 %v1203
    %1713 = vmatprep.subr.bf16.mxu0 %v1207
    %1714 = vmatpush1.bf16.msra.mxu0 %v1206
    %1715 = vmatprep.subr.bf16.mxu0 %v1210
    %1716 = vmatpush1.bf16.msra.mxu0 %v1209
    %1717 = vmatprep.subr.bf16.mxu0 0
    %1718 = vmatpush1.bf16.msra.mxu0 0
    %1719 = vmatprep.subr.bf16.mxu0 0
    %1720 = vmatpush1.bf16.msra.mxu0 0
    %1721 = vmatprep.subr.bf16.mxu0 0
    %1722 = vmatpush1.bf16.msra.mxu0 0
    %1723 = vmatprep.subr.bf16.mxu0 0
    %1724 = vmatpush1.bf16.msra.mxu0 0
    %1725 = vmatprep.subr.bf16.mxu0 0
    %1726 = vmatpush1.bf16.msra.mxu0 0
    %1727 = vmatprep.subr.bf16.mxu0 0
    %1728 = vmatpush1.bf16.msra.mxu0 0
    %1729 = vmatprep.subr.bf16.mxu0 0
    %1730 = vmatpush1.bf16.msra.mxu0 0
    %1731 = vmatprep.subr.bf16.mxu0 0
    %1732 = vmatpush1.bf16.msra.mxu0 0
    %1733 = vmatprep.mubr.bf16.mxu0 0
    %1734 = vmatmul.mubr.bf16.gmra.mrb[0].mxu0 %v1574
    %v1735 = vpop.f32.mrb[0].mxu0
    %v1736 = vadd.f32 %v284, %v1735
    %v1737 = vpop.f32.mrb[0].mxu0
    %v1738 = vadd.f32 %v288, %v1737
    %v1739 = vpop.f32.mrb[0].mxu0
    %v1740 = vadd.f32 %v284, %v1739
    %v1741 = vpop.f32.mrb[0].mxu0
    %v1742 = vadd.f32 %v288, %v1741
    %1743 = vdwg.mxu0
    %1744 = vmatprep.subr.bf16.mxu0 0
    %1745 = vmatpush1.bf16.msra.mxu0 %v1190
    %1746 = vmatprep.subr.bf16.mxu0 0
    %1747 = vmatpush1.bf16.msra.mxu0 %v1193
    %1748 = vmatprep.subr.bf16.mxu0 0
    %1749 = vmatpush1.bf16.msra.mxu0 %v1196
    %1750 = vmatprep.subr.bf16.mxu0 0
    %1751 = vmatpush1.bf16.msra.mxu0 %v1199
    %1752 = vmatprep.subr.bf16.mxu0 0
    %1753 = vmatpush1.bf16.msra.mxu0 %v1202
    %1754 = vmatprep.subr.bf16.mxu0 0
    %1755 = vmatpush1.bf16.msra.mxu0 %v1205
    %1756 = vmatprep.subr.bf16.mxu0 0
    %1757 = vmatpush1.bf16.msra.mxu0 %v1208
    %1758 = vmatprep.subr.bf16.mxu0 0
    %1759 = vmatpush1.bf16.msra.mxu0 %v1211
    %1760 = vmatprep.subr.bf16.mxu0 0
    %1761 = vmatpush1.bf16.msra.mxu0 0
    %1762 = vmatprep.subr.bf16.mxu0 0
    %1763 = vmatpush1.bf16.msra.mxu0 0
    %1764 = vmatprep.subr.bf16.mxu0 0
    %1765 = vmatpush1.bf16.msra.mxu0 0
    %1766 = vmatprep.subr.bf16.mxu0 0
    %1767 = vmatpush1.bf16.msra.mxu0 0
    %1768 = vmatprep.subr.bf16.mxu0 0
    %1769 = vmatpush1.bf16.msra.mxu0 0
    %1770 = vmatprep.subr.bf16.mxu0 0
    %1771 = vmatpush1.bf16.msra.mxu0 0
    %1772 = vmatprep.subr.bf16.mxu0 0
    %1773 = vmatpush1.bf16.msra.mxu0 0
    %1774 = vmatprep.subr.bf16.mxu0 0
    %1775 = vmatpush1.bf16.msra.mxu0 0
    %1776 = vmatprep.mubr.bf16.mxu0 0
    %1777 = vmatmul.mubr.bf16.gmra.mrb[0].mxu0 %v1574
    %v1778 = vpop.f32.mrb[0].mxu0
    %v1779 = vadd.f32 %v292, %v1778
    %v1780 = vpop.f32.mrb[0].mxu0
    %v1781 = vpop.f32.mrb[0].mxu0
    %v1782 = vadd.f32 %v292, %v1781
    %v1783 = vpop.f32.mrb[0].mxu0
    %1784 = vdwg.mxu0
    %v1785 = vpack.c.bf16 %v1573, %v1572
    %1786 = vmatprep.subr.bf16.mxu0 %v1401
    %1787 = vmatpush1.bf16.msra.mxu0 %v1400
    %1788 = vmatprep.subr.bf16.mxu0 %v1404
    %1789 = vmatpush1.bf16.msra.mxu0 %v1403
    %1790 = vmatprep.subr.bf16.mxu0 %v1407
    %1791 = vmatpush1.bf16.msra.mxu0 %v1406
    %1792 = vmatprep.subr.bf16.mxu0 %v1410
    %1793 = vmatpush1.bf16.msra.mxu0 %v1409
    %1794 = vmatprep.subr.bf16.mxu0 %v1413
    %1795 = vmatpush1.bf16.msra.mxu0 %v1412
    %1796 = vmatprep.subr.bf16.mxu0 %v1416
    %1797 = vmatpush1.bf16.msra.mxu0 %v1415
    %1798 = vmatprep.subr.bf16.mxu0 %v1419
    %1799 = vmatpush1.bf16.msra.mxu0 %v1418
    %1800 = vmatprep.subr.bf16.mxu0 %v1422
    %1801 = vmatpush1.bf16.msra.mxu0 %v1421
    %1802 = vmatprep.subr.bf16.mxu0 0
    %1803 = vmatpush1.bf16.msra.mxu0 0
    %1804 = vmatprep.subr.bf16.mxu0 0
    %1805 = vmatpush1.bf16.msra.mxu0 0
    %1806 = vmatprep.subr.bf16.mxu0 0
    %1807 = vmatpush1.bf16.msra.mxu0 0
    %1808 = vmatprep.subr.bf16.mxu0 0
    %1809 = vmatpush1.bf16.msra.mxu0 0
    %1810 = vmatprep.subr.bf16.mxu0 0
    %1811 = vmatpush1.bf16.msra.mxu0 0
    %1812 = vmatprep.subr.bf16.mxu0 0
    %1813 = vmatpush1.bf16.msra.mxu0 0
    %1814 = vmatprep.subr.bf16.mxu0 0
    %1815 = vmatpush1.bf16.msra.mxu0 0
    %1816 = vmatprep.subr.bf16.mxu0 0
    %1817 = vmatpush1.bf16.msra.mxu0 0
    %1818 = vmatprep.mubr.bf16.mxu0 0
    %1819 = vmatmul.mubr.bf16.gmra.mrb[0].mxu0 %v1785
    %v1820 = vpop.f32.mrb[0].mxu0
    %v1821 = vadd.f32 0.0, %v1820
    %v1822 = vpop.f32.mrb[0].mxu0
    %v1823 = vadd.f32 0.0, %v1822
    %v1824 = vpop.f32.mrb[0].mxu0
    %v1825 = vadd.f32 0.0, %v1824
    %v1826 = vpop.f32.mrb[0].mxu0
    %v1827 = vadd.f32 0.0, %v1826
    %1828 = vdwg.mxu0
    %1829 = vmatprep.subr.bf16.mxu0 0
    %1830 = vmatpush1.bf16.msra.mxu0 %v1402
    %1831 = vmatprep.subr.bf16.mxu0 0
    %1832 = vmatpush1.bf16.msra.mxu0 %v1405
    %1833 = vmatprep.subr.bf16.mxu0 0
    %1834 = vmatpush1.bf16.msra.mxu0 %v1408
    %1835 = vmatprep.subr.bf16.mxu0 0
    %1836 = vmatpush1.bf16.msra.mxu0 %v1411
    %1837 = vmatprep.subr.bf16.mxu0 0
    %1838 = vmatpush1.bf16.msra.mxu0 %v1414
    %1839 = vmatprep.subr.bf16.mxu0 0
    %1840 = vmatpush1.bf16.msra.mxu0 %v1417
    %1841 = vmatprep.subr.bf16.mxu0 0
    %1842 = vmatpush1.bf16.msra.mxu0 %v1420
    %1843 = vmatprep.subr.bf16.mxu0 0
    %1844 = vmatpush1.bf16.msra.mxu0 %v1423
    %1845 = vmatprep.subr.bf16.mxu0 0
    %1846 = vmatpush1.bf16.msra.mxu0 0
    %1847 = vmatprep.subr.bf16.mxu0 0
    %1848 = vmatpush1.bf16.msra.mxu0 0
    %1849 = vmatprep.subr.bf16.mxu0 0
    %1850 = vmatpush1.bf16.msra.mxu0 0
    %1851 = vmatprep.subr.bf16.mxu0 0
    %1852 = vmatpush1.bf16.msra.mxu0 0
    %1853 = vmatprep.subr.bf16.mxu0 0
    %1854 = vmatpush1.bf16.msra.mxu0 0
    %1855 = vmatprep.subr.bf16.mxu0 0
    %1856 = vmatpush1.bf16.msra.mxu0 0
    %1857 = vmatprep.subr.bf16.mxu0 0
    %1858 = vmatpush1.bf16.msra.mxu0 0
    %1859 = vmatprep.subr.bf16.mxu0 0
    %1860 = vmatpush1.bf16.msra.mxu0 0
    %1861 = vmatprep.mubr.bf16.mxu0 0
    %1862 = vmatmul.mubr.bf16.gmra.mrb[0].mxu0 %v1785
    %v1863 = vpop.f32.mrb[0].mxu0
    %v1864 = vadd.f32 0.0, %v1863
    %v1865 = vpop.f32.mrb[0].mxu0
    %v1866 = vpop.f32.mrb[0].mxu0
    %v1867 = vadd.f32 0.0, %v1866
    %v1868 = vpop.f32.mrb[0].mxu0
    %1869 = vdwg.mxu0
    %v1870 = vadd.f32 %v1736, %v1821
    %v1871 = vadd.f32 %v1740, %v1825
    %v1872 = vxor.u32 %v1870, 2147483648
    %v1873 = vxor.u32 %v1871, 2147483648
    %v1874 = vmul.f32 %v1872, 1.442695
    %v1875 = vpow.pop %v1874
    %v1876 = vmul.f32 %v1873, 1.442695
    %v1877 = vpow.pop %v1876
    %v1878 = vadd.f32 %v1875, 1.0
    %v1879 = vadd.f32 %v1877, 1.0
    %v1880 = vrcp.pop %v1878
    %v1881 = vmul.f32 1.0, %v1880
    %v1882 = vrcp.pop %v1879
    %v1883 = vmul.f32 1.0, %v1882
    %v1884 = vadd.f32 %v1738, %v1823
    %v1885 = vadd.f32 %v1742, %v1827
    %v1886 = vxor.u32 %v1884, 2147483648
    %v1887 = vxor.u32 %v1885, 2147483648
    %v1888 = vmul.f32 %v1886, 1.442695
    %v1889 = vpow.pop %v1888
    %v1890 = vmul.f32 %v1887, 1.442695
    %v1891 = vpow.pop %v1890
    %v1892 = vadd.f32 %v1889, 1.0
    %v1893 = vadd.f32 %v1891, 1.0
    %v1894 = vrcp.pop %v1892
    %v1895 = vmul.f32 1.0, %v1894
    %v1896 = vrcp.pop %v1893
    %v1897 = vmul.f32 1.0, %v1896
    %v1898 = vmul.f32 %v1881, %v1864
    %v1899 = vmul.f32 %v1883, %v1867
    %v1900 = vadd.f32 %v1779, %v1898
    %v1901 = vadd.f32 %v1782, %v1899
    %v1902 = vtanh.pop %v1900
    %v1903 = vtanh.pop %v1901
    %v1904 = vsub.f32 1.0, %v1895
    %v1905 = vsub.f32 1.0, %v1897
    %v1906 = vmul.f32 %v1904, %v1902
    %v1907 = vmul.f32 %v1905, %v1903
    %v1908 = vmul.f32 %v1895, %v1572
    %v1909 = vmul.f32 %v1897, %v1573
    %v1910 = vadd.f32 %v1906, %v1908
    %v1911 = vadd.f32 %v1907, %v1909
    %v1912 = vpack.c.bf16 %v1700, %v1699
    %1913 = vmatprep.subr.bf16.mxu0 %v808
    %1914 = vmatpush1.bf16.msra.mxu0 %v807
    %1915 = vmatprep.subr.bf16.mxu0 %v811
    %1916 = vmatpush1.bf16.msra.mxu0 %v810
    %1917 = vmatprep.subr.bf16.mxu0 %v814
    %1918 = vmatpush1.bf16.msra.mxu0 %v813
    %1919 = vmatprep.subr.bf16.mxu0 %v817
    %1920 = vmatpush1.bf16.msra.mxu0 %v816
    %1921 = vmatprep.subr.bf16.mxu0 %v820
    %1922 = vmatpush1.bf16.msra.mxu0 %v819
    %1923 = vmatprep.subr.bf16.mxu0 %v823
    %1924 = vmatpush1.bf16.msra.mxu0 %v822
    %1925 = vmatprep.subr.bf16.mxu0 %v826
    %1926 = vmatpush1.bf16.msra.mxu0 %v825
    %1927 = vmatprep.subr.bf16.mxu0 %v829
    %1928 = vmatpush1.bf16.msra.mxu0 %v828
    %1929 = vmatprep.subr.bf16.mxu0 0
    %1930 = vmatpush1.bf16.msra.mxu0 0
    %1931 = vmatprep.subr.bf16.mxu0 0
    %1932 = vmatpush1.bf16.msra.mxu0 0
    %1933 = vmatprep.subr.bf16.mxu0 0
    %1934 = vmatpush1.bf16.msra.mxu0 0
    %1935 = vmatprep.subr.bf16.mxu0 0
    %1936 = vmatpush1.bf16.msra.mxu0 0
    %1937 = vmatprep.subr.bf16.mxu0 0
    %1938 = vmatpush1.bf16.msra.mxu0 0
    %1939 = vmatprep.subr.bf16.mxu0 0
    %1940 = vmatpush1.bf16.msra.mxu0 0
    %1941 = vmatprep.subr.bf16.mxu0 0
    %1942 = vmatpush1.bf16.msra.mxu0 0
    %1943 = vmatprep.subr.bf16.mxu0 0
    %1944 = vmatpush1.bf16.msra.mxu0 0
    %1945 = vmatprep.mubr.bf16.mxu0 0
    %1946 = vmatmul.mubr.bf16.gmra.mrb[0].mxu0 %v1912
    %v1947 = vpop.f32.mrb[0].mxu0
    %v1948 = vadd.f32 0.0, %v1947
    %v1949 = vpop.f32.mrb[0].mxu0
    %v1950 = vadd.f32 0.0, %v1949
    %v1951 = vpop.f32.mrb[0].mxu0
    %v1952 = vadd.f32 0.0, %v1951
    %v1953 = vpop.f32.mrb[0].mxu0
    %v1954 = vadd.f32 0.0, %v1953
    %1955 = vdwg.mxu0
    %1956 = vmatprep.subr.bf16.mxu0 0
    %1957 = vmatpush1.bf16.msra.mxu0 %v809
    %1958 = vmatprep.subr.bf16.mxu0 0
    %1959 = vmatpush1.bf16.msra.mxu0 %v812
    %1960 = vmatprep.subr.bf16.mxu0 0
    %1961 = vmatpush1.bf16.msra.mxu0 %v815
    %1962 = vmatprep.subr.bf16.mxu0 0
    %1963 = vmatpush1.bf16.msra.mxu0 %v818
    %1964 = vmatprep.subr.bf16.mxu0 0
    %1965 = vmatpush1.bf16.msra.mxu0 %v821
    %1966 = vmatprep.subr.bf16.mxu0 0
    %1967 = vmatpush1.bf16.msra.mxu0 %v824
    %1968 = vmatprep.subr.bf16.mxu0 0
    %1969 = vmatpush1.bf16.msra.mxu0 %v827
    %1970 = vmatprep.subr.bf16.mxu0 0
    %1971 = vmatpush1.bf16.msra.mxu0 %v830
    %1972 = vmatprep.subr.bf16.mxu0 0
    %1973 = vmatpush1.bf16.msra.mxu0 0
    %1974 = vmatprep.subr.bf16.mxu0 0
    %1975 = vmatpush1.bf16.msra.mxu0 0
    %1976 = vmatprep.subr.bf16.mxu0 0
    %1977 = vmatpush1.bf16.msra.mxu0 0
    %1978 = vmatprep.subr.bf16.mxu0 0
    %1979 = vmatpush1.bf16.msra.mxu0 0
    %1980 = vmatprep.subr.bf16.mxu0 0
    %1981 = vmatpush1.bf16.msra.mxu0 0
    %1982 = vmatprep.subr.bf16.mxu0 0
    %1983 = vmatpush1.bf16.msra.mxu0 0
    %1984 = vmatprep.subr.bf16.mxu0 0
    %1985 = vmatpush1.bf16.msra.mxu0 0
    %1986 = vmatprep.subr.bf16.mxu0 0
    %1987 = vmatpush1.bf16.msra.mxu0 0
    %1988 = vmatprep.mubr.bf16.mxu0 0
    %1989 = vmatmul.mubr.bf16.gmra.mrb[0].mxu0 %v1912
    %v1990 = vpop.f32.mrb[0].mxu0
    %v1991 = vadd.f32 0.0, %v1990
    %v1992 = vpop.f32.mrb[0].mxu0
    %v1993 = vpop.f32.mrb[0].mxu0
    %v1994 = vadd.f32 0.0, %v1993
    %v1995 = vpop.f32.mrb[0].mxu0
    %1996 = vdwg.mxu0
    %v1997 = vadd.f32 %v692, %v1948
    %v1998 = vadd.f32 %v695, %v1952
    %v1999 = vxor.u32 %v1997, 2147483648
    %v2000 = vxor.u32 %v1998, 2147483648
    %v2001 = vmul.f32 %v1999, 1.442695
    %v2002 = vpow.pop %v2001
    %v2003 = vmul.f32 %v2000, 1.442695
    %v2004 = vpow.pop %v2003
    %v2005 = vadd.f32 %v2002, 1.0
    %v2006 = vadd.f32 %v2004, 1.0
    %v2007 = vrcp.pop %v2005
    %v2008 = vmul.f32 1.0, %v2007
    %v2009 = vrcp.pop %v2006
    %v2010 = vmul.f32 1.0, %v2009
    %v2011 = vadd.f32 %v693, %v1950
    %v2012 = vadd.f32 %v696, %v1954
    %v2013 = vxor.u32 %v2011, 2147483648
    %v2014 = vxor.u32 %v2012, 2147483648
    %v2015 = vmul.f32 %v2013, 1.442695
    %v2016 = vpow.pop %v2015
    %v2017 = vmul.f32 %v2014, 1.442695
    %v2018 = vpow.pop %v2017
    %v2019 = vadd.f32 %v2016, 1.0
    %v2020 = vadd.f32 %v2018, 1.0
    %v2021 = vrcp.pop %v2019
    %v2022 = vmul.f32 1.0, %v2021
    %v2023 = vrcp.pop %v2020
    %v2024 = vmul.f32 1.0, %v2023
    %v2025 = vmul.f32 %v2008, %v1991
    %v2026 = vmul.f32 %v2010, %v1994
    %v2027 = vadd.f32 %v694, %v2025
    %v2028 = vadd.f32 %v697, %v2026
    %v2029 = vtanh.pop %v2027
    %v2030 = vtanh.pop %v2028
    %v2031 = vsub.f32 1.0, %v2022
    %v2032 = vsub.f32 1.0, %v2024
    %v2033 = vmul.f32 %v2031, %v2029
    %v2034 = vmul.f32 %v2032, %v2030
    %v2035 = vmul.f32 %v2022, %v1699
    %v2036 = vmul.f32 %v2024, %v1700
    %v2037 = vadd.f32 %v2033, %v2035
    %v2038 = vadd.f32 %v2034, %v2036
    %2039 = vmatprep.subr.bf16.mxu0 %v1189
    %2040 = vmatpush1.bf16.msra.mxu0 %v1188
    %2041 = vmatprep.subr.bf16.mxu0 %v1192
    %2042 = vmatpush1.bf16.msra.mxu0 %v1191
    %2043 = vmatprep.subr.bf16.mxu0 %v1195
    %2044 = vmatpush1.bf16.msra.mxu0 %v1194
    %2045 = vmatprep.subr.bf16.mxu0 %v1198
    %2046 = vmatpush1.bf16.msra.mxu0 %v1197
    %2047 = vmatprep.subr.bf16.mxu0 %v1201
    %2048 = vmatpush1.bf16.msra.mxu0 %v1200
    %2049 = vmatprep.subr.bf16.mxu0 %v1204
    %2050 = vmatpush1.bf16.msra.mxu0 %v1203
    %2051 = vmatprep.subr.bf16.mxu0 %v1207
    %2052 = vmatpush1.bf16.msra.mxu0 %v1206
    %2053 = vmatprep.subr.bf16.mxu0 %v1210
    %2054 = vmatpush1.bf16.msra.mxu0 %v1209
    %2055 = vmatprep.subr.bf16.mxu0 0
    %2056 = vmatpush1.bf16.msra.mxu0 0
    %2057 = vmatprep.subr.bf16.mxu0 0
    %2058 = vmatpush1.bf16.msra.mxu0 0
    %2059 = vmatprep.subr.bf16.mxu0 0
    %2060 = vmatpush1.bf16.msra.mxu0 0
    %2061 = vmatprep.subr.bf16.mxu0 0
    %2062 = vmatpush1.bf16.msra.mxu0 0
    %2063 = vmatprep.subr.bf16.mxu0 0
    %2064 = vmatpush1.bf16.msra.mxu0 0
    %2065 = vmatprep.subr.bf16.mxu0 0
    %2066 = vmatpush1.bf16.msra.mxu0 0
    %2067 = vmatprep.subr.bf16.mxu0 0
    %2068 = vmatpush1.bf16.msra.mxu0 0
    %2069 = vmatprep.subr.bf16.mxu0 0
    %2070 = vmatpush1.bf16.msra.mxu0 0
    %2071 = vmatprep.mubr.bf16.mxu0 0
    %2072 = vmatmul.mubr.bf16.gmra.mrb[0].mxu0 %v1912
    %v2073 = vpop.f32.mrb[0].mxu0
    %v2074 = vadd.f32 %v284, %v2073
    %v2075 = vpop.f32.mrb[0].mxu0
    %v2076 = vadd.f32 %v288, %v2075
    %v2077 = vpop.f32.mrb[0].mxu0
    %v2078 = vadd.f32 %v284, %v2077
    %v2079 = vpop.f32.mrb[0].mxu0
    %v2080 = vadd.f32 %v288, %v2079
    %2081 = vdwg.mxu0
    %2082 = vmatprep.subr.bf16.mxu0 0
    %2083 = vmatpush1.bf16.msra.mxu0 %v1190
    %2084 = vmatprep.subr.bf16.mxu0 0
    %2085 = vmatpush1.bf16.msra.mxu0 %v1193
    %2086 = vmatprep.subr.bf16.mxu0 0
    %2087 = vmatpush1.bf16.msra.mxu0 %v1196
    %2088 = vmatprep.subr.bf16.mxu0 0
    %2089 = vmatpush1.bf16.msra.mxu0 %v1199
    %2090 = vmatprep.subr.bf16.mxu0 0
    %2091 = vmatpush1.bf16.msra.mxu0 %v1202
    %2092 = vmatprep.subr.bf16.mxu0 0
    %2093 = vmatpush1.bf16.msra.mxu0 %v1205
    %2094 = vmatprep.subr.bf16.mxu0 0
    %2095 = vmatpush1.bf16.msra.mxu0 %v1208
    %2096 = vmatprep.subr.bf16.mxu0 0
    %2097 = vmatpush1.bf16.msra.mxu0 %v1211
    %2098 = vmatprep.subr.bf16.mxu0 0
    %2099 = vmatpush1.bf16.msra.mxu0 0
    %2100 = vmatprep.subr.bf16.mxu0 0
    %2101 = vmatpush1.bf16.msra.mxu0 0
    %2102 = vmatprep.subr.bf16.mxu0 0
    %2103 = vmatpush1.bf16.msra.mxu0 0
    %2104 = vmatprep.subr.bf16.mxu0 0
    %2105 = vmatpush1.bf16.msra.mxu0 0
    %2106 = vmatprep.subr.bf16.mxu0 0
    %2107 = vmatpush1.bf16.msra.mxu0 0
    %2108 = vmatprep.subr.bf16.mxu0 0
    %2109 = vmatpush1.bf16.msra.mxu0 0
    %2110 = vmatprep.subr.bf16.mxu0 0
    %2111 = vmatpush1.bf16.msra.mxu0 0
    %2112 = vmatprep.subr.bf16.mxu0 0
    %2113 = vmatpush1.bf16.msra.mxu0 0
    %2114 = vmatprep.mubr.bf16.mxu0 0
    %2115 = vmatmul.mubr.bf16.gmra.mrb[0].mxu0 %v1912
    %v2116 = vpop.f32.mrb[0].mxu0
    %v2117 = vadd.f32 %v292, %v2116
    %v2118 = vpop.f32.mrb[0].mxu0
    %v2119 = vpop.f32.mrb[0].mxu0
    %v2120 = vadd.f32 %v292, %v2119
    %v2121 = vpop.f32.mrb[0].mxu0
    %2122 = vdwg.mxu0
    %v2123 = vpack.c.bf16 %v1911, %v1910
    %2124 = vmatprep.subr.bf16.mxu0 %v1401
    %2125 = vmatpush1.bf16.msra.mxu0 %v1400
    %2126 = vmatprep.subr.bf16.mxu0 %v1404
    %2127 = vmatpush1.bf16.msra.mxu0 %v1403
    %2128 = vmatprep.subr.bf16.mxu0 %v1407
    %2129 = vmatpush1.bf16.msra.mxu0 %v1406
    %2130 = vmatprep.subr.bf16.mxu0 %v1410
    %2131 = vmatpush1.bf16.msra.mxu0 %v1409
    %2132 = vmatprep.subr.bf16.mxu0 %v1413
    %2133 = vmatpush1.bf16.msra.mxu0 %v1412
    %2134 = vmatprep.subr.bf16.mxu0 %v1416
    %2135 = vmatpush1.bf16.msra.mxu0 %v1415
    %2136 = vmatprep.subr.bf16.mxu0 %v1419
    %2137 = vmatpush1.bf16.msra.mxu0 %v1418
    %2138 = vmatprep.subr.bf16.mxu0 %v1422
    %2139 = vmatpush1.bf16.msra.mxu0 %v1421
    %2140 = vmatprep.subr.bf16.mxu0 0
    %2141 = vmatpush1.bf16.msra.mxu0 0
    %2142 = vmatprep.subr.bf16.mxu0 0
    %2143 = vmatpush1.bf16.msra.mxu0 0
    %2144 = vmatprep.subr.bf16.mxu0 0
    %2145 = vmatpush1.bf16.msra.mxu0 0
    %2146 = vmatprep.subr.bf16.mxu0 0
    %2147 = vmatpush1.bf16.msra.mxu0 0
    %2148 = vmatprep.subr.bf16.mxu0 0
    %2149 = vmatpush1.bf16.msra.mxu0 0
    %2150 = vmatprep.subr.bf16.mxu0 0
    %2151 = vmatpush1.bf16.msra.mxu0 0
    %2152 = vmatprep.subr.bf16.mxu0 0
    %2153 = vmatpush1.bf16.msra.mxu0 0
    %2154 = vmatprep.subr.bf16.mxu0 0
    %2155 = vmatpush1.bf16.msra.mxu0 0
    %2156 = vmatprep.mubr.bf16.mxu0 0
    %2157 = vmatmul.mubr.bf16.gmra.mrb[0].mxu0 %v2123
    %v2158 = vpop.f32.mrb[0].mxu0
    %v2159 = vadd.f32 0.0, %v2158
    %v2160 = vpop.f32.mrb[0].mxu0
    %v2161 = vadd.f32 0.0, %v2160
    %v2162 = vpop.f32.mrb[0].mxu0
    %v2163 = vadd.f32 0.0, %v2162
    %v2164 = vpop.f32.mrb[0].mxu0
    %v2165 = vadd.f32 0.0, %v2164
    %2166 = vdwg.mxu0
    %2167 = vmatprep.subr.bf16.mxu0 0
    %2168 = vmatpush1.bf16.msra.mxu0 %v1402
    %2169 = vmatprep.subr.bf16.mxu0 0
    %2170 = vmatpush1.bf16.msra.mxu0 %v1405
    %2171 = vmatprep.subr.bf16.mxu0 0
    %2172 = vmatpush1.bf16.msra.mxu0 %v1408
    %2173 = vmatprep.subr.bf16.mxu0 0
    %2174 = vmatpush1.bf16.msra.mxu0 %v1411
    %2175 = vmatprep.subr.bf16.mxu0 0
    %2176 = vmatpush1.bf16.msra.mxu0 %v1414
    %2177 = vmatprep.subr.bf16.mxu0 0
    %2178 = vmatpush1.bf16.msra.mxu0 %v1417
    %2179 = vmatprep.subr.bf16.mxu0 0
    %2180 = vmatpush1.bf16.msra.mxu0 %v1420
    %2181 = vmatprep.subr.bf16.mxu0 0
    %2182 = vmatpush1.bf16.msra.mxu0 %v1423
    %2183 = vmatprep.subr.bf16.mxu0 0
    %2184 = vmatpush1.bf16.msra.mxu0 0
    %2185 = vmatprep.subr.bf16.mxu0 0
    %2186 = vmatpush1.bf16.msra.mxu0 0
    %2187 = vmatprep.subr.bf16.mxu0 0
    %2188 = vmatpush1.bf16.msra.mxu0 0
    %2189 = vmatprep.subr.bf16.mxu0 0
    %2190 = vmatpush1.bf16.msra.mxu0 0
    %2191 = vmatprep.subr.bf16.mxu0 0
    %2192 = vmatpush1.bf16.msra.mxu0 0
    %2193 = vmatprep.subr.bf16.mxu0 0
    %2194 = vmatpush1.bf16.msra.mxu0 0
    %2195 = vmatprep.subr.bf16.mxu0 0
    %2196 = vmatpush1.bf16.msra.mxu0 0
    %2197 = vmatprep.subr.bf16.mxu0 0
    %2198 = vmatpush1.bf16.msra.mxu0 0
    %2199 = vmatprep.mubr.bf16.mxu0 0
    %2200 = vmatmul.mubr.bf16.gmra.mrb[0].mxu0 %v2123
    %v2201 = vpop.f32.mrb[0].mxu0
    %v2202 = vadd.f32 0.0, %v2201
    %v2203 = vpop.f32.mrb[0].mxu0
    %v2204 = vpop.f32.mrb[0].mxu0
    %v2205 = vadd.f32 0.0, %v2204
    %v2206 = vpop.f32.mrb[0].mxu0
    %2207 = vdwg.mxu0
    %v2208 = vadd.f32 %v2074, %v2159
    %v2209 = vadd.f32 %v2078, %v2163
    %v2210 = vxor.u32 %v2208, 2147483648
    %v2211 = vxor.u32 %v2209, 2147483648
    %v2212 = vmul.f32 %v2210, 1.442695
    %v2213 = vpow.pop %v2212
    %v2214 = vmul.f32 %v2211, 1.442695
    %v2215 = vpow.pop %v2214
    %v2216 = vadd.f32 %v2213, 1.0
    %v2217 = vadd.f32 %v2215, 1.0
    %v2218 = vrcp.pop %v2216
    %v2219 = vmul.f32 1.0, %v2218
    %v2220 = vrcp.pop %v2217
    %v2221 = vmul.f32 1.0, %v2220
    %v2222 = vadd.f32 %v2076, %v2161
    %v2223 = vadd.f32 %v2080, %v2165
    %v2224 = vxor.u32 %v2222, 2147483648
    %v2225 = vxor.u32 %v2223, 2147483648
    %v2226 = vmul.f32 %v2224, 1.442695
    %v2227 = vpow.pop %v2226
    %v2228 = vmul.f32 %v2225, 1.442695
    %v2229 = vpow.pop %v2228
    %v2230 = vadd.f32 %v2227, 1.0
    %v2231 = vadd.f32 %v2229, 1.0
    %v2232 = vrcp.pop %v2230
    %v2233 = vmul.f32 1.0, %v2232
    %v2234 = vrcp.pop %v2231
    %v2235 = vmul.f32 1.0, %v2234
    %v2236 = vmul.f32 %v2219, %v2202
    %v2237 = vmul.f32 %v2221, %v2205
    %v2238 = vadd.f32 %v2117, %v2236
    %v2239 = vadd.f32 %v2120, %v2237
    %v2240 = vtanh.pop %v2238
    %v2241 = vtanh.pop %v2239
    %v2242 = vsub.f32 1.0, %v2233
    %v2243 = vsub.f32 1.0, %v2235
    %v2244 = vmul.f32 %v2242, %v2240
    %v2245 = vmul.f32 %v2243, %v2241
    %v2246 = vmul.f32 %v2233, %v1910
    %v2247 = vmul.f32 %v2235, %v1911
    %v2248 = vadd.f32 %v2244, %v2246
    %v2249 = vadd.f32 %v2245, %v2247
    %v2250 = vpack.c.bf16 %v2038, %v2037
    %2251 = vmatprep.subr.bf16.mxu0 %v808
    %2252 = vmatpush1.bf16.msra.mxu0 %v807
    %2253 = vmatprep.subr.bf16.mxu0 %v811
    %2254 = vmatpush1.bf16.msra.mxu0 %v810
    %2255 = vmatprep.subr.bf16.mxu0 %v814
    %2256 = vmatpush1.bf16.msra.mxu0 %v813
    %2257 = vmatprep.subr.bf16.mxu0 %v817
    %2258 = vmatpush1.bf16.msra.mxu0 %v816
    %2259 = vmatprep.subr.bf16.mxu0 %v820
    %2260 = vmatpush1.bf16.msra.mxu0 %v819
    %2261 = vmatprep.subr.bf16.mxu0 %v823
    %2262 = vmatpush1.bf16.msra.mxu0 %v822
    %2263 = vmatprep.subr.bf16.mxu0 %v826
    %2264 = vmatpush1.bf16.msra.mxu0 %v825
    %2265 = vmatprep.subr.bf16.mxu0 %v829
    %2266 = vmatpush1.bf16.msra.mxu0 %v828
    %2267 = vmatprep.subr.bf16.mxu0 0
    %2268 = vmatpush1.bf16.msra.mxu0 0
    %2269 = vmatprep.subr.bf16.mxu0 0
    %2270 = vmatpush1.bf16.msra.mxu0 0
    %2271 = vmatprep.subr.bf16.mxu0 0
    %2272 = vmatpush1.bf16.msra.mxu0 0
    %2273 = vmatprep.subr.bf16.mxu0 0
    %2274 = vmatpush1.bf16.msra.mxu0 0
    %2275 = vmatprep.subr.bf16.mxu0 0
    %2276 = vmatpush1.bf16.msra.mxu0 0
    %2277 = vmatprep.subr.bf16.mxu0 0
    %2278 = vmatpush1.bf16.msra.mxu0 0
    %2279 = vmatprep.subr.bf16.mxu0 0
    %2280 = vmatpush1.bf16.msra.mxu0 0
    %2281 = vmatprep.subr.bf16.mxu0 0
    %2282 = vmatpush1.bf16.msra.mxu0 0
    %2283 = vmatprep.mubr.bf16.mxu0 0
    %2284 = vmatmul.mubr.bf16.gmra.mrb[0].mxu0 %v2250
    %v2285 = vpop.f32.mrb[0].mxu0
    %v2286 = vadd.f32 0.0, %v2285
    %v2287 = vpop.f32.mrb[0].mxu0
    %v2288 = vadd.f32 0.0, %v2287
    %v2289 = vpop.f32.mrb[0].mxu0
    %v2290 = vadd.f32 0.0, %v2289
    %v2291 = vpop.f32.mrb[0].mxu0
    %v2292 = vadd.f32 0.0, %v2291
    %2293 = vdwg.mxu0
    %2294 = vmatprep.subr.bf16.mxu0 0
    %2295 = vmatpush1.bf16.msra.mxu0 %v809
    %2296 = vmatprep.subr.bf16.mxu0 0
    %2297 = vmatpush1.bf16.msra.mxu0 %v812
    %2298 = vmatprep.subr.bf16.mxu0 0
    %2299 = vmatpush1.bf16.msra.mxu0 %v815
    %2300 = vmatprep.subr.bf16.mxu0 0
    %2301 = vmatpush1.bf16.msra.mxu0 %v818
    %2302 = vmatprep.subr.bf16.mxu0 0
    %2303 = vmatpush1.bf16.msra.mxu0 %v821
    %2304 = vmatprep.subr.bf16.mxu0 0
    %2305 = vmatpush1.bf16.msra.mxu0 %v824
    %2306 = vmatprep.subr.bf16.mxu0 0
    %2307 = vmatpush1.bf16.msra.mxu0 %v827
    %2308 = vmatprep.subr.bf16.mxu0 0
    %2309 = vmatpush1.bf16.msra.mxu0 %v830
    %2310 = vmatprep.subr.bf16.mxu0 0
    %2311 = vmatpush1.bf16.msra.mxu0 0
    %2312 = vmatprep.subr.bf16.mxu0 0
    %2313 = vmatpush1.bf16.msra.mxu0 0
    %2314 = vmatprep.subr.bf16.mxu0 0
    %2315 = vmatpush1.bf16.msra.mxu0 0
    %2316 = vmatprep.subr.bf16.mxu0 0
    %2317 = vmatpush1.bf16.msra.mxu0 0
    %2318 = vmatprep.subr.bf16.mxu0 0
    %2319 = vmatpush1.bf16.msra.mxu0 0
    %2320 = vmatprep.subr.bf16.mxu0 0
    %2321 = vmatpush1.bf16.msra.mxu0 0
    %2322 = vmatprep.subr.bf16.mxu0 0
    %2323 = vmatpush1.bf16.msra.mxu0 0
    %2324 = vmatprep.subr.bf16.mxu0 0
    %2325 = vmatpush1.bf16.msra.mxu0 0
    %2326 = vmatprep.mubr.bf16.mxu0 0
    %2327 = vmatmul.mubr.bf16.gmra.mrb[0].mxu0 %v2250
    %v2328 = vpop.f32.mrb[0].mxu0
    %v2329 = vadd.f32 0.0, %v2328
    %v2330 = vpop.f32.mrb[0].mxu0
    %v2331 = vpop.f32.mrb[0].mxu0
    %v2332 = vadd.f32 0.0, %v2331
    %v2333 = vpop.f32.mrb[0].mxu0
    %2334 = vdwg.mxu0
    %v2335 = vadd.f32 %v698, %v2286
    %v2336 = vadd.f32 %v701, %v2290
    %v2337 = vxor.u32 %v2335, 2147483648
    %v2338 = vxor.u32 %v2336, 2147483648
    %v2339 = vmul.f32 %v2337, 1.442695
    %v2340 = vpow.pop %v2339
    %v2341 = vmul.f32 %v2338, 1.442695
    %v2342 = vpow.pop %v2341
    %v2343 = vadd.f32 %v2340, 1.0
    %v2344 = vadd.f32 %v2342, 1.0
    %v2345 = vrcp.pop %v2343
    %v2346 = vmul.f32 1.0, %v2345
    %v2347 = vrcp.pop %v2344
    %v2348 = vmul.f32 1.0, %v2347
    %v2349 = vadd.f32 %v699, %v2288
    %v2350 = vadd.f32 %v702, %v2292
    %v2351 = vxor.u32 %v2349, 2147483648
    %v2352 = vxor.u32 %v2350, 2147483648
    %v2353 = vmul.f32 %v2351, 1.442695
    %v2354 = vpow.pop %v2353
    %v2355 = vmul.f32 %v2352, 1.442695
    %v2356 = vpow.pop %v2355
    %v2357 = vadd.f32 %v2354, 1.0
    %v2358 = vadd.f32 %v2356, 1.0
    %v2359 = vrcp.pop %v2357
    %v2360 = vmul.f32 1.0, %v2359
    %v2361 = vrcp.pop %v2358
    %v2362 = vmul.f32 1.0, %v2361
    %v2363 = vmul.f32 %v2346, %v2329
    %v2364 = vmul.f32 %v2348, %v2332
    %v2365 = vadd.f32 %v700, %v2363
    %v2366 = vadd.f32 %v703, %v2364
    %v2367 = vtanh.pop %v2365
    %v2368 = vtanh.pop %v2366
    %v2369 = vsub.f32 1.0, %v2360
    %v2370 = vsub.f32 1.0, %v2362
    %v2371 = vmul.f32 %v2369, %v2367
    %v2372 = vmul.f32 %v2370, %v2368
    %v2373 = vmul.f32 %v2360, %v2037
    %v2374 = vmul.f32 %v2362, %v2038
    %v2375 = vadd.f32 %v2371, %v2373
    %v2376 = vadd.f32 %v2372, %v2374
    %2377 = vmatprep.subr.bf16.mxu0 %v1189
    %2378 = vmatpush1.bf16.msra.mxu0 %v1188
    %2379 = vmatprep.subr.bf16.mxu0 %v1192
    %2380 = vmatpush1.bf16.msra.mxu0 %v1191
    %2381 = vmatprep.subr.bf16.mxu0 %v1195
    %2382 = vmatpush1.bf16.msra.mxu0 %v1194
    %2383 = vmatprep.subr.bf16.mxu0 %v1198
    %2384 = vmatpush1.bf16.msra.mxu0 %v1197
    %2385 = vmatprep.subr.bf16.mxu0 %v1201
    %2386 = vmatpush1.bf16.msra.mxu0 %v1200
    %2387 = vmatprep.subr.bf16.mxu0 %v1204
    %2388 = vmatpush1.bf16.msra.mxu0 %v1203
    %2389 = vmatprep.subr.bf16.mxu0 %v1207
    %2390 = vmatpush1.bf16.msra.mxu0 %v1206
    %2391 = vmatprep.subr.bf16.mxu0 %v1210
    %2392 = vmatpush1.bf16.msra.mxu0 %v1209
    %2393 = vmatprep.subr.bf16.mxu0 0
    %2394 = vmatpush1.bf16.msra.mxu0 0
    %2395 = vmatprep.subr.bf16.mxu0 0
    %2396 = vmatpush1.bf16.msra.mxu0 0
    %2397 = vmatprep.subr.bf16.mxu0 0
    %2398 = vmatpush1.bf16.msra.mxu0 0
    %2399 = vmatprep.subr.bf16.mxu0 0
    %2400 = vmatpush1.bf16.msra.mxu0 0
    %2401 = vmatprep.subr.bf16.mxu0 0
    %2402 = vmatpush1.bf16.msra.mxu0 0
    %2403 = vmatprep.subr.bf16.mxu0 0
    %2404 = vmatpush1.bf16.msra.mxu0 0
    %2405 = vmatprep.subr.bf16.mxu0 0
    %2406 = vmatpush1.bf16.msra.mxu0 0
    %2407 = vmatprep.subr.bf16.mxu0 0
    %2408 = vmatpush1.bf16.msra.mxu0 0
    %2409 = vmatprep.mubr.bf16.mxu0 0
    %2410 = vmatmul.mubr.bf16.gmra.mrb[0].mxu0 %v2250
    %v2411 = vpop.f32.mrb[0].mxu0
    %v2412 = vadd.f32 %v284, %v2411
    %v2413 = vpop.f32.mrb[0].mxu0
    %v2414 = vadd.f32 %v288, %v2413
    %v2415 = vpop.f32.mrb[0].mxu0
    %v2416 = vadd.f32 %v284, %v2415
    %v2417 = vpop.f32.mrb[0].mxu0
    %v2418 = vadd.f32 %v288, %v2417
    %2419 = vdwg.mxu0
    %2420 = vmatprep.subr.bf16.mxu0 0
    %2421 = vmatpush1.bf16.msra.mxu0 %v1190
    %2422 = vmatprep.subr.bf16.mxu0 0
    %2423 = vmatpush1.bf16.msra.mxu0 %v1193
    %2424 = vmatprep.subr.bf16.mxu0 0
    %2425 = vmatpush1.bf16.msra.mxu0 %v1196
    %2426 = vmatprep.subr.bf16.mxu0 0
    %2427 = vmatpush1.bf16.msra.mxu0 %v1199
    %2428 = vmatprep.subr.bf16.mxu0 0
    %2429 = vmatpush1.bf16.msra.mxu0 %v1202
    %2430 = vmatprep.subr.bf16.mxu0 0
    %2431 = vmatpush1.bf16.msra.mxu0 %v1205
    %2432 = vmatprep.subr.bf16.mxu0 0
    %2433 = vmatpush1.bf16.msra.mxu0 %v1208
    %2434 = vmatprep.subr.bf16.mxu0 0
    %2435 = vmatpush1.bf16.msra.mxu0 %v1211
    %2436 = vmatprep.subr.bf16.mxu0 0
    %2437 = vmatpush1.bf16.msra.mxu0 0
    %2438 = vmatprep.subr.bf16.mxu0 0
    %2439 = vmatpush1.bf16.msra.mxu0 0
    %2440 = vmatprep.subr.bf16.mxu0 0
    %2441 = vmatpush1.bf16.msra.mxu0 0
    %2442 = vmatprep.subr.bf16.mxu0 0
    %2443 = vmatpush1.bf16.msra.mxu0 0
    %2444 = vmatprep.subr.bf16.mxu0 0
    %2445 = vmatpush1.bf16.msra.mxu0 0
    %2446 = vmatprep.subr.bf16.mxu0 0
    %2447 = vmatpush1.bf16.msra.mxu0 0
    %2448 = vmatprep.subr.bf16.mxu0 0
    %2449 = vmatpush1.bf16.msra.mxu0 0
    %2450 = vmatprep.subr.bf16.mxu0 0
    %2451 = vmatpush1.bf16.msra.mxu0 0
    %2452 = vmatprep.mubr.bf16.mxu0 0
    %2453 = vmatmul.mubr.bf16.gmra.mrb[0].mxu0 %v2250
    %v2454 = vpop.f32.mrb[0].mxu0
    %v2455 = vadd.f32 %v292, %v2454
    %v2456 = vpop.f32.mrb[0].mxu0
    %v2457 = vpop.f32.mrb[0].mxu0
    %v2458 = vadd.f32 %v292, %v2457
    %v2459 = vpop.f32.mrb[0].mxu0
    %2460 = vdwg.mxu0
    %v2461 = vpack.c.bf16 %v2249, %v2248
    %2462 = vmatprep.subr.bf16.mxu0 %v1401
    %2463 = vmatpush1.bf16.msra.mxu0 %v1400
    %2464 = vmatprep.subr.bf16.mxu0 %v1404
    %2465 = vmatpush1.bf16.msra.mxu0 %v1403
    %2466 = vmatprep.subr.bf16.mxu0 %v1407
    %2467 = vmatpush1.bf16.msra.mxu0 %v1406
    %2468 = vmatprep.subr.bf16.mxu0 %v1410
    %2469 = vmatpush1.bf16.msra.mxu0 %v1409
    %2470 = vmatprep.subr.bf16.mxu0 %v1413
    %2471 = vmatpush1.bf16.msra.mxu0 %v1412
    %2472 = vmatprep.subr.bf16.mxu0 %v1416
    %2473 = vmatpush1.bf16.msra.mxu0 %v1415
    %2474 = vmatprep.subr.bf16.mxu0 %v1419
    %2475 = vmatpush1.bf16.msra.mxu0 %v1418
    %2476 = vmatprep.subr.bf16.mxu0 %v1422
    %2477 = vmatpush1.bf16.msra.mxu0 %v1421
    %2478 = vmatprep.subr.bf16.mxu0 0
    %2479 = vmatpush1.bf16.msra.mxu0 0
    %2480 = vmatprep.subr.bf16.mxu0 0
    %2481 = vmatpush1.bf16.msra.mxu0 0
    %2482 = vmatprep.subr.bf16.mxu0 0
    %2483 = vmatpush1.bf16.msra.mxu0 0
    %2484 = vmatprep.subr.bf16.mxu0 0
    %2485 = vmatpush1.bf16.msra.mxu0 0
    %2486 = vmatprep.subr.bf16.mxu0 0
    %2487 = vmatpush1.bf16.msra.mxu0 0
    %2488 = vmatprep.subr.bf16.mxu0 0
    %2489 = vmatpush1.bf16.msra.mxu0 0
    %2490 = vmatprep.subr.bf16.mxu0 0
    %2491 = vmatpush1.bf16.msra.mxu0 0
    %2492 = vmatprep.subr.bf16.mxu0 0
    %2493 = vmatpush1.bf16.msra.mxu0 0
    %2494 = vmatprep.mubr.bf16.mxu0 0
    %2495 = vmatmul.mubr.bf16.gmra.mrb[0].mxu0 %v2461
    %v2496 = vpop.f32.mrb[0].mxu0
    %v2497 = vadd.f32 0.0, %v2496
    %v2498 = vpop.f32.mrb[0].mxu0
    %v2499 = vadd.f32 0.0, %v2498
    %v2500 = vpop.f32.mrb[0].mxu0
    %v2501 = vadd.f32 0.0, %v2500
    %v2502 = vpop.f32.mrb[0].mxu0
    %v2503 = vadd.f32 0.0, %v2502
    %2504 = vdwg.mxu0
    %2505 = vmatprep.subr.bf16.mxu0 0
    %2506 = vmatpush1.bf16.msra.mxu0 %v1402
    %2507 = vmatprep.subr.bf16.mxu0 0
    %2508 = vmatpush1.bf16.msra.mxu0 %v1405
    %2509 = vmatprep.subr.bf16.mxu0 0
    %2510 = vmatpush1.bf16.msra.mxu0 %v1408
    %2511 = vmatprep.subr.bf16.mxu0 0
    %2512 = vmatpush1.bf16.msra.mxu0 %v1411
    %2513 = vmatprep.subr.bf16.mxu0 0
    %2514 = vmatpush1.bf16.msra.mxu0 %v1414
    %2515 = vmatprep.subr.bf16.mxu0 0
    %2516 = vmatpush1.bf16.msra.mxu0 %v1417
    %2517 = vmatprep.subr.bf16.mxu0 0
    %2518 = vmatpush1.bf16.msra.mxu0 %v1420
    %2519 = vmatprep.subr.bf16.mxu0 0
    %2520 = vmatpush1.bf16.msra.mxu0 %v1423
    %2521 = vmatprep.subr.bf16.mxu0 0
    %2522 = vmatpush1.bf16.msra.mxu0 0
    %2523 = vmatprep.subr.bf16.mxu0 0
    %2524 = vmatpush1.bf16.msra.mxu0 0
    %2525 = vmatprep.subr.bf16.mxu0 0
    %2526 = vmatpush1.bf16.msra.mxu0 0
    %2527 = vmatprep.subr.bf16.mxu0 0
    %2528 = vmatpush1.bf16.msra.mxu0 0
    %2529 = vmatprep.subr.bf16.mxu0 0
    %2530 = vmatpush1.bf16.msra.mxu0 0
    %2531 = vmatprep.subr.bf16.mxu0 0
    %2532 = vmatpush1.bf16.msra.mxu0 0
    %2533 = vmatprep.subr.bf16.mxu0 0
    %2534 = vmatpush1.bf16.msra.mxu0 0
    %2535 = vmatprep.subr.bf16.mxu0 0
    %2536 = vmatpush1.bf16.msra.mxu0 0
    %2537 = vmatprep.mubr.bf16.mxu0 0
    %2538 = vmatmul.mubr.bf16.gmra.mrb[0].mxu0 %v2461
    %v2539 = vpop.f32.mrb[0].mxu0
    %v2540 = vadd.f32 0.0, %v2539
    %v2541 = vpop.f32.mrb[0].mxu0
    %v2542 = vpop.f32.mrb[0].mxu0
    %v2543 = vadd.f32 0.0, %v2542
    %v2544 = vpop.f32.mrb[0].mxu0
    %2545 = vdwg.mxu0
    %v2546 = vadd.f32 %v2412, %v2497
    %v2547 = vadd.f32 %v2416, %v2501
    %v2548 = vxor.u32 %v2546, 2147483648
    %v2549 = vxor.u32 %v2547, 2147483648
    %v2550 = vmul.f32 %v2548, 1.442695
    %v2551 = vpow.pop %v2550
    %v2552 = vmul.f32 %v2549, 1.442695
    %v2553 = vpow.pop %v2552
    %v2554 = vadd.f32 %v2551, 1.0
    %v2555 = vadd.f32 %v2553, 1.0
    %v2556 = vrcp.pop %v2554
    %v2557 = vmul.f32 1.0, %v2556
    %v2558 = vrcp.pop %v2555
    %v2559 = vmul.f32 1.0, %v2558
    %v2560 = vadd.f32 %v2414, %v2499
    %v2561 = vadd.f32 %v2418, %v2503
    %v2562 = vxor.u32 %v2560, 2147483648
    %v2563 = vxor.u32 %v2561, 2147483648
    %v2564 = vmul.f32 %v2562, 1.442695
    %v2565 = vpow.pop %v2564
    %v2566 = vmul.f32 %v2563, 1.442695
    %v2567 = vpow.pop %v2566
    %v2568 = vadd.f32 %v2565, 1.0
    %v2569 = vadd.f32 %v2567, 1.0
    %v2570 = vrcp.pop %v2568
    %v2571 = vmul.f32 1.0, %v2570
    %v2572 = vrcp.pop %v2569
    %v2573 = vmul.f32 1.0, %v2572
    %v2574 = vmul.f32 %v2557, %v2540
    %v2575 = vmul.f32 %v2559, %v2543
    %v2576 = vadd.f32 %v2455, %v2574
    %v2577 = vadd.f32 %v2458, %v2575
    %v2578 = vtanh.pop %v2576
    %v2579 = vtanh.pop %v2577
    %v2580 = vsub.f32 1.0, %v2571
    %v2581 = vsub.f32 1.0, %v2573
    %v2582 = vmul.f32 %v2580, %v2578
    %v2583 = vmul.f32 %v2581, %v2579
    %v2584 = vmul.f32 %v2571, %v2248
    %v2585 = vmul.f32 %v2573, %v2249
    %v2586 = vadd.f32 %v2582, %v2584
    %v2587 = vadd.f32 %v2583, %v2585
    %v2588 = vpack.c.bf16 %v2376, %v2375
    %2589 = vmatprep.subr.bf16.mxu0 %v808
    %2590 = vmatpush1.bf16.msra.mxu0 %v807
    %2591 = vmatprep.subr.bf16.mxu0 %v811
    %2592 = vmatpush1.bf16.msra.mxu0 %v810
    %2593 = vmatprep.subr.bf16.mxu0 %v814
    %2594 = vmatpush1.bf16.msra.mxu0 %v813
    %2595 = vmatprep.subr.bf16.mxu0 %v817
    %2596 = vmatpush1.bf16.msra.mxu0 %v816
    %2597 = vmatprep.subr.bf16.mxu0 %v820
    %2598 = vmatpush1.bf16.msra.mxu0 %v819
    %2599 = vmatprep.subr.bf16.mxu0 %v823
    %2600 = vmatpush1.bf16.msra.mxu0 %v822
    %2601 = vmatprep.subr.bf16.mxu0 %v826
    %2602 = vmatpush1.bf16.msra.mxu0 %v825
    %2603 = vmatprep.subr.bf16.mxu0 %v829
    %2604 = vmatpush1.bf16.msra.mxu0 %v828
    %2605 = vmatprep.subr.bf16.mxu0 0
    %2606 = vmatpush1.bf16.msra.mxu0 0
    %2607 = vmatprep.subr.bf16.mxu0 0
    %2608 = vmatpush1.bf16.msra.mxu0 0
    %2609 = vmatprep.subr.bf16.mxu0 0
    %2610 = vmatpush1.bf16.msra.mxu0 0
    %2611 = vmatprep.subr.bf16.mxu0 0
    %2612 = vmatpush1.bf16.msra.mxu0 0
    %2613 = vmatprep.subr.bf16.mxu0 0
    %2614 = vmatpush1.bf16.msra.mxu0 0
    %2615 = vmatprep.subr.bf16.mxu0 0
    %2616 = vmatpush1.bf16.msra.mxu0 0
    %2617 = vmatprep.subr.bf16.mxu0 0
    %2618 = vmatpush1.bf16.msra.mxu0 0
    %2619 = vmatprep.subr.bf16.mxu0 0
    %2620 = vmatpush1.bf16.msra.mxu0 0
    %2621 = vmatprep.mubr.bf16.mxu0 0
    %2622 = vmatmul.mubr.bf16.gmra.mrb[0].mxu0 %v2588
    %v2623 = vpop.f32.mrb[0].mxu0
    %v2624 = vadd.f32 0.0, %v2623
    %v2625 = vpop.f32.mrb[0].mxu0
    %v2626 = vadd.f32 0.0, %v2625
    %v2627 = vpop.f32.mrb[0].mxu0
    %v2628 = vadd.f32 0.0, %v2627
    %v2629 = vpop.f32.mrb[0].mxu0
    %v2630 = vadd.f32 0.0, %v2629
    %2631 = vdwg.mxu0
    %2632 = vmatprep.subr.bf16.mxu0 0
    %2633 = vmatpush1.bf16.msra.mxu0 %v809
    %2634 = vmatprep.subr.bf16.mxu0 0
    %2635 = vmatpush1.bf16.msra.mxu0 %v812
    %2636 = vmatprep.subr.bf16.mxu0 0
    %2637 = vmatpush1.bf16.msra.mxu0 %v815
    %2638 = vmatprep.subr.bf16.mxu0 0
    %2639 = vmatpush1.bf16.msra.mxu0 %v818
    %2640 = vmatprep.subr.bf16.mxu0 0
    %2641 = vmatpush1.bf16.msra.mxu0 %v821
    %2642 = vmatprep.subr.bf16.mxu0 0
    %2643 = vmatpush1.bf16.msra.mxu0 %v824
    %2644 = vmatprep.subr.bf16.mxu0 0
    %2645 = vmatpush1.bf16.msra.mxu0 %v827
    %2646 = vmatprep.subr.bf16.mxu0 0
    %2647 = vmatpush1.bf16.msra.mxu0 %v830
    %2648 = vmatprep.subr.bf16.mxu0 0
    %2649 = vmatpush1.bf16.msra.mxu0 0
    %2650 = vmatprep.subr.bf16.mxu0 0
    %2651 = vmatpush1.bf16.msra.mxu0 0
    %2652 = vmatprep.subr.bf16.mxu0 0
    %2653 = vmatpush1.bf16.msra.mxu0 0
    %2654 = vmatprep.subr.bf16.mxu0 0
    %2655 = vmatpush1.bf16.msra.mxu0 0
    %2656 = vmatprep.subr.bf16.mxu0 0
    %2657 = vmatpush1.bf16.msra.mxu0 0
    %2658 = vmatprep.subr.bf16.mxu0 0
    %2659 = vmatpush1.bf16.msra.mxu0 0
    %2660 = vmatprep.subr.bf16.mxu0 0
    %2661 = vmatpush1.bf16.msra.mxu0 0
    %2662 = vmatprep.subr.bf16.mxu0 0
    %2663 = vmatpush1.bf16.msra.mxu0 0
    %2664 = vmatprep.mubr.bf16.mxu0 0
    %2665 = vmatmul.mubr.bf16.gmra.mrb[0].mxu0 %v2588
    %v2666 = vpop.f32.mrb[0].mxu0
    %v2667 = vadd.f32 0.0, %v2666
    %v2668 = vpop.f32.mrb[0].mxu0
    %v2669 = vpop.f32.mrb[0].mxu0
    %v2670 = vadd.f32 0.0, %v2669
    %v2671 = vpop.f32.mrb[0].mxu0
    %2672 = vdwg.mxu0
    %v2673 = vadd.f32 %v704, %v2624
    %v2674 = vadd.f32 %v707, %v2628
    %v2675 = vxor.u32 %v2673, 2147483648
    %v2676 = vxor.u32 %v2674, 2147483648
    %v2677 = vmul.f32 %v2675, 1.442695
    %v2678 = vpow.pop %v2677
    %v2679 = vmul.f32 %v2676, 1.442695
    %v2680 = vpow.pop %v2679
    %v2681 = vadd.f32 %v2678, 1.0
    %v2682 = vadd.f32 %v2680, 1.0
    %v2683 = vrcp.pop %v2681
    %v2684 = vmul.f32 1.0, %v2683
    %v2685 = vrcp.pop %v2682
    %v2686 = vmul.f32 1.0, %v2685
    %v2687 = vadd.f32 %v705, %v2626
    %v2688 = vadd.f32 %v708, %v2630
    %v2689 = vxor.u32 %v2687, 2147483648
    %v2690 = vxor.u32 %v2688, 2147483648
    %v2691 = vmul.f32 %v2689, 1.442695
    %v2692 = vpow.pop %v2691
    %v2693 = vmul.f32 %v2690, 1.442695
    %v2694 = vpow.pop %v2693
    %v2695 = vadd.f32 %v2692, 1.0
    %v2696 = vadd.f32 %v2694, 1.0
    %v2697 = vrcp.pop %v2695
    %v2698 = vmul.f32 1.0, %v2697
    %v2699 = vrcp.pop %v2696
    %v2700 = vmul.f32 1.0, %v2699
    %v2701 = vmul.f32 %v2684, %v2667
    %v2702 = vmul.f32 %v2686, %v2670
    %v2703 = vadd.f32 %v706, %v2701
    %v2704 = vadd.f32 %v709, %v2702
    %v2705 = vtanh.pop %v2703
    %v2706 = vtanh.pop %v2704
    %v2707 = vsub.f32 1.0, %v2698
    %v2708 = vsub.f32 1.0, %v2700
    %v2709 = vmul.f32 %v2707, %v2705
    %v2710 = vmul.f32 %v2708, %v2706
    %v2711 = vmul.f32 %v2698, %v2375
    %v2712 = vmul.f32 %v2700, %v2376
    %v2713 = vadd.f32 %v2709, %v2711
    %v2714 = vadd.f32 %v2710, %v2712
    %2715 = vmatprep.subr.bf16.mxu0 %v1189
    %2716 = vmatpush1.bf16.msra.mxu0 %v1188
    %2717 = vmatprep.subr.bf16.mxu0 %v1192
    %2718 = vmatpush1.bf16.msra.mxu0 %v1191
    %2719 = vmatprep.subr.bf16.mxu0 %v1195
    %2720 = vmatpush1.bf16.msra.mxu0 %v1194
    %2721 = vmatprep.subr.bf16.mxu0 %v1198
    %2722 = vmatpush1.bf16.msra.mxu0 %v1197
    %2723 = vmatprep.subr.bf16.mxu0 %v1201
    %2724 = vmatpush1.bf16.msra.mxu0 %v1200
    %2725 = vmatprep.subr.bf16.mxu0 %v1204
    %2726 = vmatpush1.bf16.msra.mxu0 %v1203
    %2727 = vmatprep.subr.bf16.mxu0 %v1207
    %2728 = vmatpush1.bf16.msra.mxu0 %v1206
    %2729 = vmatprep.subr.bf16.mxu0 %v1210
    %2730 = vmatpush1.bf16.msra.mxu0 %v1209
    %2731 = vmatprep.subr.bf16.mxu0 0
    %2732 = vmatpush1.bf16.msra.mxu0 0
    %2733 = vmatprep.subr.bf16.mxu0 0
    %2734 = vmatpush1.bf16.msra.mxu0 0
    %2735 = vmatprep.subr.bf16.mxu0 0
    %2736 = vmatpush1.bf16.msra.mxu0 0
    %2737 = vmatprep.subr.bf16.mxu0 0
    %2738 = vmatpush1.bf16.msra.mxu0 0
    %2739 = vmatprep.subr.bf16.mxu0 0
    %2740 = vmatpush1.bf16.msra.mxu0 0
    %2741 = vmatprep.subr.bf16.mxu0 0
    %2742 = vmatpush1.bf16.msra.mxu0 0
    %2743 = vmatprep.subr.bf16.mxu0 0
    %2744 = vmatpush1.bf16.msra.mxu0 0
    %2745 = vmatprep.subr.bf16.mxu0 0
    %2746 = vmatpush1.bf16.msra.mxu0 0
    %2747 = vmatprep.mubr.bf16.mxu0 0
    %2748 = vmatmul.mubr.bf16.gmra.mrb[0].mxu0 %v2588
    %v2749 = vpop.f32.mrb[0].mxu0
    %v2750 = vadd.f32 %v284, %v2749
    %v2751 = vpop.f32.mrb[0].mxu0
    %v2752 = vadd.f32 %v288, %v2751
    %v2753 = vpop.f32.mrb[0].mxu0
    %v2754 = vadd.f32 %v284, %v2753
    %v2755 = vpop.f32.mrb[0].mxu0
    %v2756 = vadd.f32 %v288, %v2755
    %2757 = vdwg.mxu0
    %2758 = vmatprep.subr.bf16.mxu0 0
    %2759 = vmatpush1.bf16.msra.mxu0 %v1190
    %2760 = vmatprep.subr.bf16.mxu0 0
    %2761 = vmatpush1.bf16.msra.mxu0 %v1193
    %2762 = vmatprep.subr.bf16.mxu0 0
    %2763 = vmatpush1.bf16.msra.mxu0 %v1196
    %2764 = vmatprep.subr.bf16.mxu0 0
    %2765 = vmatpush1.bf16.msra.mxu0 %v1199
    %2766 = vmatprep.subr.bf16.mxu0 0
    %2767 = vmatpush1.bf16.msra.mxu0 %v1202
    %2768 = vmatprep.subr.bf16.mxu0 0
    %2769 = vmatpush1.bf16.msra.mxu0 %v1205
    %2770 = vmatprep.subr.bf16.mxu0 0
    %2771 = vmatpush1.bf16.msra.mxu0 %v1208
    %2772 = vmatprep.subr.bf16.mxu0 0
    %2773 = vmatpush1.bf16.msra.mxu0 %v1211
    %2774 = vmatprep.subr.bf16.mxu0 0
    %2775 = vmatpush1.bf16.msra.mxu0 0
    %2776 = vmatprep.subr.bf16.mxu0 0
    %2777 = vmatpush1.bf16.msra.mxu0 0
    %2778 = vmatprep.subr.bf16.mxu0 0
    %2779 = vmatpush1.bf16.msra.mxu0 0
    %2780 = vmatprep.subr.bf16.mxu0 0
    %2781 = vmatpush1.bf16.msra.mxu0 0
    %2782 = vmatprep.subr.bf16.mxu0 0
    %2783 = vmatpush1.bf16.msra.mxu0 0
    %2784 = vmatprep.subr.bf16.mxu0 0
    %2785 = vmatpush1.bf16.msra.mxu0 0
    %2786 = vmatprep.subr.bf16.mxu0 0
    %2787 = vmatpush1.bf16.msra.mxu0 0
    %2788 = vmatprep.subr.bf16.mxu0 0
    %2789 = vmatpush1.bf16.msra.mxu0 0
    %2790 = vmatprep.mubr.bf16.mxu0 0
    %2791 = vmatmul.mubr.bf16.gmra.mrb[0].mxu0 %v2588
    %v2792 = vpop.f32.mrb[0].mxu0
    %v2793 = vadd.f32 %v292, %v2792
    %v2794 = vpop.f32.mrb[0].mxu0
    %v2795 = vpop.f32.mrb[0].mxu0
    %v2796 = vadd.f32 %v292, %v2795
    %v2797 = vpop.f32.mrb[0].mxu0
    %2798 = vdwg.mxu0
    %v2799 = vpack.c.bf16 %v2587, %v2586
    %2800 = vmatprep.subr.bf16.mxu0 %v1401
    %2801 = vmatpush1.bf16.msra.mxu0 %v1400
    %2802 = vmatprep.subr.bf16.mxu0 %v1404
    %2803 = vmatpush1.bf16.msra.mxu0 %v1403
    %2804 = vmatprep.subr.bf16.mxu0 %v1407
    %2805 = vmatpush1.bf16.msra.mxu0 %v1406
    %2806 = vmatprep.subr.bf16.mxu0 %v1410
    %2807 = vmatpush1.bf16.msra.mxu0 %v1409
    %2808 = vmatprep.subr.bf16.mxu0 %v1413
    %2809 = vmatpush1.bf16.msra.mxu0 %v1412
    %2810 = vmatprep.subr.bf16.mxu0 %v1416
    %2811 = vmatpush1.bf16.msra.mxu0 %v1415
    %2812 = vmatprep.subr.bf16.mxu0 %v1419
    %2813 = vmatpush1.bf16.msra.mxu0 %v1418
    %2814 = vmatprep.subr.bf16.mxu0 %v1422
    %2815 = vmatpush1.bf16.msra.mxu0 %v1421
    %2816 = vmatprep.subr.bf16.mxu0 0
    %2817 = vmatpush1.bf16.msra.mxu0 0
    %2818 = vmatprep.subr.bf16.mxu0 0
    %2819 = vmatpush1.bf16.msra.mxu0 0
    %2820 = vmatprep.subr.bf16.mxu0 0
    %2821 = vmatpush1.bf16.msra.mxu0 0
    %2822 = vmatprep.subr.bf16.mxu0 0
    %2823 = vmatpush1.bf16.msra.mxu0 0
    %2824 = vmatprep.subr.bf16.mxu0 0
    %2825 = vmatpush1.bf16.msra.mxu0 0
    %2826 = vmatprep.subr.bf16.mxu0 0
    %2827 = vmatpush1.bf16.msra.mxu0 0
    %2828 = vmatprep.subr.bf16.mxu0 0
    %2829 = vmatpush1.bf16.msra.mxu0 0
    %2830 = vmatprep.subr.bf16.mxu0 0
    %2831 = vmatpush1.bf16.msra.mxu0 0
    %2832 = vmatprep.mubr.bf16.mxu0 0
    %2833 = vmatmul.mubr.bf16.gmra.mrb[0].mxu0 %v2799
    %v2834 = vpop.f32.mrb[0].mxu0
    %v2835 = vadd.f32 0.0, %v2834
    %v2836 = vpop.f32.mrb[0].mxu0
    %v2837 = vadd.f32 0.0, %v2836
    %v2838 = vpop.f32.mrb[0].mxu0
    %v2839 = vadd.f32 0.0, %v2838
    %v2840 = vpop.f32.mrb[0].mxu0
    %v2841 = vadd.f32 0.0, %v2840
    %2842 = vdwg.mxu0
    %2843 = vmatprep.subr.bf16.mxu0 0
    %2844 = vmatpush1.bf16.msra.mxu0 %v1402
    %2845 = vmatprep.subr.bf16.mxu0 0
    %2846 = vmatpush1.bf16.msra.mxu0 %v1405
    %2847 = vmatprep.subr.bf16.mxu0 0
    %2848 = vmatpush1.bf16.msra.mxu0 %v1408
    %2849 = vmatprep.subr.bf16.mxu0 0
    %2850 = vmatpush1.bf16.msra.mxu0 %v1411
    %2851 = vmatprep.subr.bf16.mxu0 0
    %2852 = vmatpush1.bf16.msra.mxu0 %v1414
    %2853 = vmatprep.subr.bf16.mxu0 0
    %2854 = vmatpush1.bf16.msra.mxu0 %v1417
    %2855 = vmatprep.subr.bf16.mxu0 0
    %2856 = vmatpush1.bf16.msra.mxu0 %v1420
    %2857 = vmatprep.subr.bf16.mxu0 0
    %2858 = vmatpush1.bf16.msra.mxu0 %v1423
    %2859 = vmatprep.subr.bf16.mxu0 0
    %2860 = vmatpush1.bf16.msra.mxu0 0
    %2861 = vmatprep.subr.bf16.mxu0 0
    %2862 = vmatpush1.bf16.msra.mxu0 0
    %2863 = vmatprep.subr.bf16.mxu0 0
    %2864 = vmatpush1.bf16.msra.mxu0 0
    %2865 = vmatprep.subr.bf16.mxu0 0
    %2866 = vmatpush1.bf16.msra.mxu0 0
    %2867 = vmatprep.subr.bf16.mxu0 0
    %2868 = vmatpush1.bf16.msra.mxu0 0
    %2869 = vmatprep.subr.bf16.mxu0 0
    %2870 = vmatpush1.bf16.msra.mxu0 0
    %2871 = vmatprep.subr.bf16.mxu0 0
    %2872 = vmatpush1.bf16.msra.mxu0 0
    %2873 = vmatprep.subr.bf16.mxu0 0
    %2874 = vmatpush1.bf16.msra.mxu0 0
    %2875 = vmatprep.mubr.bf16.mxu0 0
    %2876 = vmatmul.mubr.bf16.gmra.mrb[0].mxu0 %v2799
    %v2877 = vpop.f32.mrb[0].mxu0
    %v2878 = vadd.f32 0.0, %v2877
    %v2879 = vpop.f32.mrb[0].mxu0
    %v2880 = vpop.f32.mrb[0].mxu0
    %v2881 = vadd.f32 0.0, %v2880
    %v2882 = vpop.f32.mrb[0].mxu0
    %2883 = vdwg.mxu0
    %v2884 = vadd.f32 %v2750, %v2835
    %v2885 = vadd.f32 %v2754, %v2839
    %v2886 = vxor.u32 %v2884, 2147483648
    %v2887 = vxor.u32 %v2885, 2147483648
    %v2888 = vmul.f32 %v2886, 1.442695
    %v2889 = vpow.pop %v2888
    %v2890 = vmul.f32 %v2887, 1.442695
    %v2891 = vpow.pop %v2890
    %v2892 = vadd.f32 %v2889, 1.0
    %v2893 = vadd.f32 %v2891, 1.0
    %v2894 = vrcp.pop %v2892
    %v2895 = vmul.f32 1.0, %v2894
    %v2896 = vrcp.pop %v2893
    %v2897 = vmul.f32 1.0, %v2896
    %v2898 = vadd.f32 %v2752, %v2837
    %v2899 = vadd.f32 %v2756, %v2841
    %v2900 = vxor.u32 %v2898, 2147483648
    %v2901 = vxor.u32 %v2899, 2147483648
    %v2902 = vmul.f32 %v2900, 1.442695
    %v2903 = vpow.pop %v2902
    %v2904 = vmul.f32 %v2901, 1.442695
    %v2905 = vpow.pop %v2904
    %v2906 = vadd.f32 %v2903, 1.0
    %v2907 = vadd.f32 %v2905, 1.0
    %v2908 = vrcp.pop %v2906
    %v2909 = vmul.f32 1.0, %v2908
    %v2910 = vrcp.pop %v2907
    %v2911 = vmul.f32 1.0, %v2910
    %v2912 = vmul.f32 %v2895, %v2878
    %v2913 = vmul.f32 %v2897, %v2881
    %v2914 = vadd.f32 %v2793, %v2912
    %v2915 = vadd.f32 %v2796, %v2913
    %v2916 = vtanh.pop %v2914
    %v2917 = vtanh.pop %v2915
    %v2918 = vsub.f32 1.0, %v2909
    %v2919 = vsub.f32 1.0, %v2911
    %v2920 = vmul.f32 %v2918, %v2916
    %v2921 = vmul.f32 %v2919, %v2917
    %v2922 = vmul.f32 %v2909, %v2586
    %v2923 = vmul.f32 %v2911, %v2587
    %v2924 = vadd.f32 %v2920, %v2922
    %v2925 = vadd.f32 %v2921, %v2923
    %v2926 = vpack.c.bf16 %v2714, %v2713
    %2927 = vmatprep.subr.bf16.mxu0 %v808
    %2928 = vmatpush1.bf16.msra.mxu0 %v807
    %2929 = vmatprep.subr.bf16.mxu0 %v811
    %2930 = vmatpush1.bf16.msra.mxu0 %v810
    %2931 = vmatprep.subr.bf16.mxu0 %v814
    %2932 = vmatpush1.bf16.msra.mxu0 %v813
    %2933 = vmatprep.subr.bf16.mxu0 %v817
    %2934 = vmatpush1.bf16.msra.mxu0 %v816
    %2935 = vmatprep.subr.bf16.mxu0 %v820
    %2936 = vmatpush1.bf16.msra.mxu0 %v819
    %2937 = vmatprep.subr.bf16.mxu0 %v823
    %2938 = vmatpush1.bf16.msra.mxu0 %v822
    %2939 = vmatprep.subr.bf16.mxu0 %v826
    %2940 = vmatpush1.bf16.msra.mxu0 %v825
    %2941 = vmatprep.subr.bf16.mxu0 %v829
    %2942 = vmatpush1.bf16.msra.mxu0 %v828
    %2943 = vmatprep.subr.bf16.mxu0 0
    %2944 = vmatpush1.bf16.msra.mxu0 0
    %2945 = vmatprep.subr.bf16.mxu0 0
    %2946 = vmatpush1.bf16.msra.mxu0 0
    %2947 = vmatprep.subr.bf16.mxu0 0
    %2948 = vmatpush1.bf16.msra.mxu0 0
    %2949 = vmatprep.subr.bf16.mxu0 0
    %2950 = vmatpush1.bf16.msra.mxu0 0
    %2951 = vmatprep.subr.bf16.mxu0 0
    %2952 = vmatpush1.bf16.msra.mxu0 0
    %2953 = vmatprep.subr.bf16.mxu0 0
    %2954 = vmatpush1.bf16.msra.mxu0 0
    %2955 = vmatprep.subr.bf16.mxu0 0
    %2956 = vmatpush1.bf16.msra.mxu0 0
    %2957 = vmatprep.subr.bf16.mxu0 0
    %2958 = vmatpush1.bf16.msra.mxu0 0
    %2959 = vmatprep.mubr.bf16.mxu0 0
    %2960 = vmatmul.mubr.bf16.gmra.mrb[0].mxu0 %v2926
    %v2961 = vpop.f32.mrb[0].mxu0
    %v2962 = vadd.f32 0.0, %v2961
    %v2963 = vpop.f32.mrb[0].mxu0
    %v2964 = vadd.f32 0.0, %v2963
    %v2965 = vpop.f32.mrb[0].mxu0
    %v2966 = vadd.f32 0.0, %v2965
    %v2967 = vpop.f32.mrb[0].mxu0
    %v2968 = vadd.f32 0.0, %v2967
    %2969 = vdwg.mxu0
    %2970 = vmatprep.subr.bf16.mxu0 0
    %2971 = vmatpush1.bf16.msra.mxu0 %v809
    %2972 = vmatprep.subr.bf16.mxu0 0
    %2973 = vmatpush1.bf16.msra.mxu0 %v812
    %2974 = vmatprep.subr.bf16.mxu0 0
    %2975 = vmatpush1.bf16.msra.mxu0 %v815
    %2976 = vmatprep.subr.bf16.mxu0 0
    %2977 = vmatpush1.bf16.msra.mxu0 %v818
    %2978 = vmatprep.subr.bf16.mxu0 0
    %2979 = vmatpush1.bf16.msra.mxu0 %v821
    %2980 = vmatprep.subr.bf16.mxu0 0
    %2981 = vmatpush1.bf16.msra.mxu0 %v824
    %2982 = vmatprep.subr.bf16.mxu0 0
    %2983 = vmatpush1.bf16.msra.mxu0 %v827
    %2984 = vmatprep.subr.bf16.mxu0 0
    %2985 = vmatpush1.bf16.msra.mxu0 %v830
    %2986 = vmatprep.subr.bf16.mxu0 0
    %2987 = vmatpush1.bf16.msra.mxu0 0
    %2988 = vmatprep.subr.bf16.mxu0 0
    %2989 = vmatpush1.bf16.msra.mxu0 0
    %2990 = vmatprep.subr.bf16.mxu0 0
    %2991 = vmatpush1.bf16.msra.mxu0 0
    %2992 = vmatprep.subr.bf16.mxu0 0
    %2993 = vmatpush1.bf16.msra.mxu0 0
    %2994 = vmatprep.subr.bf16.mxu0 0
    %2995 = vmatpush1.bf16.msra.mxu0 0
    %2996 = vmatprep.subr.bf16.mxu0 0
    %2997 = vmatpush1.bf16.msra.mxu0 0
    %2998 = vmatprep.subr.bf16.mxu0 0
    %2999 = vmatpush1.bf16.msra.mxu0 0
    %3000 = vmatprep.subr.bf16.mxu0 0
    %3001 = vmatpush1.bf16.msra.mxu0 0
    %3002 = vmatprep.mubr.bf16.mxu0 0
    %3003 = vmatmul.mubr.bf16.gmra.mrb[0].mxu0 %v2926
    %v3004 = vpop.f32.mrb[0].mxu0
    %v3005 = vadd.f32 0.0, %v3004
    %v3006 = vpop.f32.mrb[0].mxu0
    %v3007 = vpop.f32.mrb[0].mxu0
    %v3008 = vadd.f32 0.0, %v3007
    %v3009 = vpop.f32.mrb[0].mxu0
    %3010 = vdwg.mxu0
    %v3011 = vadd.f32 %v710, %v2962
    %v3012 = vadd.f32 %v713, %v2966
    %v3013 = vxor.u32 %v3011, 2147483648
    %v3014 = vxor.u32 %v3012, 2147483648
    %v3015 = vmul.f32 %v3013, 1.442695
    %v3016 = vpow.pop %v3015
    %v3017 = vmul.f32 %v3014, 1.442695
    %v3018 = vpow.pop %v3017
    %v3019 = vadd.f32 %v3016, 1.0
    %v3020 = vadd.f32 %v3018, 1.0
    %v3021 = vrcp.pop %v3019
    %v3022 = vmul.f32 1.0, %v3021
    %v3023 = vrcp.pop %v3020
    %v3024 = vmul.f32 1.0, %v3023
    %v3025 = vadd.f32 %v711, %v2964
    %v3026 = vadd.f32 %v714, %v2968
    %v3027 = vxor.u32 %v3025, 2147483648
    %v3028 = vxor.u32 %v3026, 2147483648
    %v3029 = vmul.f32 %v3027, 1.442695
    %v3030 = vpow.pop %v3029
    %v3031 = vmul.f32 %v3028, 1.442695
    %v3032 = vpow.pop %v3031
    %v3033 = vadd.f32 %v3030, 1.0
    %v3034 = vadd.f32 %v3032, 1.0
    %v3035 = vrcp.pop %v3033
    %v3036 = vmul.f32 1.0, %v3035
    %v3037 = vrcp.pop %v3034
    %v3038 = vmul.f32 1.0, %v3037
    %v3039 = vmul.f32 %v3022, %v3005
    %v3040 = vmul.f32 %v3024, %v3008
    %v3041 = vadd.f32 %v712, %v3039
    %v3042 = vadd.f32 %v715, %v3040
    %v3043 = vtanh.pop %v3041
    %v3044 = vtanh.pop %v3042
    %v3045 = vsub.f32 1.0, %v3036
    %v3046 = vsub.f32 1.0, %v3038
    %v3047 = vmul.f32 %v3045, %v3043
    %v3048 = vmul.f32 %v3046, %v3044
    %v3049 = vmul.f32 %v3036, %v2713
    %v3050 = vmul.f32 %v3038, %v2714
    %v3051 = vadd.f32 %v3047, %v3049
    %v3052 = vadd.f32 %v3048, %v3050
    %3053 = vmatprep.subr.bf16.mxu0 %v1189
    %3054 = vmatpush1.bf16.msra.mxu0 %v1188
    %3055 = vmatprep.subr.bf16.mxu0 %v1192
    %3056 = vmatpush1.bf16.msra.mxu0 %v1191
    %3057 = vmatprep.subr.bf16.mxu0 %v1195
    %3058 = vmatpush1.bf16.msra.mxu0 %v1194
    %3059 = vmatprep.subr.bf16.mxu0 %v1198
    %3060 = vmatpush1.bf16.msra.mxu0 %v1197
    %3061 = vmatprep.subr.bf16.mxu0 %v1201
    %3062 = vmatpush1.bf16.msra.mxu0 %v1200
    %3063 = vmatprep.subr.bf16.mxu0 %v1204
    %3064 = vmatpush1.bf16.msra.mxu0 %v1203
    %3065 = vmatprep.subr.bf16.mxu0 %v1207
    %3066 = vmatpush1.bf16.msra.mxu0 %v1206
    %3067 = vmatprep.subr.bf16.mxu0 %v1210
    %3068 = vmatpush1.bf16.msra.mxu0 %v1209
    %3069 = vmatprep.subr.bf16.mxu0 0
    %3070 = vmatpush1.bf16.msra.mxu0 0
    %3071 = vmatprep.subr.bf16.mxu0 0
    %3072 = vmatpush1.bf16.msra.mxu0 0
    %3073 = vmatprep.subr.bf16.mxu0 0
    %3074 = vmatpush1.bf16.msra.mxu0 0
    %3075 = vmatprep.subr.bf16.mxu0 0
    %3076 = vmatpush1.bf16.msra.mxu0 0
    %3077 = vmatprep.subr.bf16.mxu0 0
    %3078 = vmatpush1.bf16.msra.mxu0 0
    %3079 = vmatprep.subr.bf16.mxu0 0
    %3080 = vmatpush1.bf16.msra.mxu0 0
    %3081 = vmatprep.subr.bf16.mxu0 0
    %3082 = vmatpush1.bf16.msra.mxu0 0
    %3083 = vmatprep.subr.bf16.mxu0 0
    %3084 = vmatpush1.bf16.msra.mxu0 0
    %3085 = vmatprep.mubr.bf16.mxu0 0
    %3086 = vmatmul.mubr.bf16.gmra.mrb[0].mxu0 %v2926
    %v3087 = vpop.f32.mrb[0].mxu0
    %v3088 = vadd.f32 %v284, %v3087
    %v3089 = vpop.f32.mrb[0].mxu0
    %v3090 = vadd.f32 %v288, %v3089
    %v3091 = vpop.f32.mrb[0].mxu0
    %v3092 = vadd.f32 %v284, %v3091
    %v3093 = vpop.f32.mrb[0].mxu0
    %v3094 = vadd.f32 %v288, %v3093
    %3095 = vdwg.mxu0
    %3096 = vmatprep.subr.bf16.mxu0 0
    %3097 = vmatpush1.bf16.msra.mxu0 %v1190
    %3098 = vmatprep.subr.bf16.mxu0 0
    %3099 = vmatpush1.bf16.msra.mxu0 %v1193
    %3100 = vmatprep.subr.bf16.mxu0 0
    %3101 = vmatpush1.bf16.msra.mxu0 %v1196
    %3102 = vmatprep.subr.bf16.mxu0 0
    %3103 = vmatpush1.bf16.msra.mxu0 %v1199
    %3104 = vmatprep.subr.bf16.mxu0 0
    %3105 = vmatpush1.bf16.msra.mxu0 %v1202
    %3106 = vmatprep.subr.bf16.mxu0 0
    %3107 = vmatpush1.bf16.msra.mxu0 %v1205
    %3108 = vmatprep.subr.bf16.mxu0 0
    %3109 = vmatpush1.bf16.msra.mxu0 %v1208
    %3110 = vmatprep.subr.bf16.mxu0 0
    %3111 = vmatpush1.bf16.msra.mxu0 %v1211
    %3112 = vmatprep.subr.bf16.mxu0 0
    %3113 = vmatpush1.bf16.msra.mxu0 0
    %3114 = vmatprep.subr.bf16.mxu0 0
    %3115 = vmatpush1.bf16.msra.mxu0 0
    %3116 = vmatprep.subr.bf16.mxu0 0
    %3117 = vmatpush1.bf16.msra.mxu0 0
    %3118 = vmatprep.subr.bf16.mxu0 0
    %3119 = vmatpush1.bf16.msra.mxu0 0
    %3120 = vmatprep.subr.bf16.mxu0 0
    %3121 = vmatpush1.bf16.msra.mxu0 0
    %3122 = vmatprep.subr.bf16.mxu0 0
    %3123 = vmatpush1.bf16.msra.mxu0 0
    %3124 = vmatprep.subr.bf16.mxu0 0
    %3125 = vmatpush1.bf16.msra.mxu0 0
    %3126 = vmatprep.subr.bf16.mxu0 0
    %3127 = vmatpush1.bf16.msra.mxu0 0
    %3128 = vmatprep.mubr.bf16.mxu0 0
    %3129 = vmatmul.mubr.bf16.gmra.mrb[0].mxu0 %v2926
    %v3130 = vpop.f32.mrb[0].mxu0
    %v3131 = vadd.f32 %v292, %v3130
    %v3132 = vpop.f32.mrb[0].mxu0
    %v3133 = vpop.f32.mrb[0].mxu0
    %v3134 = vadd.f32 %v292, %v3133
    %v3135 = vpop.f32.mrb[0].mxu0
    %3136 = vdwg.mxu0
    %v3137 = vpack.c.bf16 %v2925, %v2924
    %3138 = vmatprep.subr.bf16.mxu0 %v1401
    %3139 = vmatpush1.bf16.msra.mxu0 %v1400
    %3140 = vmatprep.subr.bf16.mxu0 %v1404
    %3141 = vmatpush1.bf16.msra.mxu0 %v1403
    %3142 = vmatprep.subr.bf16.mxu0 %v1407
    %3143 = vmatpush1.bf16.msra.mxu0 %v1406
    %3144 = vmatprep.subr.bf16.mxu0 %v1410
    %3145 = vmatpush1.bf16.msra.mxu0 %v1409
    %3146 = vmatprep.subr.bf16.mxu0 %v1413
    %3147 = vmatpush1.bf16.msra.mxu0 %v1412
    %3148 = vmatprep.subr.bf16.mxu0 %v1416
    %3149 = vmatpush1.bf16.msra.mxu0 %v1415
    %3150 = vmatprep.subr.bf16.mxu0 %v1419
    %3151 = vmatpush1.bf16.msra.mxu0 %v1418
    %3152 = vmatprep.subr.bf16.mxu0 %v1422
    %3153 = vmatpush1.bf16.msra.mxu0 %v1421
    %3154 = vmatprep.subr.bf16.mxu0 0
    %3155 = vmatpush1.bf16.msra.mxu0 0
    %3156 = vmatprep.subr.bf16.mxu0 0
    %3157 = vmatpush1.bf16.msra.mxu0 0
    %3158 = vmatprep.subr.bf16.mxu0 0
    %3159 = vmatpush1.bf16.msra.mxu0 0
    %3160 = vmatprep.subr.bf16.mxu0 0
    %3161 = vmatpush1.bf16.msra.mxu0 0
    %3162 = vmatprep.subr.bf16.mxu0 0
    %3163 = vmatpush1.bf16.msra.mxu0 0
    %3164 = vmatprep.subr.bf16.mxu0 0
    %3165 = vmatpush1.bf16.msra.mxu0 0
    %3166 = vmatprep.subr.bf16.mxu0 0
    %3167 = vmatpush1.bf16.msra.mxu0 0
    %3168 = vmatprep.subr.bf16.mxu0 0
    %3169 = vmatpush1.bf16.msra.mxu0 0
    %3170 = vmatprep.mubr.bf16.mxu0 0
    %3171 = vmatmul.mubr.bf16.gmra.mrb[0].mxu0 %v3137
    %v3172 = vpop.f32.mrb[0].mxu0
    %v3173 = vadd.f32 0.0, %v3172
    %v3174 = vpop.f32.mrb[0].mxu0
    %v3175 = vadd.f32 0.0, %v3174
    %v3176 = vpop.f32.mrb[0].mxu0
    %v3177 = vadd.f32 0.0, %v3176
    %v3178 = vpop.f32.mrb[0].mxu0
    %v3179 = vadd.f32 0.0, %v3178
    %3180 = vdwg.mxu0
    %3181 = vmatprep.subr.bf16.mxu0 0
    %3182 = vmatpush1.bf16.msra.mxu0 %v1402
    %3183 = vmatprep.subr.bf16.mxu0 0
    %3184 = vmatpush1.bf16.msra.mxu0 %v1405
    %3185 = vmatprep.subr.bf16.mxu0 0
    %3186 = vmatpush1.bf16.msra.mxu0 %v1408
    %3187 = vmatprep.subr.bf16.mxu0 0
    %3188 = vmatpush1.bf16.msra.mxu0 %v1411
    %3189 = vmatprep.subr.bf16.mxu0 0
    %3190 = vmatpush1.bf16.msra.mxu0 %v1414
    %3191 = vmatprep.subr.bf16.mxu0 0
    %3192 = vmatpush1.bf16.msra.mxu0 %v1417
    %3193 = vmatprep.subr.bf16.mxu0 0
    %3194 = vmatpush1.bf16.msra.mxu0 %v1420
    %3195 = vmatprep.subr.bf16.mxu0 0
    %3196 = vmatpush1.bf16.msra.mxu0 %v1423
    %3197 = vmatprep.subr.bf16.mxu0 0
    %3198 = vmatpush1.bf16.msra.mxu0 0
    %3199 = vmatprep.subr.bf16.mxu0 0
    %3200 = vmatpush1.bf16.msra.mxu0 0
    %3201 = vmatprep.subr.bf16.mxu0 0
    %3202 = vmatpush1.bf16.msra.mxu0 0
    %3203 = vmatprep.subr.bf16.mxu0 0
    %3204 = vmatpush1.bf16.msra.mxu0 0
    %3205 = vmatprep.subr.bf16.mxu0 0
    %3206 = vmatpush1.bf16.msra.mxu0 0
    %3207 = vmatprep.subr.bf16.mxu0 0
    %3208 = vmatpush1.bf16.msra.mxu0 0
    %3209 = vmatprep.subr.bf16.mxu0 0
    %3210 = vmatpush1.bf16.msra.mxu0 0
    %3211 = vmatprep.subr.bf16.mxu0 0
    %3212 = vmatpush1.bf16.msra.mxu0 0
    %3213 = vmatprep.mubr.bf16.mxu0 0
    %3214 = vmatmul.mubr.bf16.gmra.mrb[0].mxu0 %v3137
    %v3215 = vpop.f32.mrb[0].mxu0
    %v3216 = vadd.f32 0.0, %v3215
    %v3217 = vpop.f32.mrb[0].mxu0
    %v3218 = vpop.f32.mrb[0].mxu0
    %v3219 = vadd.f32 0.0, %v3218
    %v3220 = vpop.f32.mrb[0].mxu0
    %3221 = vdwg.mxu0
    %v3222 = vadd.f32 %v3088, %v3173
    %v3223 = vadd.f32 %v3092, %v3177
    %v3224 = vxor.u32 %v3222, 2147483648
    %v3225 = vxor.u32 %v3223, 2147483648
    %v3226 = vmul.f32 %v3224, 1.442695
    %v3227 = vpow.pop %v3226
    %v3228 = vmul.f32 %v3225, 1.442695
    %v3229 = vpow.pop %v3228
    %v3230 = vadd.f32 %v3227, 1.0
    %v3231 = vadd.f32 %v3229, 1.0
    %v3232 = vrcp.pop %v3230
    %v3233 = vmul.f32 1.0, %v3232
    %v3234 = vrcp.pop %v3231
    %v3235 = vmul.f32 1.0, %v3234
    %v3236 = vadd.f32 %v3090, %v3175
    %v3237 = vadd.f32 %v3094, %v3179
    %v3238 = vxor.u32 %v3236, 2147483648
    %v3239 = vxor.u32 %v3237, 2147483648
    %v3240 = vmul.f32 %v3238, 1.442695
    %v3241 = vpow.pop %v3240
    %v3242 = vmul.f32 %v3239, 1.442695
    %v3243 = vpow.pop %v3242
    %v3244 = vadd.f32 %v3241, 1.0
    %v3245 = vadd.f32 %v3243, 1.0
    %v3246 = vrcp.pop %v3244
    %v3247 = vmul.f32 1.0, %v3246
    %v3248 = vrcp.pop %v3245
    %v3249 = vmul.f32 1.0, %v3248
    %v3250 = vmul.f32 %v3233, %v3216
    %v3251 = vmul.f32 %v3235, %v3219
    %v3252 = vadd.f32 %v3131, %v3250
    %v3253 = vadd.f32 %v3134, %v3251
    %v3254 = vtanh.pop %v3252
    %v3255 = vtanh.pop %v3253
    %v3256 = vsub.f32 1.0, %v3247
    %v3257 = vsub.f32 1.0, %v3249
    %v3258 = vmul.f32 %v3256, %v3254
    %v3259 = vmul.f32 %v3257, %v3255
    %v3260 = vmul.f32 %v3247, %v2924
    %v3261 = vmul.f32 %v3249, %v2925
    %v3262 = vadd.f32 %v3258, %v3260
    %v3263 = vadd.f32 %v3259, %v3261
    %v3264 = vpack.c.bf16 %v3052, %v3051
    %3265 = vmatprep.subr.bf16.mxu0 %v808
    %3266 = vmatpush1.bf16.msra.mxu0 %v807
    %3267 = vmatprep.subr.bf16.mxu0 %v811
    %3268 = vmatpush1.bf16.msra.mxu0 %v810
    %3269 = vmatprep.subr.bf16.mxu0 %v814
    %3270 = vmatpush1.bf16.msra.mxu0 %v813
    %3271 = vmatprep.subr.bf16.mxu0 %v817
    %3272 = vmatpush1.bf16.msra.mxu0 %v816
    %3273 = vmatprep.subr.bf16.mxu0 %v820
    %3274 = vmatpush1.bf16.msra.mxu0 %v819
    %3275 = vmatprep.subr.bf16.mxu0 %v823
    %3276 = vmatpush1.bf16.msra.mxu0 %v822
    %3277 = vmatprep.subr.bf16.mxu0 %v826
    %3278 = vmatpush1.bf16.msra.mxu0 %v825
    %3279 = vmatprep.subr.bf16.mxu0 %v829
    %3280 = vmatpush1.bf16.msra.mxu0 %v828
    %3281 = vmatprep.subr.bf16.mxu0 0
    %3282 = vmatpush1.bf16.msra.mxu0 0
    %3283 = vmatprep.subr.bf16.mxu0 0
    %3284 = vmatpush1.bf16.msra.mxu0 0
    %3285 = vmatprep.subr.bf16.mxu0 0
    %3286 = vmatpush1.bf16.msra.mxu0 0
    %3287 = vmatprep.subr.bf16.mxu0 0
    %3288 = vmatpush1.bf16.msra.mxu0 0
    %3289 = vmatprep.subr.bf16.mxu0 0
    %3290 = vmatpush1.bf16.msra.mxu0 0
    %3291 = vmatprep.subr.bf16.mxu0 0
    %3292 = vmatpush1.bf16.msra.mxu0 0
    %3293 = vmatprep.subr.bf16.mxu0 0
    %3294 = vmatpush1.bf16.msra.mxu0 0
    %3295 = vmatprep.subr.bf16.mxu0 0
    %3296 = vmatpush1.bf16.msra.mxu0 0
    %3297 = vmatprep.mubr.bf16.mxu0 0
    %3298 = vmatmul.mubr.bf16.gmra.mrb[0].mxu0 %v3264
    %v3299 = vpop.f32.mrb[0].mxu0
    %v3300 = vadd.f32 0.0, %v3299
    %v3301 = vpop.f32.mrb[0].mxu0
    %v3302 = vadd.f32 0.0, %v3301
    %v3303 = vpop.f32.mrb[0].mxu0
    %v3304 = vadd.f32 0.0, %v3303
    %v3305 = vpop.f32.mrb[0].mxu0
    %v3306 = vadd.f32 0.0, %v3305
    %3307 = vdwg.mxu0
    %3308 = vmatprep.subr.bf16.mxu0 0
    %3309 = vmatpush1.bf16.msra.mxu0 %v809
    %3310 = vmatprep.subr.bf16.mxu0 0
    %3311 = vmatpush1.bf16.msra.mxu0 %v812
    %3312 = vmatprep.subr.bf16.mxu0 0
    %3313 = vmatpush1.bf16.msra.mxu0 %v815
    %3314 = vmatprep.subr.bf16.mxu0 0
    %3315 = vmatpush1.bf16.msra.mxu0 %v818
    %3316 = vmatprep.subr.bf16.mxu0 0
    %3317 = vmatpush1.bf16.msra.mxu0 %v821
    %3318 = vmatprep.subr.bf16.mxu0 0
    %3319 = vmatpush1.bf16.msra.mxu0 %v824
    %3320 = vmatprep.subr.bf16.mxu0 0
    %3321 = vmatpush1.bf16.msra.mxu0 %v827
    %3322 = vmatprep.subr.bf16.mxu0 0
    %3323 = vmatpush1.bf16.msra.mxu0 %v830
    %3324 = vmatprep.subr.bf16.mxu0 0
    %3325 = vmatpush1.bf16.msra.mxu0 0
    %3326 = vmatprep.subr.bf16.mxu0 0
    %3327 = vmatpush1.bf16.msra.mxu0 0
    %3328 = vmatprep.subr.bf16.mxu0 0
    %3329 = vmatpush1.bf16.msra.mxu0 0
    %3330 = vmatprep.subr.bf16.mxu0 0
    %3331 = vmatpush1.bf16.msra.mxu0 0
    %3332 = vmatprep.subr.bf16.mxu0 0
    %3333 = vmatpush1.bf16.msra.mxu0 0
    %3334 = vmatprep.subr.bf16.mxu0 0
    %3335 = vmatpush1.bf16.msra.mxu0 0
    %3336 = vmatprep.subr.bf16.mxu0 0
    %3337 = vmatpush1.bf16.msra.mxu0 0
    %3338 = vmatprep.subr.bf16.mxu0 0
    %3339 = vmatpush1.bf16.msra.mxu0 0
    %3340 = vmatprep.mubr.bf16.mxu0 0
    %3341 = vmatmul.mubr.bf16.gmra.mrb[0].mxu0 %v3264
    %v3342 = vpop.f32.mrb[0].mxu0
    %v3343 = vadd.f32 0.0, %v3342
    %v3344 = vpop.f32.mrb[0].mxu0
    %v3345 = vpop.f32.mrb[0].mxu0
    %v3346 = vadd.f32 0.0, %v3345
    %v3347 = vpop.f32.mrb[0].mxu0
    %3348 = vdwg.mxu0
    %v3349 = vadd.f32 %v716, %v3300
    %v3350 = vadd.f32 %v719, %v3304
    %v3351 = vxor.u32 %v3349, 2147483648
    %v3352 = vxor.u32 %v3350, 2147483648
    %v3353 = vmul.f32 %v3351, 1.442695
    %v3354 = vpow.pop %v3353
    %v3355 = vmul.f32 %v3352, 1.442695
    %v3356 = vpow.pop %v3355
    %v3357 = vadd.f32 %v3354, 1.0
    %v3358 = vadd.f32 %v3356, 1.0
    %v3359 = vrcp.pop %v3357
    %v3360 = vmul.f32 1.0, %v3359
    %v3361 = vrcp.pop %v3358
    %v3362 = vmul.f32 1.0, %v3361
    %v3363 = vadd.f32 %v717, %v3302
    %v3364 = vadd.f32 %v720, %v3306
    %v3365 = vxor.u32 %v3363, 2147483648
    %v3366 = vxor.u32 %v3364, 2147483648
    %v3367 = vmul.f32 %v3365, 1.442695
    %v3368 = vpow.pop %v3367
    %v3369 = vmul.f32 %v3366, 1.442695
    %v3370 = vpow.pop %v3369
    %v3371 = vadd.f32 %v3368, 1.0
    %v3372 = vadd.f32 %v3370, 1.0
    %v3373 = vrcp.pop %v3371
    %v3374 = vmul.f32 1.0, %v3373
    %v3375 = vrcp.pop %v3372
    %v3376 = vmul.f32 1.0, %v3375
    %v3377 = vmul.f32 %v3360, %v3343
    %v3378 = vmul.f32 %v3362, %v3346
    %v3379 = vadd.f32 %v718, %v3377
    %v3380 = vadd.f32 %v721, %v3378
    %v3381 = vtanh.pop %v3379
    %v3382 = vtanh.pop %v3380
    %v3383 = vsub.f32 1.0, %v3374
    %v3384 = vsub.f32 1.0, %v3376
    %v3385 = vmul.f32 %v3383, %v3381
    %v3386 = vmul.f32 %v3384, %v3382
    %v3387 = vmul.f32 %v3374, %v3051
    %v3388 = vmul.f32 %v3376, %v3052
    %v3389 = vadd.f32 %v3385, %v3387
    %v3390 = vadd.f32 %v3386, %v3388
    %3391 = vmatprep.subr.bf16.mxu0 %v1189
    %3392 = vmatpush1.bf16.msra.mxu0 %v1188
    %3393 = vmatprep.subr.bf16.mxu0 %v1192
    %3394 = vmatpush1.bf16.msra.mxu0 %v1191
    %3395 = vmatprep.subr.bf16.mxu0 %v1195
    %3396 = vmatpush1.bf16.msra.mxu0 %v1194
    %3397 = vmatprep.subr.bf16.mxu0 %v1198
    %3398 = vmatpush1.bf16.msra.mxu0 %v1197
    %3399 = vmatprep.subr.bf16.mxu0 %v1201
    %3400 = vmatpush1.bf16.msra.mxu0 %v1200
    %3401 = vmatprep.subr.bf16.mxu0 %v1204
    %3402 = vmatpush1.bf16.msra.mxu0 %v1203
    %3403 = vmatprep.subr.bf16.mxu0 %v1207
    %3404 = vmatpush1.bf16.msra.mxu0 %v1206
    %3405 = vmatprep.subr.bf16.mxu0 %v1210
    %3406 = vmatpush1.bf16.msra.mxu0 %v1209
    %3407 = vmatprep.subr.bf16.mxu0 0
    %3408 = vmatpush1.bf16.msra.mxu0 0
    %3409 = vmatprep.subr.bf16.mxu0 0
    %3410 = vmatpush1.bf16.msra.mxu0 0
    %3411 = vmatprep.subr.bf16.mxu0 0
    %3412 = vmatpush1.bf16.msra.mxu0 0
    %3413 = vmatprep.subr.bf16.mxu0 0
    %3414 = vmatpush1.bf16.msra.mxu0 0
    %3415 = vmatprep.subr.bf16.mxu0 0
    %3416 = vmatpush1.bf16.msra.mxu0 0
    %3417 = vmatprep.subr.bf16.mxu0 0
    %3418 = vmatpush1.bf16.msra.mxu0 0
    %3419 = vmatprep.subr.bf16.mxu0 0
    %3420 = vmatpush1.bf16.msra.mxu0 0
    %3421 = vmatprep.subr.bf16.mxu0 0
    %3422 = vmatpush1.bf16.msra.mxu0 0
    %3423 = vmatprep.mubr.bf16.mxu0 0
    %3424 = vmatmul.mubr.bf16.gmra.mrb[0].mxu0 %v3264
    %v3425 = vpop.f32.mrb[0].mxu0
    %v3426 = vadd.f32 %v284, %v3425
    %v3427 = vpop.f32.mrb[0].mxu0
    %v3428 = vadd.f32 %v288, %v3427
    %v3429 = vpop.f32.mrb[0].mxu0
    %v3430 = vadd.f32 %v284, %v3429
    %v3431 = vpop.f32.mrb[0].mxu0
    %v3432 = vadd.f32 %v288, %v3431
    %3433 = vdwg.mxu0
    %3434 = vmatprep.subr.bf16.mxu0 0
    %3435 = vmatpush1.bf16.msra.mxu0 %v1190
    %3436 = vmatprep.subr.bf16.mxu0 0
    %3437 = vmatpush1.bf16.msra.mxu0 %v1193
    %3438 = vmatprep.subr.bf16.mxu0 0
    %3439 = vmatpush1.bf16.msra.mxu0 %v1196
    %3440 = vmatprep.subr.bf16.mxu0 0
    %3441 = vmatpush1.bf16.msra.mxu0 %v1199
    %3442 = vmatprep.subr.bf16.mxu0 0
    %3443 = vmatpush1.bf16.msra.mxu0 %v1202
    %3444 = vmatprep.subr.bf16.mxu0 0
    %3445 = vmatpush1.bf16.msra.mxu0 %v1205
    %3446 = vmatprep.subr.bf16.mxu0 0
    %3447 = vmatpush1.bf16.msra.mxu0 %v1208
    %3448 = vmatprep.subr.bf16.mxu0 0
    %3449 = vmatpush1.bf16.msra.mxu0 %v1211
    %3450 = vmatprep.subr.bf16.mxu0 0
    %3451 = vmatpush1.bf16.msra.mxu0 0
    %3452 = vmatprep.subr.bf16.mxu0 0
    %3453 = vmatpush1.bf16.msra.mxu0 0
    %3454 = vmatprep.subr.bf16.mxu0 0
    %3455 = vmatpush1.bf16.msra.mxu0 0
    %3456 = vmatprep.subr.bf16.mxu0 0
    %3457 = vmatpush1.bf16.msra.mxu0 0
    %3458 = vmatprep.subr.bf16.mxu0 0
    %3459 = vmatpush1.bf16.msra.mxu0 0
    %3460 = vmatprep.subr.bf16.mxu0 0
    %3461 = vmatpush1.bf16.msra.mxu0 0
    %3462 = vmatprep.subr.bf16.mxu0 0
    %3463 = vmatpush1.bf16.msra.mxu0 0
    %3464 = vmatprep.subr.bf16.mxu0 0
    %3465 = vmatpush1.bf16.msra.mxu0 0
    %3466 = vmatprep.mubr.bf16.mxu0 0
    %3467 = vmatmul.mubr.bf16.gmra.mrb[0].mxu0 %v3264
    %v3468 = vpop.f32.mrb[0].mxu0
    %v3469 = vadd.f32 %v292, %v3468
    %v3470 = vpop.f32.mrb[0].mxu0
    %v3471 = vpop.f32.mrb[0].mxu0
    %v3472 = vadd.f32 %v292, %v3471
    %v3473 = vpop.f32.mrb[0].mxu0
    %3474 = vdwg.mxu0
    %v3475 = vpack.c.bf16 %v3263, %v3262
    %3476 = vmatprep.subr.bf16.mxu0 %v1401
    %3477 = vmatpush1.bf16.msra.mxu0 %v1400
    %3478 = vmatprep.subr.bf16.mxu0 %v1404
    %3479 = vmatpush1.bf16.msra.mxu0 %v1403
    %3480 = vmatprep.subr.bf16.mxu0 %v1407
    %3481 = vmatpush1.bf16.msra.mxu0 %v1406
    %3482 = vmatprep.subr.bf16.mxu0 %v1410
    %3483 = vmatpush1.bf16.msra.mxu0 %v1409
    %3484 = vmatprep.subr.bf16.mxu0 %v1413
    %3485 = vmatpush1.bf16.msra.mxu0 %v1412
    %3486 = vmatprep.subr.bf16.mxu0 %v1416
    %3487 = vmatpush1.bf16.msra.mxu0 %v1415
    %3488 = vmatprep.subr.bf16.mxu0 %v1419
    %3489 = vmatpush1.bf16.msra.mxu0 %v1418
    %3490 = vmatprep.subr.bf16.mxu0 %v1422
    %3491 = vmatpush1.bf16.msra.mxu0 %v1421
    %3492 = vmatprep.subr.bf16.mxu0 0
    %3493 = vmatpush1.bf16.msra.mxu0 0
    %3494 = vmatprep.subr.bf16.mxu0 0
    %3495 = vmatpush1.bf16.msra.mxu0 0
    %3496 = vmatprep.subr.bf16.mxu0 0
    %3497 = vmatpush1.bf16.msra.mxu0 0
    %3498 = vmatprep.subr.bf16.mxu0 0
    %3499 = vmatpush1.bf16.msra.mxu0 0
    %3500 = vmatprep.subr.bf16.mxu0 0
    %3501 = vmatpush1.bf16.msra.mxu0 0
    %3502 = vmatprep.subr.bf16.mxu0 0
    %3503 = vmatpush1.bf16.msra.mxu0 0
    %3504 = vmatprep.subr.bf16.mxu0 0
    %3505 = vmatpush1.bf16.msra.mxu0 0
    %3506 = vmatprep.subr.bf16.mxu0 0
    %3507 = vmatpush1.bf16.msra.mxu0 0
    %3508 = vmatprep.mubr.bf16.mxu0 0
    %3509 = vmatmul.mubr.bf16.gmra.mrb[0].mxu0 %v3475
    %v3510 = vpop.f32.mrb[0].mxu0
    %v3511 = vadd.f32 0.0, %v3510
    %v3512 = vpop.f32.mrb[0].mxu0
    %v3513 = vadd.f32 0.0, %v3512
    %v3514 = vpop.f32.mrb[0].mxu0
    %v3515 = vadd.f32 0.0, %v3514
    %v3516 = vpop.f32.mrb[0].mxu0
    %v3517 = vadd.f32 0.0, %v3516
    %3518 = vdwg.mxu0
    %3519 = vmatprep.subr.bf16.mxu0 0
    %3520 = vmatpush1.bf16.msra.mxu0 %v1402
    %3521 = vmatprep.subr.bf16.mxu0 0
    %3522 = vmatpush1.bf16.msra.mxu0 %v1405
    %3523 = vmatprep.subr.bf16.mxu0 0
    %3524 = vmatpush1.bf16.msra.mxu0 %v1408
    %3525 = vmatprep.subr.bf16.mxu0 0
    %3526 = vmatpush1.bf16.msra.mxu0 %v1411
    %3527 = vmatprep.subr.bf16.mxu0 0
    %3528 = vmatpush1.bf16.msra.mxu0 %v1414
    %3529 = vmatprep.subr.bf16.mxu0 0
    %3530 = vmatpush1.bf16.msra.mxu0 %v1417
    %3531 = vmatprep.subr.bf16.mxu0 0
    %3532 = vmatpush1.bf16.msra.mxu0 %v1420
    %3533 = vmatprep.subr.bf16.mxu0 0
    %3534 = vmatpush1.bf16.msra.mxu0 %v1423
    %3535 = vmatprep.subr.bf16.mxu0 0
    %3536 = vmatpush1.bf16.msra.mxu0 0
    %3537 = vmatprep.subr.bf16.mxu0 0
    %3538 = vmatpush1.bf16.msra.mxu0 0
    %3539 = vmatprep.subr.bf16.mxu0 0
    %3540 = vmatpush1.bf16.msra.mxu0 0
    %3541 = vmatprep.subr.bf16.mxu0 0
    %3542 = vmatpush1.bf16.msra.mxu0 0
    %3543 = vmatprep.subr.bf16.mxu0 0
    %3544 = vmatpush1.bf16.msra.mxu0 0
    %3545 = vmatprep.subr.bf16.mxu0 0
    %3546 = vmatpush1.bf16.msra.mxu0 0
    %3547 = vmatprep.subr.bf16.mxu0 0
    %3548 = vmatpush1.bf16.msra.mxu0 0
    %3549 = vmatprep.subr.bf16.mxu0 0
    %3550 = vmatpush1.bf16.msra.mxu0 0
    %3551 = vmatprep.mubr.bf16.mxu0 0
    %3552 = vmatmul.mubr.bf16.gmra.mrb[0].mxu0 %v3475
    %v3553 = vpop.f32.mrb[0].mxu0
    %v3554 = vadd.f32 0.0, %v3553
    %v3555 = vpop.f32.mrb[0].mxu0
    %v3556 = vpop.f32.mrb[0].mxu0
    %v3557 = vadd.f32 0.0, %v3556
    %v3558 = vpop.f32.mrb[0].mxu0
    %3559 = vdwg.mxu0
    %v3560 = vadd.f32 %v3426, %v3511
    %v3561 = vadd.f32 %v3430, %v3515
    %v3562 = vxor.u32 %v3560, 2147483648
    %v3563 = vxor.u32 %v3561, 2147483648
    %v3564 = vmul.f32 %v3562, 1.442695
    %v3565 = vpow.pop %v3564
    %v3566 = vmul.f32 %v3563, 1.442695
    %v3567 = vpow.pop %v3566
    %v3568 = vadd.f32 %v3565, 1.0
    %v3569 = vadd.f32 %v3567, 1.0
    %v3570 = vrcp.pop %v3568
    %v3571 = vmul.f32 1.0, %v3570
    %v3572 = vrcp.pop %v3569
    %v3573 = vmul.f32 1.0, %v3572
    %v3574 = vadd.f32 %v3428, %v3513
    %v3575 = vadd.f32 %v3432, %v3517
    %v3576 = vxor.u32 %v3574, 2147483648
    %v3577 = vxor.u32 %v3575, 2147483648
    %v3578 = vmul.f32 %v3576, 1.442695
    %v3579 = vpow.pop %v3578
    %v3580 = vmul.f32 %v3577, 1.442695
    %v3581 = vpow.pop %v3580
    %v3582 = vadd.f32 %v3579, 1.0
    %v3583 = vadd.f32 %v3581, 1.0
    %v3584 = vrcp.pop %v3582
    %v3585 = vmul.f32 1.0, %v3584
    %v3586 = vrcp.pop %v3583
    %v3587 = vmul.f32 1.0, %v3586
    %v3588 = vmul.f32 %v3571, %v3554
    %v3589 = vmul.f32 %v3573, %v3557
    %v3590 = vadd.f32 %v3469, %v3588
    %v3591 = vadd.f32 %v3472, %v3589
    %v3592 = vtanh.pop %v3590
    %v3593 = vtanh.pop %v3591
    %v3594 = vsub.f32 1.0, %v3585
    %v3595 = vsub.f32 1.0, %v3587
    %v3596 = vmul.f32 %v3594, %v3592
    %v3597 = vmul.f32 %v3595, %v3593
    %v3598 = vmul.f32 %v3585, %v3262
    %v3599 = vmul.f32 %v3587, %v3263
    %v3600 = vadd.f32 %v3596, %v3598
    %v3601 = vadd.f32 %v3597, %v3599
    %v3602 = vpack.c.bf16 %v3390, %v3389
    %3603 = vmatprep.subr.bf16.mxu0 %v1189
    %3604 = vmatpush1.bf16.msra.mxu0 %v1188
    %3605 = vmatprep.subr.bf16.mxu0 %v1192
    %3606 = vmatpush1.bf16.msra.mxu0 %v1191
    %3607 = vmatprep.subr.bf16.mxu0 %v1195
    %3608 = vmatpush1.bf16.msra.mxu0 %v1194
    %3609 = vmatprep.subr.bf16.mxu0 %v1198
    %3610 = vmatpush1.bf16.msra.mxu0 %v1197
    %3611 = vmatprep.subr.bf16.mxu0 %v1201
    %3612 = vmatpush1.bf16.msra.mxu0 %v1200
    %3613 = vmatprep.subr.bf16.mxu0 %v1204
    %3614 = vmatpush1.bf16.msra.mxu0 %v1203
    %3615 = vmatprep.subr.bf16.mxu0 %v1207
    %3616 = vmatpush1.bf16.msra.mxu0 %v1206
    %3617 = vmatprep.subr.bf16.mxu0 %v1210
    %3618 = vmatpush1.bf16.msra.mxu0 %v1209
    %3619 = vmatprep.subr.bf16.mxu0 0
    %3620 = vmatpush1.bf16.msra.mxu0 0
    %3621 = vmatprep.subr.bf16.mxu0 0
    %3622 = vmatpush1.bf16.msra.mxu0 0
    %3623 = vmatprep.subr.bf16.mxu0 0
    %3624 = vmatpush1.bf16.msra.mxu0 0
    %3625 = vmatprep.subr.bf16.mxu0 0
    %3626 = vmatpush1.bf16.msra.mxu0 0
    %3627 = vmatprep.subr.bf16.mxu0 0
    %3628 = vmatpush1.bf16.msra.mxu0 0
    %3629 = vmatprep.subr.bf16.mxu0 0
    %3630 = vmatpush1.bf16.msra.mxu0 0
    %3631 = vmatprep.subr.bf16.mxu0 0
    %3632 = vmatpush1.bf16.msra.mxu0 0
    %3633 = vmatprep.subr.bf16.mxu0 0
    %3634 = vmatpush1.bf16.msra.mxu0 0
    %3635 = vmatprep.mubr.bf16.mxu0 0
    %3636 = vmatmul.mubr.bf16.gmra.mrb[0].mxu0 %v3602
    %v3637 = vpop.f32.mrb[0].mxu0
    %v3638 = vadd.f32 %v284, %v3637
    %v3639 = vpop.f32.mrb[0].mxu0
    %v3640 = vadd.f32 %v288, %v3639
    %v3641 = vpop.f32.mrb[0].mxu0
    %v3642 = vadd.f32 %v284, %v3641
    %v3643 = vpop.f32.mrb[0].mxu0
    %v3644 = vadd.f32 %v288, %v3643
    %3645 = vdwg.mxu0
    %3646 = vmatprep.subr.bf16.mxu0 0
    %3647 = vmatpush1.bf16.msra.mxu0 %v1190
    %3648 = vmatprep.subr.bf16.mxu0 0
    %3649 = vmatpush1.bf16.msra.mxu0 %v1193
    %3650 = vmatprep.subr.bf16.mxu0 0
    %3651 = vmatpush1.bf16.msra.mxu0 %v1196
    %3652 = vmatprep.subr.bf16.mxu0 0
    %3653 = vmatpush1.bf16.msra.mxu0 %v1199
    %3654 = vmatprep.subr.bf16.mxu0 0
    %3655 = vmatpush1.bf16.msra.mxu0 %v1202
    %3656 = vmatprep.subr.bf16.mxu0 0
    %3657 = vmatpush1.bf16.msra.mxu0 %v1205
    %3658 = vmatprep.subr.bf16.mxu0 0
    %3659 = vmatpush1.bf16.msra.mxu0 %v1208
    %3660 = vmatprep.subr.bf16.mxu0 0
    %3661 = vmatpush1.bf16.msra.mxu0 %v1211
    %3662 = vmatprep.subr.bf16.mxu0 0
    %3663 = vmatpush1.bf16.msra.mxu0 0
    %3664 = vmatprep.subr.bf16.mxu0 0
    %3665 = vmatpush1.bf16.msra.mxu0 0
    %3666 = vmatprep.subr.bf16.mxu0 0
    %3667 = vmatpush1.bf16.msra.mxu0 0
    %3668 = vmatprep.subr.bf16.mxu0 0
    %3669 = vmatpush1.bf16.msra.mxu0 0
    %3670 = vmatprep.subr.bf16.mxu0 0
    %3671 = vmatpush1.bf16.msra.mxu0 0
    %3672 = vmatprep.subr.bf16.mxu0 0
    %3673 = vmatpush1.bf16.msra.mxu0 0
    %3674 = vmatprep.subr.bf16.mxu0 0
    %3675 = vmatpush1.bf16.msra.mxu0 0
    %3676 = vmatprep.subr.bf16.mxu0 0
    %3677 = vmatpush1.bf16.msra.mxu0 0
    %3678 = vmatprep.mubr.bf16.mxu0 0
    %3679 = vmatmul.mubr.bf16.gmra.mrb[0].mxu0 %v3602
    %v3680 = vpop.f32.mrb[0].mxu0
    %v3681 = vadd.f32 %v292, %v3680
    %v3682 = vpop.f32.mrb[0].mxu0
    %v3683 = vpop.f32.mrb[0].mxu0
    %v3684 = vadd.f32 %v292, %v3683
    %v3685 = vpop.f32.mrb[0].mxu0
    %3686 = vdwg.mxu0
    %v3687 = vpack.c.bf16 %v3601, %v3600
    %3688 = vmatprep.subr.bf16.mxu0 %v1401
    %3689 = vmatpush1.bf16.msra.mxu0 %v1400
    %3690 = vmatprep.subr.bf16.mxu0 %v1404
    %3691 = vmatpush1.bf16.msra.mxu0 %v1403
    %3692 = vmatprep.subr.bf16.mxu0 %v1407
    %3693 = vmatpush1.bf16.msra.mxu0 %v1406
    %3694 = vmatprep.subr.bf16.mxu0 %v1410
    %3695 = vmatpush1.bf16.msra.mxu0 %v1409
    %3696 = vmatprep.subr.bf16.mxu0 %v1413
    %3697 = vmatpush1.bf16.msra.mxu0 %v1412
    %3698 = vmatprep.subr.bf16.mxu0 %v1416
    %3699 = vmatpush1.bf16.msra.mxu0 %v1415
    %3700 = vmatprep.subr.bf16.mxu0 %v1419
    %3701 = vmatpush1.bf16.msra.mxu0 %v1418
    %3702 = vmatprep.subr.bf16.mxu0 %v1422
    %3703 = vmatpush1.bf16.msra.mxu0 %v1421
    %3704 = vmatprep.subr.bf16.mxu0 0
    %3705 = vmatpush1.bf16.msra.mxu0 0
    %3706 = vmatprep.subr.bf16.mxu0 0
    %3707 = vmatpush1.bf16.msra.mxu0 0
    %3708 = vmatprep.subr.bf16.mxu0 0
    %3709 = vmatpush1.bf16.msra.mxu0 0
    %3710 = vmatprep.subr.bf16.mxu0 0
    %3711 = vmatpush1.bf16.msra.mxu0 0
    %3712 = vmatprep.subr.bf16.mxu0 0
    %3713 = vmatpush1.bf16.msra.mxu0 0
    %3714 = vmatprep.subr.bf16.mxu0 0
    %3715 = vmatpush1.bf16.msra.mxu0 0
    %3716 = vmatprep.subr.bf16.mxu0 0
    %3717 = vmatpush1.bf16.msra.mxu0 0
    %3718 = vmatprep.subr.bf16.mxu0 0
    %3719 = vmatpush1.bf16.msra.mxu0 0
    %3720 = vmatprep.mubr.bf16.mxu0 0
    %3721 = vmatmul.mubr.bf16.gmra.mrb[0].mxu0 %v3687
    %v3722 = vpop.f32.mrb[0].mxu0
    %v3723 = vadd.f32 0.0, %v3722
    %v3724 = vpop.f32.mrb[0].mxu0
    %v3725 = vadd.f32 0.0, %v3724
    %v3726 = vpop.f32.mrb[0].mxu0
    %v3727 = vadd.f32 0.0, %v3726
    %v3728 = vpop.f32.mrb[0].mxu0
    %v3729 = vadd.f32 0.0, %v3728
    %3730 = vdwg.mxu0
    %3731 = vmatprep.subr.bf16.mxu0 0
    %3732 = vmatpush1.bf16.msra.mxu0 %v1402
    %3733 = vmatprep.subr.bf16.mxu0 0
    %3734 = vmatpush1.bf16.msra.mxu0 %v1405
    %3735 = vmatprep.subr.bf16.mxu0 0
    %3736 = vmatpush1.bf16.msra.mxu0 %v1408
    %3737 = vmatprep.subr.bf16.mxu0 0
    %3738 = vmatpush1.bf16.msra.mxu0 %v1411
    %3739 = vmatprep.subr.bf16.mxu0 0
    %3740 = vmatpush1.bf16.msra.mxu0 %v1414
    %3741 = vmatprep.subr.bf16.mxu0 0
    %3742 = vmatpush1.bf16.msra.mxu0 %v1417
    %3743 = vmatprep.subr.bf16.mxu0 0
    %3744 = vmatpush1.bf16.msra.mxu0 %v1420
    %3745 = vmatprep.subr.bf16.mxu0 0
    %3746 = vmatpush1.bf16.msra.mxu0 %v1423
    %3747 = vmatprep.subr.bf16.mxu0 0
    %3748 = vmatpush1.bf16.msra.mxu0 0
    %3749 = vmatprep.subr.bf16.mxu0 0
    %3750 = vmatpush1.bf16.msra.mxu0 0
    %3751 = vmatprep.subr.bf16.mxu0 0
    %3752 = vmatpush1.bf16.msra.mxu0 0
    %3753 = vmatprep.subr.bf16.mxu0 0
    %3754 = vmatpush1.bf16.msra.mxu0 0
    %3755 = vmatprep.subr.bf16.mxu0 0
    %3756 = vmatpush1.bf16.msra.mxu0 0
    %3757 = vmatprep.subr.bf16.mxu0 0
    %3758 = vmatpush1.bf16.msra.mxu0 0
    %3759 = vmatprep.subr.bf16.mxu0 0
    %3760 = vmatpush1.bf16.msra.mxu0 0
    %3761 = vmatprep.subr.bf16.mxu0 0
    %3762 = vmatpush1.bf16.msra.mxu0 0
    %3763 = vmatprep.mubr.bf16.mxu0 0
    %3764 = vmatmul.mubr.bf16.gmra.mrb[0].mxu0 %v3687
    %v3765 = vpop.f32.mrb[0].mxu0
    %v3766 = vadd.f32 0.0, %v3765
    %v3767 = vpop.f32.mrb[0].mxu0
    %v3768 = vpop.f32.mrb[0].mxu0
    %v3769 = vadd.f32 0.0, %v3768
    %v3770 = vpop.f32.mrb[0].mxu0
    %3771 = vdwg.mxu0
    %v3772 = vadd.f32 %v3638, %v3723
    %v3773 = vadd.f32 %v3642, %v3727
    %v3774 = vxor.u32 %v3772, 2147483648
    %v3775 = vxor.u32 %v3773, 2147483648
    %v3776 = vmul.f32 %v3774, 1.442695
    %v3777 = vpow.pop %v3776
    %v3778 = vmul.f32 %v3775, 1.442695
    %v3779 = vpow.pop %v3778
    %v3780 = vadd.f32 %v3777, 1.0
    %v3781 = vadd.f32 %v3779, 1.0
    %v3782 = vrcp.pop %v3780
    %v3783 = vmul.f32 1.0, %v3782
    %v3784 = vrcp.pop %v3781
    %v3785 = vmul.f32 1.0, %v3784
    %v3786 = vadd.f32 %v3640, %v3725
    %v3787 = vadd.f32 %v3644, %v3729
    %v3788 = vxor.u32 %v3786, 2147483648
    %v3789 = vxor.u32 %v3787, 2147483648
    %v3790 = vmul.f32 %v3788, 1.442695
    %v3791 = vpow.pop %v3790
    %v3792 = vmul.f32 %v3789, 1.442695
    %v3793 = vpow.pop %v3792
    %v3794 = vadd.f32 %v3791, 1.0
    %v3795 = vadd.f32 %v3793, 1.0
    %v3796 = vrcp.pop %v3794
    %v3797 = vmul.f32 1.0, %v3796
    %v3798 = vrcp.pop %v3795
    %v3799 = vmul.f32 1.0, %v3798
    %v3800 = vmul.f32 %v3783, %v3766
    %v3801 = vmul.f32 %v3785, %v3769
    %v3802 = vadd.f32 %v3681, %v3800
    %v3803 = vadd.f32 %v3684, %v3801
    %v3804 = vtanh.pop %v3802
    %v3805 = vtanh.pop %v3803
    %v3806 = vsub.f32 1.0, %v3797
    %v3807 = vsub.f32 1.0, %v3799
    %v3808 = vmul.f32 %v3806, %v3804
    %v3809 = vmul.f32 %v3807, %v3805
    %v3810 = vmul.f32 %v3797, %v3600
    %v3811 = vmul.f32 %v3799, %v3601
    %v3812 = vadd.f32 %v3808, %v3810
    %v3813 = vadd.f32 %v3809, %v3811
    %v3814 = vmax.f32 %v3812, 0.0
    %v3815 = vmax.f32 %v3813, 0.0
    %v3816 = vpack.c.bf16 %v3815, %v3814
    %v3817 = vld [vmem:[#allocation7] sm:$0xf]
    %v3818 = vld [vmem:[#allocation7 + $0x4] sm:$0xf]
    %v3819 = vld [vmem:[#allocation7 + $0x8] sm:$0xf]
    %v3820 = vld [vmem:[#allocation7 + $0xc] sm:$0xf]
    %v3821 = vld [vmem:[#allocation7 + $0x10] sm:$0xf]
    %v3822 = vld [vmem:[#allocation7 + $0x14] sm:$0xf]
    %v3823 = vld [vmem:[#allocation7 + $0x18] sm:$0xf]
    %v3824 = vld [vmem:[#allocation7 + $0x1c] sm:$0xf]
    %v3825 = vld [vmem:[#allocation7 + $0x20] sm:$0xf]
    %v3826 = vld [vmem:[#allocation7 + $0x24] sm:$0xf]
    %v3827 = vld [vmem:[#allocation7 + $0x28] sm:$0xf]
    %v3828 = vld [vmem:[#allocation7 + $0x2c] sm:$0xf]
    %v3829 = vld [vmem:[#allocation7 + $0x30] sm:$0xf]
    %v3830 = vld [vmem:[#allocation7 + $0x34] sm:$0xf]
    %v3831 = vld [vmem:[#allocation7 + $0x38] sm:$0xf]
    %v3832 = vld [vmem:[#allocation7 + $0x3c] sm:$0xf]
    %v3833 = vld [vmem:[%s8] sm:$0x1]
    %v3835 = vlaneseq
    %v3836 = vshrl.u32 %v3835, 7
    %v3837 = vsub.s32 0, %v3836
    %v3838 = vrot.slane %v3833, %v3837
    %v3856 = vunpack.c.l.b16 %v3817
    %v3857 = vunpack.c.l.b16 %v3818
    %v3858 = vunpack.c.l.b16 %v3819
    %v3859 = vunpack.c.l.b16 %v3820
    %v3860 = vunpack.c.l.b16 %v3821
    %v3861 = vunpack.c.l.b16 %v3822
    %v3862 = vunpack.c.l.b16 %v3823
    %v3863 = vunpack.c.l.b16 %v3824
    %v3864 = vunpack.c.l.b16 %v3825
    %v3865 = vunpack.c.l.b16 %v3826
    %v3866 = vunpack.c.l.b16 %v3827
    %v3867 = vunpack.c.l.b16 %v3828
    %v3868 = vunpack.c.l.b16 %v3829
    %v3869 = vunpack.c.l.b16 %v3830
    %v3870 = vunpack.c.l.b16 %v3831
    %v3871 = vunpack.c.l.b16 %v3832
    %v3872 = vpack.c.b16 %v3857, %v3856
    %v3873 = vpack.c.b16 %v3859, %v3858
    %v3874 = vpack.c.b16 %v3861, %v3860
    %v3875 = vpack.c.b16 %v3863, %v3862
    %v3876 = vpack.c.b16 %v3865, %v3864
    %v3877 = vpack.c.b16 %v3867, %v3866
    %v3878 = vpack.c.b16 %v3869, %v3868
    %v3879 = vpack.c.b16 %v3871, %v3870
    %3888 = vmatprep.subr.bf16.mxu0 0
    %3889 = vmatpush1.bf16.msra.mxu0 %v3872
    %3890 = vmatprep.subr.bf16.mxu0 0
    %3891 = vmatpush1.bf16.msra.mxu0 %v3873
    %3892 = vmatprep.subr.bf16.mxu0 0
    %3893 = vmatpush1.bf16.msra.mxu0 %v3874
    %3894 = vmatprep.subr.bf16.mxu0 0
    %3895 = vmatpush1.bf16.msra.mxu0 %v3875
    %3896 = vmatprep.subr.bf16.mxu0 0
    %3897 = vmatpush1.bf16.msra.mxu0 %v3876
    %3898 = vmatprep.subr.bf16.mxu0 0
    %3899 = vmatpush1.bf16.msra.mxu0 %v3877
    %3900 = vmatprep.subr.bf16.mxu0 0
    %3901 = vmatpush1.bf16.msra.mxu0 %v3878
    %3902 = vmatprep.subr.bf16.mxu0 0
    %3903 = vmatpush1.bf16.msra.mxu0 %v3879
    %3904 = vmatprep.subr.bf16.mxu0 0
    %3905 = vmatpush1.bf16.msra.mxu0 0
    %3906 = vmatprep.subr.bf16.mxu0 0
    %3907 = vmatpush1.bf16.msra.mxu0 0
    %3908 = vmatprep.subr.bf16.mxu0 0
    %3909 = vmatpush1.bf16.msra.mxu0 0
    %3910 = vmatprep.subr.bf16.mxu0 0
    %3911 = vmatpush1.bf16.msra.mxu0 0
    %3912 = vmatprep.subr.bf16.mxu0 0
    %3913 = vmatpush1.bf16.msra.mxu0 0
    %3914 = vmatprep.subr.bf16.mxu0 0
    %3915 = vmatpush1.bf16.msra.mxu0 0
    %3916 = vmatprep.subr.bf16.mxu0 0
    %3917 = vmatpush1.bf16.msra.mxu0 0
    %3918 = vmatprep.subr.bf16.mxu0 0
    %3919 = vmatpush1.bf16.msra.mxu0 0
    %3920 = vmatprep.mubr.bf16.mxu0 0
    %3921 = vmatmul.mubr.bf16.gmra.mrb[0].mxu0 %v3816
    %v3922 = vpop.f32.mrb[0].mxu0
    %v3923 = vadd.f32 %v3838, %v3922
    %v3924 = vpop.f32.mrb[0].mxu0
    %v3925 = vpop.f32.mrb[0].mxu0
    %v3926 = vadd.f32 %v3838, %v3925
    %v3927 = vpop.f32.mrb[0].mxu0
    %3928 = vdwg.mxu0
    %v3929 = vpack.c.bf16 %v3926, %v3923
    %v3930 = vld [vmem:[#allocation9] sm:$0xf]
    %v3931 = vld [vmem:[#allocation9 + $0x4] sm:$0xf]
    %v3932 = vld [vmem:[#allocation9 + $0x8] sm:$0xf]
    %v3933 = vld [vmem:[#allocation9 + $0xc] sm:$0xf]
    %v3934 = vld [vmem:[#allocation9 + $0x10] sm:$0xf]
    %v3935 = vld [vmem:[#allocation9 + $0x14] sm:$0xf]
    %v3936 = vld [vmem:[#allocation9 + $0x18] sm:$0xf]
    %v3937 = vld [vmem:[#allocation9 + $0x1c] sm:$0xf]
    %v3938 = vld [vmem:[#allocation9 + $0x20] sm:$0xf]
    %v3939 = vld [vmem:[#allocation9 + $0x24] sm:$0xf]
    %v3940 = vld [vmem:[#allocation9 + $0x28] sm:$0xf]
    %v3941 = vld [vmem:[#allocation9 + $0x2c] sm:$0xf]
    %v3942 = vld [vmem:[#allocation9 + $0x30] sm:$0xf]
    %v3943 = vld [vmem:[#allocation9 + $0x34] sm:$0xf]
    %v3944 = vld [vmem:[#allocation9 + $0x38] sm:$0xf]
    %v3945 = vld [vmem:[#allocation9 + $0x3c] sm:$0xf]
    %v3946 = vld [vmem:[#allocation10] sm:$0x1]
    %v3948 = vlaneseq
    %v3949 = vshrl.u32 %v3948, 7
    %v3950 = vsub.s32 0, %v3949
    %v3951 = vrot.slane %v3946, %v3950
    %v3969 = vunpack.c.l.b16 %v3930
    %v3970 = vunpack.c.l.b16 %v3931
    %v3971 = vunpack.c.l.b16 %v3932
    %v3972 = vunpack.c.l.b16 %v3933
    %v3973 = vunpack.c.l.b16 %v3934
    %v3974 = vunpack.c.l.b16 %v3935
    %v3975 = vunpack.c.l.b16 %v3936
    %v3976 = vunpack.c.l.b16 %v3937
    %v3977 = vunpack.c.l.b16 %v3938
    %v3978 = vunpack.c.l.b16 %v3939
    %v3979 = vunpack.c.l.b16 %v3940
    %v3980 = vunpack.c.l.b16 %v3941
    %v3981 = vunpack.c.l.b16 %v3942
    %v3982 = vunpack.c.l.b16 %v3943
    %v3983 = vunpack.c.l.b16 %v3944
    %v3984 = vunpack.c.l.b16 %v3945
    %v3985 = vpack.c.b16 %v3970, %v3969
    %v3986 = vpack.c.b16 %v3972, %v3971
    %v3987 = vpack.c.b16 %v3974, %v3973
    %v3988 = vpack.c.b16 %v3976, %v3975
    %v3989 = vpack.c.b16 %v3978, %v3977
    %v3990 = vpack.c.b16 %v3980, %v3979
    %v3991 = vpack.c.b16 %v3982, %v3981
    %v3992 = vpack.c.b16 %v3984, %v3983
    %4001 = vmatprep.subr.bf16.mxu0 0
    %4002 = vmatpush1.bf16.msra.mxu0 %v3985
    %4003 = vmatprep.subr.bf16.mxu0 0
    %4004 = vmatpush1.bf16.msra.mxu0 %v3986
    %4005 = vmatprep.subr.bf16.mxu0 0
    %4006 = vmatpush1.bf16.msra.mxu0 %v3987
    %4007 = vmatprep.subr.bf16.mxu0 0
    %4008 = vmatpush1.bf16.msra.mxu0 %v3988
    %4009 = vmatprep.subr.bf16.mxu0 0
    %4010 = vmatpush1.bf16.msra.mxu0 %v3989
    %4011 = vmatprep.subr.bf16.mxu0 0
    %4012 = vmatpush1.bf16.msra.mxu0 %v3990
    %4013 = vmatprep.subr.bf16.mxu0 0
    %4014 = vmatpush1.bf16.msra.mxu0 %v3991
    %4015 = vmatprep.subr.bf16.mxu0 0
    %4016 = vmatpush1.bf16.msra.mxu0 %v3992
    %4017 = vmatprep.subr.bf16.mxu0 0
    %4018 = vmatpush1.bf16.msra.mxu0 0
    %4019 = vmatprep.subr.bf16.mxu0 0
    %4020 = vmatpush1.bf16.msra.mxu0 0
    %4021 = vmatprep.subr.bf16.mxu0 0
    %4022 = vmatpush1.bf16.msra.mxu0 0
    %4023 = vmatprep.subr.bf16.mxu0 0
    %4024 = vmatpush1.bf16.msra.mxu0 0
    %4025 = vmatprep.subr.bf16.mxu0 0
    %4026 = vmatpush1.bf16.msra.mxu0 0
    %4027 = vmatprep.subr.bf16.mxu0 0
    %4028 = vmatpush1.bf16.msra.mxu0 0
    %4029 = vmatprep.subr.bf16.mxu0 0
    %4030 = vmatpush1.bf16.msra.mxu0 0
    %4031 = vmatprep.subr.bf16.mxu0 0
    %4032 = vmatpush1.bf16.msra.mxu0 0
    %4033 = vmatprep.mubr.bf16.mxu0 0
    %4034 = vmatmul.mubr.bf16.gmra.mrb[0].mxu0 %v3929
    %v4035 = vpop.f32.mrb[0].mxu0
    %v4036 = vadd.f32 %v3951, %v4035
    %v4037 = vpop.f32.mrb[0].mxu0
    %v4038 = vpop.f32.mrb[0].mxu0
    %v4039 = vadd.f32 %v3951, %v4038
    %v4040 = vpop.f32.mrb[0].mxu0
    %4041 = vdwg.mxu0
    %v4042 = vpack.c.bf16 %v4039, %v4036
    %v4043 = vld [vmem:[#allocation12] sm:$0xf]
    %v4044 = vld [vmem:[#allocation12 + $0x4] sm:$0xf]
    %v4045 = vld [vmem:[#allocation12 + $0x8] sm:$0xf]
    %v4046 = vld [vmem:[#allocation12 + $0xc] sm:$0xf]
    %v4047 = vld [vmem:[#allocation12 + $0x10] sm:$0xf]
    %v4048 = vld [vmem:[#allocation12 + $0x14] sm:$0xf]
    %v4049 = vld [vmem:[#allocation12 + $0x18] sm:$0xf]
    %v4050 = vld [vmem:[#allocation12 + $0x1c] sm:$0xf]
    %v4051 = vld [vmem:[#allocation12 + $0x20] sm:$0xf]
    %v4052 = vld [vmem:[#allocation12 + $0x24] sm:$0xf]
    %v4053 = vld [vmem:[#allocation12 + $0x28] sm:$0xf]
    %v4054 = vld [vmem:[#allocation12 + $0x2c] sm:$0xf]
    %v4055 = vld [vmem:[#allocation12 + $0x30] sm:$0xf]
    %v4056 = vld [vmem:[#allocation12 + $0x34] sm:$0xf]
    %v4057 = vld [vmem:[#allocation12 + $0x38] sm:$0xf]
    %v4058 = vld [vmem:[#allocation12 + $0x3c] sm:$0xf]
    %v4059 = vld [vmem:[#allocation13] sm:$0x1]
    %v4061 = vlaneseq
    %v4062 = vshrl.u32 %v4061, 7
    %v4063 = vsub.s32 0, %v4062
    %v4064 = vrot.slane %v4059, %v4063
    %v4082 = vunpack.c.l.b16 %v4043
    %v4083 = vunpack.c.l.b16 %v4044
    %v4084 = vunpack.c.l.b16 %v4045
    %v4085 = vunpack.c.l.b16 %v4046
    %v4086 = vunpack.c.l.b16 %v4047
    %v4087 = vunpack.c.l.b16 %v4048
    %v4088 = vunpack.c.l.b16 %v4049
    %v4089 = vunpack.c.l.b16 %v4050
    %v4090 = vunpack.c.l.b16 %v4051
    %v4091 = vunpack.c.l.b16 %v4052
    %v4092 = vunpack.c.l.b16 %v4053
    %v4093 = vunpack.c.l.b16 %v4054
    %v4094 = vunpack.c.l.b16 %v4055
    %v4095 = vunpack.c.l.b16 %v4056
    %v4096 = vunpack.c.l.b16 %v4057
    %v4097 = vunpack.c.l.b16 %v4058
    %v4098 = vpack.c.b16 %v4083, %v4082
    %v4099 = vpack.c.b16 %v4085, %v4084
    %v4100 = vpack.c.b16 %v4087, %v4086
    %v4101 = vpack.c.b16 %v4089, %v4088
    %v4102 = vpack.c.b16 %v4091, %v4090
    %v4103 = vpack.c.b16 %v4093, %v4092
    %v4104 = vpack.c.b16 %v4095, %v4094
    %v4105 = vpack.c.b16 %v4097, %v4096
    %4114 = vmatprep.subr.bf16.mxu0 0
    %4115 = vmatpush1.bf16.msra.mxu0 %v4098
    %4116 = vmatprep.subr.bf16.mxu0 0
    %4117 = vmatpush1.bf16.msra.mxu0 %v4099
    %4118 = vmatprep.subr.bf16.mxu0 0
    %4119 = vmatpush1.bf16.msra.mxu0 %v4100
    %4120 = vmatprep.subr.bf16.mxu0 0
    %4121 = vmatpush1.bf16.msra.mxu0 %v4101
    %4122 = vmatprep.subr.bf16.mxu0 0
    %4123 = vmatpush1.bf16.msra.mxu0 %v4102
    %4124 = vmatprep.subr.bf16.mxu0 0
    %4125 = vmatpush1.bf16.msra.mxu0 %v4103
    %4126 = vmatprep.subr.bf16.mxu0 0
    %4127 = vmatpush1.bf16.msra.mxu0 %v4104
    %4128 = vmatprep.subr.bf16.mxu0 0
    %4129 = vmatpush1.bf16.msra.mxu0 %v4105
    %4130 = vmatprep.subr.bf16.mxu0 0
    %4131 = vmatpush1.bf16.msra.mxu0 0
    %4132 = vmatprep.subr.bf16.mxu0 0
    %4133 = vmatpush1.bf16.msra.mxu0 0
    %4134 = vmatprep.subr.bf16.mxu0 0
    %4135 = vmatpush1.bf16.msra.mxu0 0
    %4136 = vmatprep.subr.bf16.mxu0 0
    %4137 = vmatpush1.bf16.msra.mxu0 0
    %4138 = vmatprep.subr.bf16.mxu0 0
    %4139 = vmatpush1.bf16.msra.mxu0 0
    %4140 = vmatprep.subr.bf16.mxu0 0
    %4141 = vmatpush1.bf16.msra.mxu0 0
    %4142 = vmatprep.subr.bf16.mxu0 0
    %4143 = vmatpush1.bf16.msra.mxu0 0
    %4144 = vmatprep.subr.bf16.mxu0 0
    %4145 = vmatpush1.bf16.msra.mxu0 0
    %4146 = vmatprep.mubr.bf16.mxu0 0
    %4147 = vmatmul.mubr.bf16.gmra.mrb[0].mxu0 %v4042
    %v4148 = vpop.f32.mrb[0].mxu0
    %v4149 = vadd.f32 %v4064, %v4148
    %v4150 = vpop.f32.mrb[0].mxu0
    %v4151 = vpop.f32.mrb[0].mxu0
    %v4152 = vadd.f32 %v4064, %v4151
    %v4153 = vpop.f32.mrb[0].mxu0
    %4154 = vdwg.mxu0
    %4155 = vst [vmem:[%s13] sm:$0xff] %v4149
    %4156 = vst [vmem:[%s13 + $0x8] sm:$0xff] %v4152
    // Predicated region
    $region86: #{_lambda_.1} parent=1 // pred_check
      _
    $region87: #{_lambda_.1} parent=1 // pred_check_branch
      %4158 = sbr.rel (0) target = $region89
    $region88: #{_lambda_.1} parent=1 // pred_region
      _
    $region89: #{_lambda_.1} parent=1 // pred_fallthru
      _
    // Predicated region
    $region90: #{_lambda_.1} parent=1 // pred_check
      _
    $region91: #{_lambda_.1} parent=1 // pred_check_branch
      %4160 = sbr.rel (0) target = $region93
    $region92: #{_lambda_.1} parent=1 // pred_region
      _
    $region93: #{_lambda_.1} parent=1 // pred_fallthru
      _
    %4161 = vsyncpa [#allocation3], 1
    %4162 = vsyncpa [#allocation5], 1
    %4163 = vsyncpa [#allocation8], 1
    %4164 = vsyncpa [#allocation11], 1
    %4165 = vsyncpa [#allocation14], 1

</llo_original>
